<compile_context>
chip_gen: v5e
topology: v5e:2x2
jax: 0.10.0
libtpu: 0.0.40
codegen_flags: <defaults>
</compile_context>

<pallas_src>
import functools

import jax
import jax.numpy as jnp
from jax.experimental import pallas as pl
from jax.experimental.pallas import tpu as pltpu

IN_FEATURES = 8192
OUT_FEATURES = 147
CLAMP_MIN = 0.151
CLAMP_MAX = 0.248


def _linear_clamp_kernel(x_ref, w_ref, b_ref, o_ref):
    """Single-step GEMV + bias + clamp.

    x_ref : (N, K)        f32  (cast to the weight dtype for the MXU)
    w_ref : (rows, K)     bf16 (rows = OUT_PAD // out_splits; K on lanes)
    b_ref : (..., rows)   f32  bias slice for this split
    o_ref : (..., n_out)  f32  output slice for this split (lane-dense)
    """
    # Contract along the lane (K) axis of both operands: x @ w.T -> (N, rows).
    xw = jax.lax.dot_general(
        x_ref[...].astype(w_ref.dtype),
        w_ref[...],
        dimension_numbers=(((1,), (1,)), ((), ())),
        preferred_element_type=jnp.float32,
    )
    y = xw + b_ref[...].reshape(1, xw.shape[-1])
    # clamp_min(0.151) then clamp_max(0.248) == clip to [0.151, 0.248]
    y = jnp.minimum(jnp.maximum(y, CLAMP_MIN), CLAMP_MAX)
    n_out = o_ref.shape[-1]
    o_ref[...] = y[:, :n_out].reshape(o_ref.shape)


def default_out_splits():
    """2 on v7x (two TensorCores per chip), 1 on v5e/v6e/unknown."""
    try:
        kind = jax.devices()[0].device_kind.lower()
    except Exception:
        return 1
    return 2 if "v7" in kind else 1


def pack_params(w, b, *, out_splits=1, weight_dtype=jnp.bfloat16):
    """One-time transform of nn.Linear params.

    w: (OUT, K) PyTorch layout -> (OUT_PAD, K) with OUT zero-padded on the
       sublane axis to a multiple of 16*out_splits, cast to `weight_dtype`.
    b: (OUT,) -> (1, OUT_PAD) f32 (out_splits == 1)
              or (out_splits, 1, OUT_PAD // out_splits) f32 (split path).
    """
    out_f, k = w.shape
    sub = 16 * out_splits  # bf16 packs 16 rows per sublane tile; keep splits even
    out_pad = pl.cdiv(out_f, sub) * sub
    w_p = jnp.zeros((out_pad, k), dtype=weight_dtype)
    w_p = w_p.at[:out_f, :].set(w.astype(weight_dtype))
    b_full = jnp.zeros((out_pad,), jnp.float32).at[:out_f].set(b.astype(jnp.float32))
    if out_splits == 1:
        b_p = b_full.reshape(1, out_pad)
    else:
        b_p = b_full.reshape(out_splits, 1, out_pad // out_splits)
    return w_p, b_p


@functools.partial(jax.jit, static_argnames=("out_features", "out_splits"))
def linear_clamp(x, w_p, b_p, *, out_features=OUT_FEATURES, out_splits=1):
    """x: (N, K) f32, w_p: (OUT_PAD, K) packed weight, b_p packed bias
    -> (N, out_features) f32."""
    n, k = x.shape
    out_pad, kw = w_p.shape
    assert kw == k
    assert out_pad % out_splits == 0
    rows = out_pad // out_splits  # output rows handled per grid step

    w_bytes = out_pad * k * jnp.dtype(w_p.dtype).itemsize
    cost = pl.CostEstimate(
        flops=2 * n * k * out_pad,
        transcendentals=0,
        bytes_accessed=w_bytes + n * k * 4 + n * out_pad * 4,
    )

    if out_splits == 1:
        # Emit (N, 147) directly: full-array output block, masked 147-lane store.
        out_shape = jax.ShapeDtypeStruct((n, out_features), jnp.float32)
        out_spec = pl.BlockSpec((n, out_features), lambda j: (0, 0))
        b_spec = pl.BlockSpec((1, out_pad), lambda j: (0, 0))
    else:
        # One 80-row slab per TensorCore; padded cols sliced off by the caller.
        out_shape = jax.ShapeDtypeStruct((out_splits, n, rows), jnp.float32)
        out_spec = pl.BlockSpec((1, n, rows), lambda j: (j, 0, 0))
        b_spec = pl.BlockSpec((1, 1, rows), lambda j: (j, 0, 0))

    y = pl.pallas_call(
        _linear_clamp_kernel,
        out_shape=out_shape,
        grid_spec=pltpu.PrefetchScalarGridSpec(
            num_scalar_prefetch=0,
            grid=(out_splits,),
            in_specs=[
                pl.BlockSpec((n, k), lambda j: (0, 0)),      # x (tiny, resident)
                pl.BlockSpec((rows, k), lambda j: (j, 0)),   # weight stream
                b_spec,                                      # bias slice
            ],
            out_specs=out_spec,
        ),
        compiler_params=pltpu.CompilerParams(
            # single step on v5e/v6e; splits output rows across v7x TensorCores
            dimension_semantics=("parallel",),
        ),
        cost_estimate=cost,
    )(x, w_p, b_p)

    if out_splits == 1:
        return y
    # (out_splits, N, rows) -> (N, OUT_PAD) -> (N, out_features); tiny arrays.
    return jnp.transpose(y, (1, 0, 2)).reshape(n, out_pad)[:, :out_features]


if __name__ == "__main__":
    key = jax.random.PRNGKey(0)
    kx, kw, kb = jax.random.split(key, 3)

    # Module input: x1 = torch.randn(1, 8192)
    x = jax.random.normal(kx, (1, IN_FEATURES), dtype=jnp.float32)

    # Deterministic nn.Linear-style init: U(-1/sqrt(K), 1/sqrt(K))
    bound = 1.0 / (IN_FEATURES ** 0.5)
    w = jax.random.uniform(
        kw, (OUT_FEATURES, IN_FEATURES), minval=-bound, maxval=bound,
        dtype=jnp.float32)
    b = jax.random.uniform(
        kb, (OUT_FEATURES,), minval=-bound, maxval=bound, dtype=jnp.float32)

    # References: tight check against the same bf16 quantization of operands
    # (kernel accumulates in f32), loose check against full-f32 module math.
    xq = x.astype(jnp.bfloat16).astype(jnp.float32)
    wq = w.astype(jnp.bfloat16).astype(jnp.float32)
    ref_q = jnp.minimum(jnp.maximum(xq @ wq.T + b, CLAMP_MIN), CLAMP_MAX)
    ref_f32 = jnp.minimum(jnp.maximum(x @ w.T + b, CLAMP_MIN), CLAMP_MAX)

    for splits in sorted({1, default_out_splits()}):
        w_p, b_p = pack_params(w, b, out_splits=splits)
        out = jax.block_until_ready(linear_clamp(x, w_p, b_p, out_splits=splits))
        assert out.shape == (1, OUT_FEATURES)
        err_q = float(jnp.max(jnp.abs(out - ref_q)))
        assert err_q < 1e-3, f"out_splits={splits}: bf16-ref err {err_q}"
        err = float(jnp.max(jnp.abs(out - ref_f32)))
        assert err < 2e-2, f"out_splits={splits}: f32-ref err {err}"

    print("KERNEL_OK")
</pallas_src>

<mosaic_0001>
module attributes {stable_mosaic.version = 11 : i64} {
  func.func @_linear_clamp_kernel(%arg0: i32, %arg1: memref<1x8192xf32, #tpu.memory_space<vmem>>, %arg2: memref<160x8192xbf16, #tpu.memory_space<vmem>>, %arg3: memref<1x160xf32, #tpu.memory_space<vmem>>, %arg4: memref<1x147xf32, #tpu.memory_space<vmem>>) attributes {dimension_semantics = [#tpu.dimension_semantics<parallel>], iteration_bounds = array<i64: 1>, scalar_prefetch = 0 : i64, scratch_operands = 0 : i64, tpu.core_type = #tpu.core_type<tc>, window_params = [{pipeline_mode = #tpu.pipeline_mode<synchronous>, transform_indices = @transform_0, window_bounds = array<i64: 1, 8192>}, {transform_indices = @transform_1, window_bounds = array<i64: 160, 8192>}, {pipeline_mode = #tpu.pipeline_mode<synchronous>, transform_indices = @transform_2, window_bounds = array<i64: 1, 160>}, {pipeline_mode = #tpu.pipeline_mode<synchronous>, transform_indices = @transform_3, window_bounds = array<i64: 1, 147>}]} {
    %c0 = arith.constant 0 : index
    %c0_0 = arith.constant 0 : index
    %0 = vector.load %arg1[%c0, %c0_0] : memref<1x8192xf32, #tpu.memory_space<vmem>>, vector<1x8192xf32>
    %1 = arith.truncf %0 : vector<1x8192xf32> to vector<1x8192xbf16>
    %c0_1 = arith.constant 0 : index
    %c0_2 = arith.constant 0 : index
    %2 = vector.load %arg2[%c0_1, %c0_2] : memref<160x8192xbf16, #tpu.memory_space<vmem>>, vector<160x8192xbf16>
    %cst = arith.constant dense<0.000000e+00> : vector<1x160xf32>
    %3 = tpu.matmul %1, %2, %cst {dimension_numbers = #tpu.dot_dimension_numbers<[1], [1], [0], [0], [0, 0, 1, 0], [], []>} : vector<1x8192xbf16>, vector<160x8192xbf16>, vector<1x160xf32> -> vector<1x160xf32>
    %c0_3 = arith.constant 0 : index
    %c0_4 = arith.constant 0 : index
    %4 = vector.load %arg3[%c0_3, %c0_4] : memref<1x160xf32, #tpu.memory_space<vmem>>, vector<1x160xf32>
    %5 = arith.addf %3, %4 : vector<1x160xf32>
    %cst_5 = arith.constant 1.510000e-01 : f32
    %6 = vector.broadcast %cst_5 : f32 to vector<1x160xf32>
    %7 = arith.maximumf %5, %6 : vector<1x160xf32>
    %cst_6 = arith.constant 2.480000e-01 : f32
    %8 = vector.broadcast %cst_6 : f32 to vector<1x160xf32>
    %9 = arith.minimumf %7, %8 : vector<1x160xf32>
    %10 = vector.extract_strided_slice %9 {offsets = [0, 0], sizes = [1, 147], strides = [1, 1]} : vector<1x160xf32> to vector<1x147xf32>
    %c0_7 = arith.constant 0 : index
    %c0_8 = arith.constant 0 : index
    %11 = vector.load %arg4[%c0_7, %c0_8] : memref<1x147xf32, #tpu.memory_space<vmem>>, vector<1x147xf32>
    tpu.vector_store %arg4[%c0_7, %c0_8], %10 {strides = array<i32>} : memref<1x147xf32, #tpu.memory_space<vmem>>, vector<1x147xf32>,
    return
  }
  func.func @transform_0(%arg0: i32) -> (i32, i32) {
    %c0_i32 = arith.constant 0 : i32
    %c0_i32_0 = arith.constant 0 : i32
    %c0_i32_1 = arith.constant 0 : i32
    return %c0_i32, %c0_i32_0 : i32, i32
  }
  func.func @transform_1(%arg0: i32) -> (i32, i32) {
    %c0_i32 = arith.constant 0 : i32
    %c0_i32_0 = arith.constant 0 : i32
    return %arg0, %c0_i32 : i32, i32
  }
  func.func @transform_2(%arg0: i32) -> (i32, i32) {
    %c0_i32 = arith.constant 0 : i32
    %c0_i32_0 = arith.constant 0 : i32
    %c0_i32_1 = arith.constant 0 : i32
    return %c0_i32, %c0_i32_0 : i32, i32
  }
  func.func @transform_3(%arg0: i32) -> (i32, i32) {
    %c0_i32 = arith.constant 0 : i32
    %c0_i32_0 = arith.constant 0 : i32
    %c0_i32_1 = arith.constant 0 : i32
    return %c0_i32, %c0_i32_0 : i32, i32
  }
}

</mosaic_0001>

<llo_original>
// kernel: linear_clamp.1
$region0: #{linear_clamp.1}
  #allocation0 [shape = 'u32[]', space=smem, size = 0x4, offset = 0x4, fixed_abs, tag = 'smem constant byte address 0x4 - core index']
  #allocation1 [shape = 'u32[72,128]{1,0:T(1,128)}', space=vmem, size = 0x9000, scoped, tag = 'internal scratch']
  %s0 = inlined_call_operand.hbm [shape: f32[1,8192], index: 0, kind: input, shape index: {}]
  %s1 = inlined_call_operand.hbm [shape: bf16[160,8192], index: 1, kind: input, shape index: {}]
  %s2 = inlined_call_operand.hbm [shape: f32[1,160], index: 2, kind: input, shape index: {}]
  %s3 = inlined_call_operand.hbm [shape: f32[1,147], index: 3, kind: output, shape index: {}]
  %s4 = sld [smem:[#allocation0]]
  $region34: #{linear_clamp.1} parent=0
    _
  %s6 = ssub.s32 1, %s4
  %s7 = scalar_select 0, %s6, %s4
  $region1: #{linear_clamp.1} parent=0
    #allocation2 [shape = 'u8[32768]{0}', space=vmem, size = 0x8000, scoped, tag = 'input window, operand 0, single buffered']
    #allocation3 [shape = 's32[1]{0}', space=sflag, size = 0x4, scoped, tag = 'scoped memory for linear_clamp.1']
    #allocation4 [shape = 's32[1]{0}', space=sflag, size = 0x4, scoped, tag = 'scoped memory for linear_clamp.1']
    #allocation5 [shape = 'u8[2621440]{0}', space=vmem, size = 0x280000, scoped, tag = 'input window, operand 1, single buffered']
    #allocation6 [shape = 's32[1]{0}', space=sflag, size = 0x4, scoped, tag = 'scoped memory for linear_clamp.1']
    #allocation7 [shape = 'u8[1024]{0}', space=vmem, size = 0x400, scoped, tag = 'input window, operand 2, single buffered']
    #allocation8 [shape = 'u8[1024]{0}', space=vmem, size = 0x400, scoped, tag = 'output window, operand 0, single buffered']
    %8 = vsyncpa [#allocation3], 0
    %9 = vsyncpa [#allocation6], 0
    %10 = vsyncpa [#allocation4], 0
    // Predicated region
    $region2: #{linear_clamp.1} parent=1 // pred_check
      _
    $region3: #{linear_clamp.1} parent=1 // pred_check_branch
      %12 = sbr.rel (0) target = $region5
    $region4: #{linear_clamp.1} parent=1 // pred_region
      %14 = vsyncadd [#allocation3], 0
      %s16 = sshll.u32 %s0, 4
      %s17 = int_to_ptr.hbm [resolvable:$true] %s16
      %s18 = sshll.u32 [#allocation2], 4
      %s19 = int_to_ptr.vmem [resolvable:$true] %s18
      %21 = dma.hbm_to_vmem [thread:$0]  %s17, 1024, %s19, [#allocation3]
    $region5: #{linear_clamp.1} parent=1 // pred_fallthru
      _
    // Predicated region
    $region6: #{linear_clamp.1} parent=1 // pred_check
      _
    $region7: #{linear_clamp.1} parent=1 // pred_check_branch
      %23 = sbr.rel (0) target = $region9
    $region8: #{linear_clamp.1} parent=1 // pred_region
      %25 = vsyncadd [#allocation6], 0
      %s26 = sshll.u32 %s1, 4
      %s27 = int_to_ptr.hbm [resolvable:$true] %s26
      %s28 = sshll.u32 [#allocation5], 4
      %s29 = int_to_ptr.vmem [resolvable:$true] %s28
      %34 = dma.hbm_to_vmem [thread:$0]  %s27, 81920, %s29, [#allocation6], 4096, 4096, 256
    $region9: #{linear_clamp.1} parent=1 // pred_fallthru
      _
    // Predicated region
    $region10: #{linear_clamp.1} parent=1 // pred_check
      _
    $region11: #{linear_clamp.1} parent=1 // pred_check_branch
      %36 = sbr.rel (0) target = $region13
    $region12: #{linear_clamp.1} parent=1 // pred_region
      %38 = vsyncadd [#allocation6], 0
      %s40 = sshll.u32 %s2, 4
      %s41 = int_to_ptr.hbm [resolvable:$true] %s40
      %s42 = sshll.u32 [#allocation7], 4
      %s43 = int_to_ptr.vmem [resolvable:$true] %s42
      %45 = dma.hbm_to_vmem [thread:$0]  %s41, 32, %s43, [#allocation6]
    $region13: #{linear_clamp.1} parent=1 // pred_fallthru
      _
    // Predicated region
    $region14: #{linear_clamp.1} parent=1 // pred_check
      _
    $region15: #{linear_clamp.1} parent=1 // pred_check_branch
      %47 = sbr.rel (0) target = $region17
    $region16: #{linear_clamp.1} parent=1 // pred_region
      %49 = dma.done [#allocation3], 1024
    $region17: #{linear_clamp.1} parent=1 // pred_fallthru
      _
    // Predicated region
    $region18: #{linear_clamp.1} parent=1 // pred_check
      _
    $region19: #{linear_clamp.1} parent=1 // pred_check_branch
      %51 = sbr.rel (0) target = $region21
    $region20: #{linear_clamp.1} parent=1 // pred_region
      %53 = dma.done [#allocation6], 81920
    $region21: #{linear_clamp.1} parent=1 // pred_fallthru
      _
    // Predicated region
    $region22: #{linear_clamp.1} parent=1 // pred_check
      _
    $region23: #{linear_clamp.1} parent=1 // pred_check_branch
      %55 = sbr.rel (0) target = $region25
    $region24: #{linear_clamp.1} parent=1 // pred_region
      %57 = dma.done [#allocation6], 32
    $region25: #{linear_clamp.1} parent=1 // pred_fallthru
      _
    %v59 = vld [vmem:[#allocation2] sm:$0xff]
    %v60 = vld [vmem:[#allocation2 + $0x8] sm:$0xff]
    %v61 = vld [vmem:[#allocation2 + $0x10] sm:$0xff]
    %v62 = vld [vmem:[#allocation2 + $0x18] sm:$0xff]
    %v63 = vld [vmem:[#allocation2 + $0x20] sm:$0xff]
    %v64 = vld [vmem:[#allocation2 + $0x28] sm:$0xff]
    %v65 = vld [vmem:[#allocation2 + $0x30] sm:$0xff]
    %v66 = vld [vmem:[#allocation2 + $0x38] sm:$0xff]
    %v75 = vperm.slane %v59, 0
    %v76 = vperm.slane %v59, 1
    %v77 = vperm.slane %v59, 2
    %v78 = vperm.slane %v59, 3
    %v79 = vperm.slane %v59, 4
    %v80 = vperm.slane %v59, 5
    %v81 = vperm.slane %v59, 6
    %v82 = vperm.slane %v59, 7
    %v83 = vperm.slane %v60, 0
    %v84 = vperm.slane %v60, 1
    %v85 = vperm.slane %v60, 2
    %v86 = vperm.slane %v60, 3
    %v87 = vperm.slane %v60, 4
    %v88 = vperm.slane %v60, 5
    %v89 = vperm.slane %v60, 6
    %v90 = vperm.slane %v60, 7
    %v91 = vperm.slane %v61, 0
    %v92 = vperm.slane %v61, 1
    %v93 = vperm.slane %v61, 2
    %v94 = vperm.slane %v61, 3
    %v95 = vperm.slane %v61, 4
    %v96 = vperm.slane %v61, 5
    %v97 = vperm.slane %v61, 6
    %v98 = vperm.slane %v61, 7
    %v99 = vperm.slane %v62, 0
    %v100 = vperm.slane %v62, 1
    %v101 = vperm.slane %v62, 2
    %v102 = vperm.slane %v62, 3
    %v103 = vperm.slane %v62, 4
    %v104 = vperm.slane %v62, 5
    %v105 = vperm.slane %v62, 6
    %v106 = vperm.slane %v62, 7
    %v107 = vperm.slane %v63, 0
    %v108 = vperm.slane %v63, 1
    %v109 = vperm.slane %v63, 2
    %v110 = vperm.slane %v63, 3
    %v111 = vperm.slane %v63, 4
    %v112 = vperm.slane %v63, 5
    %v113 = vperm.slane %v63, 6
    %v114 = vperm.slane %v63, 7
    %v115 = vperm.slane %v64, 0
    %v116 = vperm.slane %v64, 1
    %v117 = vperm.slane %v64, 2
    %v118 = vperm.slane %v64, 3
    %v119 = vperm.slane %v64, 4
    %v120 = vperm.slane %v64, 5
    %v121 = vperm.slane %v64, 6
    %v122 = vperm.slane %v64, 7
    %v123 = vperm.slane %v65, 0
    %v124 = vperm.slane %v65, 1
    %v125 = vperm.slane %v65, 2
    %v126 = vperm.slane %v65, 3
    %v127 = vperm.slane %v65, 4
    %v128 = vperm.slane %v65, 5
    %v129 = vperm.slane %v65, 6
    %v130 = vperm.slane %v65, 7
    %v131 = vperm.slane %v66, 0
    %v132 = vperm.slane %v66, 1
    %v133 = vperm.slane %v66, 2
    %v134 = vperm.slane %v66, 3
    %v135 = vperm.slane %v66, 4
    %v136 = vperm.slane %v66, 5
    %v137 = vperm.slane %v66, 6
    %v138 = vperm.slane %v66, 7
    %v203 = vpack.c.bf16 %v75, %v75
    %v204 = vpack.c.bf16 %v76, %v76
    %v205 = vpack.c.bf16 %v77, %v77
    %v206 = vpack.c.bf16 %v78, %v78
    %v207 = vpack.c.bf16 %v79, %v79
    %v208 = vpack.c.bf16 %v80, %v80
    %v209 = vpack.c.bf16 %v81, %v81
    %v210 = vpack.c.bf16 %v82, %v82
    %v211 = vpack.c.bf16 %v83, %v83
    %v212 = vpack.c.bf16 %v84, %v84
    %v213 = vpack.c.bf16 %v85, %v85
    %v214 = vpack.c.bf16 %v86, %v86
    %v215 = vpack.c.bf16 %v87, %v87
    %v216 = vpack.c.bf16 %v88, %v88
    %v217 = vpack.c.bf16 %v89, %v89
    %v218 = vpack.c.bf16 %v90, %v90
    %v219 = vpack.c.bf16 %v91, %v91
    %v220 = vpack.c.bf16 %v92, %v92
    %v221 = vpack.c.bf16 %v93, %v93
    %v222 = vpack.c.bf16 %v94, %v94
    %v223 = vpack.c.bf16 %v95, %v95
    %v224 = vpack.c.bf16 %v96, %v96
    %v225 = vpack.c.bf16 %v97, %v97
    %v226 = vpack.c.bf16 %v98, %v98
    %v227 = vpack.c.bf16 %v99, %v99
    %v228 = vpack.c.bf16 %v100, %v100
    %v229 = vpack.c.bf16 %v101, %v101
    %v230 = vpack.c.bf16 %v102, %v102
    %v231 = vpack.c.bf16 %v103, %v103
    %v232 = vpack.c.bf16 %v104, %v104
    %v233 = vpack.c.bf16 %v105, %v105
    %v234 = vpack.c.bf16 %v106, %v106
    %v235 = vpack.c.bf16 %v107, %v107
    %v236 = vpack.c.bf16 %v108, %v108
    %v237 = vpack.c.bf16 %v109, %v109
    %v238 = vpack.c.bf16 %v110, %v110
    %v239 = vpack.c.bf16 %v111, %v111
    %v240 = vpack.c.bf16 %v112, %v112
    %v241 = vpack.c.bf16 %v113, %v113
    %v242 = vpack.c.bf16 %v114, %v114
    %v243 = vpack.c.bf16 %v115, %v115
    %v244 = vpack.c.bf16 %v116, %v116
    %v245 = vpack.c.bf16 %v117, %v117
    %v246 = vpack.c.bf16 %v118, %v118
    %v247 = vpack.c.bf16 %v119, %v119
    %v248 = vpack.c.bf16 %v120, %v120
    %v249 = vpack.c.bf16 %v121, %v121
    %v250 = vpack.c.bf16 %v122, %v122
    %v251 = vpack.c.bf16 %v123, %v123
    %v252 = vpack.c.bf16 %v124, %v124
    %v253 = vpack.c.bf16 %v125, %v125
    %v254 = vpack.c.bf16 %v126, %v126
    %v255 = vpack.c.bf16 %v127, %v127
    %v256 = vpack.c.bf16 %v128, %v128
    %v257 = vpack.c.bf16 %v129, %v129
    %v258 = vpack.c.bf16 %v130, %v130
    %v259 = vpack.c.bf16 %v131, %v131
    %v260 = vpack.c.bf16 %v132, %v132
    %v261 = vpack.c.bf16 %v133, %v133
    %v262 = vpack.c.bf16 %v134, %v134
    %v263 = vpack.c.bf16 %v135, %v135
    %v264 = vpack.c.bf16 %v136, %v136
    %v265 = vpack.c.bf16 %v137, %v137
    %v266 = vpack.c.bf16 %v138, %v138
    %v267 = vld [vmem:[#allocation5] sm:$0xff]
    %v268 = vld [vmem:[#allocation5 + $0x8] sm:$0xff]
    %v269 = vld [vmem:[#allocation5 + $0x10] sm:$0xff]
    %v270 = vld [vmem:[#allocation5 + $0x18] sm:$0xff]
    %v271 = vld [vmem:[#allocation5 + $0x20] sm:$0xff]
    %v272 = vld [vmem:[#allocation5 + $0x28] sm:$0xff]
    %v273 = vld [vmem:[#allocation5 + $0x30] sm:$0xff]
    %v274 = vld [vmem:[#allocation5 + $0x38] sm:$0xff]
    %v275 = vld [vmem:[#allocation5 + $0x40] sm:$0xff]
    %v276 = vld [vmem:[#allocation5 + $0x48] sm:$0xff]
    %v277 = vld [vmem:[#allocation5 + $0x50] sm:$0xff]
    %v278 = vld [vmem:[#allocation5 + $0x58] sm:$0xff]
    %v279 = vld [vmem:[#allocation5 + $0x60] sm:$0xff]
    %v280 = vld [vmem:[#allocation5 + $0x68] sm:$0xff]
    %v281 = vld [vmem:[#allocation5 + $0x70] sm:$0xff]
    %v282 = vld [vmem:[#allocation5 + $0x78] sm:$0xff]
    %v283 = vld [vmem:[#allocation5 + $0x80] sm:$0xff]
    %v284 = vld [vmem:[#allocation5 + $0x88] sm:$0xff]
    %v285 = vld [vmem:[#allocation5 + $0x90] sm:$0xff]
    %v286 = vld [vmem:[#allocation5 + $0x98] sm:$0xff]
    %v287 = vld [vmem:[#allocation5 + $0xa0] sm:$0xff]
    %v288 = vld [vmem:[#allocation5 + $0xa8] sm:$0xff]
    %v289 = vld [vmem:[#allocation5 + $0xb0] sm:$0xff]
    %v290 = vld [vmem:[#allocation5 + $0xb8] sm:$0xff]
    %v291 = vld [vmem:[#allocation5 + $0xc0] sm:$0xff]
    %v292 = vld [vmem:[#allocation5 + $0xc8] sm:$0xff]
    %v293 = vld [vmem:[#allocation5 + $0xd0] sm:$0xff]
    %v294 = vld [vmem:[#allocation5 + $0xd8] sm:$0xff]
    %v295 = vld [vmem:[#allocation5 + $0xe0] sm:$0xff]
    %v296 = vld [vmem:[#allocation5 + $0xe8] sm:$0xff]
    %v297 = vld [vmem:[#allocation5 + $0xf0] sm:$0xff]
    %v298 = vld [vmem:[#allocation5 + $0xf8] sm:$0xff]
    %v299 = vld [vmem:[#allocation5 + $0x100] sm:$0xff]
    %v300 = vld [vmem:[#allocation5 + $0x108] sm:$0xff]
    %v301 = vld [vmem:[#allocation5 + $0x110] sm:$0xff]
    %v302 = vld [vmem:[#allocation5 + $0x118] sm:$0xff]
    %v303 = vld [vmem:[#allocation5 + $0x120] sm:$0xff]
    %v304 = vld [vmem:[#allocation5 + $0x128] sm:$0xff]
    %v305 = vld [vmem:[#allocation5 + $0x130] sm:$0xff]
    %v306 = vld [vmem:[#allocation5 + $0x138] sm:$0xff]
    %v307 = vld [vmem:[#allocation5 + $0x140] sm:$0xff]
    %v308 = vld [vmem:[#allocation5 + $0x148] sm:$0xff]
    %v309 = vld [vmem:[#allocation5 + $0x150] sm:$0xff]
    %v310 = vld [vmem:[#allocation5 + $0x158] sm:$0xff]
    %v311 = vld [vmem:[#allocation5 + $0x160] sm:$0xff]
    %v312 = vld [vmem:[#allocation5 + $0x168] sm:$0xff]
    %v313 = vld [vmem:[#allocation5 + $0x170] sm:$0xff]
    %v314 = vld [vmem:[#allocation5 + $0x178] sm:$0xff]
    %v315 = vld [vmem:[#allocation5 + $0x180] sm:$0xff]
    %v316 = vld [vmem:[#allocation5 + $0x188] sm:$0xff]
    %v317 = vld [vmem:[#allocation5 + $0x190] sm:$0xff]
    %v318 = vld [vmem:[#allocation5 + $0x198] sm:$0xff]
    %v319 = vld [vmem:[#allocation5 + $0x1a0] sm:$0xff]
    %v320 = vld [vmem:[#allocation5 + $0x1a8] sm:$0xff]
    %v321 = vld [vmem:[#allocation5 + $0x1b0] sm:$0xff]
    %v322 = vld [vmem:[#allocation5 + $0x1b8] sm:$0xff]
    %v323 = vld [vmem:[#allocation5 + $0x1c0] sm:$0xff]
    %v324 = vld [vmem:[#allocation5 + $0x1c8] sm:$0xff]
    %v325 = vld [vmem:[#allocation5 + $0x1d0] sm:$0xff]
    %v326 = vld [vmem:[#allocation5 + $0x1d8] sm:$0xff]
    %v327 = vld [vmem:[#allocation5 + $0x1e0] sm:$0xff]
    %v328 = vld [vmem:[#allocation5 + $0x1e8] sm:$0xff]
    %v329 = vld [vmem:[#allocation5 + $0x1f0] sm:$0xff]
    %v330 = vld [vmem:[#allocation5 + $0x1f8] sm:$0xff]
    %v331 = vld [vmem:[#allocation5 + $0x200] sm:$0xff]
    %v332 = vld [vmem:[#allocation5 + $0x208] sm:$0xff]
    %v333 = vld [vmem:[#allocation5 + $0x210] sm:$0xff]
    %v334 = vld [vmem:[#allocation5 + $0x218] sm:$0xff]
    %v335 = vld [vmem:[#allocation5 + $0x220] sm:$0xff]
    %v336 = vld [vmem:[#allocation5 + $0x228] sm:$0xff]
    %v337 = vld [vmem:[#allocation5 + $0x230] sm:$0xff]
    %v338 = vld [vmem:[#allocation5 + $0x238] sm:$0xff]
    %v339 = vld [vmem:[#allocation5 + $0x240] sm:$0xff]
    %v340 = vld [vmem:[#allocation5 + $0x248] sm:$0xff]
    %v341 = vld [vmem:[#allocation5 + $0x250] sm:$0xff]
    %v342 = vld [vmem:[#allocation5 + $0x258] sm:$0xff]
    %v343 = vld [vmem:[#allocation5 + $0x260] sm:$0xff]
    %v344 = vld [vmem:[#allocation5 + $0x268] sm:$0xff]
    %v345 = vld [vmem:[#allocation5 + $0x270] sm:$0xff]
    %v346 = vld [vmem:[#allocation5 + $0x278] sm:$0xff]
    %v347 = vld [vmem:[#allocation5 + $0x280] sm:$0xff]
    %v348 = vld [vmem:[#allocation5 + $0x288] sm:$0xff]
    %v349 = vld [vmem:[#allocation5 + $0x290] sm:$0xff]
    %v350 = vld [vmem:[#allocation5 + $0x298] sm:$0xff]
    %v351 = vld [vmem:[#allocation5 + $0x2a0] sm:$0xff]
    %v352 = vld [vmem:[#allocation5 + $0x2a8] sm:$0xff]
    %v353 = vld [vmem:[#allocation5 + $0x2b0] sm:$0xff]
    %v354 = vld [vmem:[#allocation5 + $0x2b8] sm:$0xff]
    %v355 = vld [vmem:[#allocation5 + $0x2c0] sm:$0xff]
    %v356 = vld [vmem:[#allocation5 + $0x2c8] sm:$0xff]
    %v357 = vld [vmem:[#allocation5 + $0x2d0] sm:$0xff]
    %v358 = vld [vmem:[#allocation5 + $0x2d8] sm:$0xff]
    %v359 = vld [vmem:[#allocation5 + $0x2e0] sm:$0xff]
    %v360 = vld [vmem:[#allocation5 + $0x2e8] sm:$0xff]
    %v361 = vld [vmem:[#allocation5 + $0x2f0] sm:$0xff]
    %v362 = vld [vmem:[#allocation5 + $0x2f8] sm:$0xff]
    %v363 = vld [vmem:[#allocation5 + $0x300] sm:$0xff]
    %v364 = vld [vmem:[#allocation5 + $0x308] sm:$0xff]
    %v365 = vld [vmem:[#allocation5 + $0x310] sm:$0xff]
    %v366 = vld [vmem:[#allocation5 + $0x318] sm:$0xff]
    %v367 = vld [vmem:[#allocation5 + $0x320] sm:$0xff]
    %v368 = vld [vmem:[#allocation5 + $0x328] sm:$0xff]
    %v369 = vld [vmem:[#allocation5 + $0x330] sm:$0xff]
    %v370 = vld [vmem:[#allocation5 + $0x338] sm:$0xff]
    %v371 = vld [vmem:[#allocation5 + $0x340] sm:$0xff]
    %v372 = vld [vmem:[#allocation5 + $0x348] sm:$0xff]
    %v373 = vld [vmem:[#allocation5 + $0x350] sm:$0xff]
    %v374 = vld [vmem:[#allocation5 + $0x358] sm:$0xff]
    %v375 = vld [vmem:[#allocation5 + $0x360] sm:$0xff]
    %v376 = vld [vmem:[#allocation5 + $0x368] sm:$0xff]
    %v377 = vld [vmem:[#allocation5 + $0x370] sm:$0xff]
    %v378 = vld [vmem:[#allocation5 + $0x378] sm:$0xff]
    %v379 = vld [vmem:[#allocation5 + $0x380] sm:$0xff]
    %v380 = vld [vmem:[#allocation5 + $0x388] sm:$0xff]
    %v381 = vld [vmem:[#allocation5 + $0x390] sm:$0xff]
    %v382 = vld [vmem:[#allocation5 + $0x398] sm:$0xff]
    %v383 = vld [vmem:[#allocation5 + $0x3a0] sm:$0xff]
    %v384 = vld [vmem:[#allocation5 + $0x3a8] sm:$0xff]
    %v385 = vld [vmem:[#allocation5 + $0x3b0] sm:$0xff]
    %v386 = vld [vmem:[#allocation5 + $0x3b8] sm:$0xff]
    %v387 = vld [vmem:[#allocation5 + $0x3c0] sm:$0xff]
    %v388 = vld [vmem:[#allocation5 + $0x3c8] sm:$0xff]
    %v389 = vld [vmem:[#allocation5 + $0x3d0] sm:$0xff]
    %v390 = vld [vmem:[#allocation5 + $0x3d8] sm:$0xff]
    %v391 = vld [vmem:[#allocation5 + $0x3e0] sm:$0xff]
    %v392 = vld [vmem:[#allocation5 + $0x3e8] sm:$0xff]
    %v393 = vld [vmem:[#allocation5 + $0x3f0] sm:$0xff]
    %v394 = vld [vmem:[#allocation5 + $0x3f8] sm:$0xff]
    %v395 = vld [vmem:[#allocation5 + $0x400] sm:$0xff]
    %v396 = vld [vmem:[#allocation5 + $0x408] sm:$0xff]
    %v397 = vld [vmem:[#allocation5 + $0x410] sm:$0xff]
    %v398 = vld [vmem:[#allocation5 + $0x418] sm:$0xff]
    %v399 = vld [vmem:[#allocation5 + $0x420] sm:$0xff]
    %v400 = vld [vmem:[#allocation5 + $0x428] sm:$0xff]
    %v401 = vld [vmem:[#allocation5 + $0x430] sm:$0xff]
    %v402 = vld [vmem:[#allocation5 + $0x438] sm:$0xff]
    %v403 = vld [vmem:[#allocation5 + $0x440] sm:$0xff]
    %v404 = vld [vmem:[#allocation5 + $0x448] sm:$0xff]
    %v405 = vld [vmem:[#allocation5 + $0x450] sm:$0xff]
    %v406 = vld [vmem:[#allocation5 + $0x458] sm:$0xff]
    %v407 = vld [vmem:[#allocation5 + $0x460] sm:$0xff]
    %v408 = vld [vmem:[#allocation5 + $0x468] sm:$0xff]
    %v409 = vld [vmem:[#allocation5 + $0x470] sm:$0xff]
    %v410 = vld [vmem:[#allocation5 + $0x478] sm:$0xff]
    %v411 = vld [vmem:[#allocation5 + $0x480] sm:$0xff]
    %v412 = vld [vmem:[#allocation5 + $0x488] sm:$0xff]
    %v413 = vld [vmem:[#allocation5 + $0x490] sm:$0xff]
    %v414 = vld [vmem:[#allocation5 + $0x498] sm:$0xff]
    %v415 = vld [vmem:[#allocation5 + $0x4a0] sm:$0xff]
    %v416 = vld [vmem:[#allocation5 + $0x4a8] sm:$0xff]
    %v417 = vld [vmem:[#allocation5 + $0x4b0] sm:$0xff]
    %v418 = vld [vmem:[#allocation5 + $0x4b8] sm:$0xff]
    %v419 = vld [vmem:[#allocation5 + $0x4c0] sm:$0xff]
    %v420 = vld [vmem:[#allocation5 + $0x4c8] sm:$0xff]
    %v421 = vld [vmem:[#allocation5 + $0x4d0] sm:$0xff]
    %v422 = vld [vmem:[#allocation5 + $0x4d8] sm:$0xff]
    %v423 = vld [vmem:[#allocation5 + $0x4e0] sm:$0xff]
    %v424 = vld [vmem:[#allocation5 + $0x4e8] sm:$0xff]
    %v425 = vld [vmem:[#allocation5 + $0x4f0] sm:$0xff]
    %v426 = vld [vmem:[#allocation5 + $0x4f8] sm:$0xff]
    %v427 = vld [vmem:[#allocation5 + $0x500] sm:$0xff]
    %v428 = vld [vmem:[#allocation5 + $0x508] sm:$0xff]
    %v429 = vld [vmem:[#allocation5 + $0x510] sm:$0xff]
    %v430 = vld [vmem:[#allocation5 + $0x518] sm:$0xff]
    %v431 = vld [vmem:[#allocation5 + $0x520] sm:$0xff]
    %v432 = vld [vmem:[#allocation5 + $0x528] sm:$0xff]
    %v433 = vld [vmem:[#allocation5 + $0x530] sm:$0xff]
    %v434 = vld [vmem:[#allocation5 + $0x538] sm:$0xff]
    %v435 = vld [vmem:[#allocation5 + $0x540] sm:$0xff]
    %v436 = vld [vmem:[#allocation5 + $0x548] sm:$0xff]
    %v437 = vld [vmem:[#allocation5 + $0x550] sm:$0xff]
    %v438 = vld [vmem:[#allocation5 + $0x558] sm:$0xff]
    %v439 = vld [vmem:[#allocation5 + $0x560] sm:$0xff]
    %v440 = vld [vmem:[#allocation5 + $0x568] sm:$0xff]
    %v441 = vld [vmem:[#allocation5 + $0x570] sm:$0xff]
    %v442 = vld [vmem:[#allocation5 + $0x578] sm:$0xff]
    %v443 = vld [vmem:[#allocation5 + $0x580] sm:$0xff]
    %v444 = vld [vmem:[#allocation5 + $0x588] sm:$0xff]
    %v445 = vld [vmem:[#allocation5 + $0x590] sm:$0xff]
    %v446 = vld [vmem:[#allocation5 + $0x598] sm:$0xff]
    %v447 = vld [vmem:[#allocation5 + $0x5a0] sm:$0xff]
    %v448 = vld [vmem:[#allocation5 + $0x5a8] sm:$0xff]
    %v449 = vld [vmem:[#allocation5 + $0x5b0] sm:$0xff]
    %v450 = vld [vmem:[#allocation5 + $0x5b8] sm:$0xff]
    %v451 = vld [vmem:[#allocation5 + $0x5c0] sm:$0xff]
    %v452 = vld [vmem:[#allocation5 + $0x5c8] sm:$0xff]
    %v453 = vld [vmem:[#allocation5 + $0x5d0] sm:$0xff]
    %v454 = vld [vmem:[#allocation5 + $0x5d8] sm:$0xff]
    %v455 = vld [vmem:[#allocation5 + $0x5e0] sm:$0xff]
    %v456 = vld [vmem:[#allocation5 + $0x5e8] sm:$0xff]
    %v457 = vld [vmem:[#allocation5 + $0x5f0] sm:$0xff]
    %v458 = vld [vmem:[#allocation5 + $0x5f8] sm:$0xff]
    %v459 = vld [vmem:[#allocation5 + $0x600] sm:$0xff]
    %v460 = vld [vmem:[#allocation5 + $0x608] sm:$0xff]
    %v461 = vld [vmem:[#allocation5 + $0x610] sm:$0xff]
    %v462 = vld [vmem:[#allocation5 + $0x618] sm:$0xff]
    %v463 = vld [vmem:[#allocation5 + $0x620] sm:$0xff]
    %v464 = vld [vmem:[#allocation5 + $0x628] sm:$0xff]
    %v465 = vld [vmem:[#allocation5 + $0x630] sm:$0xff]
    %v466 = vld [vmem:[#allocation5 + $0x638] sm:$0xff]
    %v467 = vld [vmem:[#allocation5 + $0x640] sm:$0xff]
    %v468 = vld [vmem:[#allocation5 + $0x648] sm:$0xff]
    %v469 = vld [vmem:[#allocation5 + $0x650] sm:$0xff]
    %v470 = vld [vmem:[#allocation5 + $0x658] sm:$0xff]
    %v471 = vld [vmem:[#allocation5 + $0x660] sm:$0xff]
    %v472 = vld [vmem:[#allocation5 + $0x668] sm:$0xff]
    %v473 = vld [vmem:[#allocation5 + $0x670] sm:$0xff]
    %v474 = vld [vmem:[#allocation5 + $0x678] sm:$0xff]
    %v475 = vld [vmem:[#allocation5 + $0x680] sm:$0xff]
    %v476 = vld [vmem:[#allocation5 + $0x688] sm:$0xff]
    %v477 = vld [vmem:[#allocation5 + $0x690] sm:$0xff]
    %v478 = vld [vmem:[#allocation5 + $0x698] sm:$0xff]
    %v479 = vld [vmem:[#allocation5 + $0x6a0] sm:$0xff]
    %v480 = vld [vmem:[#allocation5 + $0x6a8] sm:$0xff]
    %v481 = vld [vmem:[#allocation5 + $0x6b0] sm:$0xff]
    %v482 = vld [vmem:[#allocation5 + $0x6b8] sm:$0xff]
    %v483 = vld [vmem:[#allocation5 + $0x6c0] sm:$0xff]
    %v484 = vld [vmem:[#allocation5 + $0x6c8] sm:$0xff]
    %v485 = vld [vmem:[#allocation5 + $0x6d0] sm:$0xff]
    %v486 = vld [vmem:[#allocation5 + $0x6d8] sm:$0xff]
    %v487 = vld [vmem:[#allocation5 + $0x6e0] sm:$0xff]
    %v488 = vld [vmem:[#allocation5 + $0x6e8] sm:$0xff]
    %v489 = vld [vmem:[#allocation5 + $0x6f0] sm:$0xff]
    %v490 = vld [vmem:[#allocation5 + $0x6f8] sm:$0xff]
    %v491 = vld [vmem:[#allocation5 + $0x700] sm:$0xff]
    %v492 = vld [vmem:[#allocation5 + $0x708] sm:$0xff]
    %v493 = vld [vmem:[#allocation5 + $0x710] sm:$0xff]
    %v494 = vld [vmem:[#allocation5 + $0x718] sm:$0xff]
    %v495 = vld [vmem:[#allocation5 + $0x720] sm:$0xff]
    %v496 = vld [vmem:[#allocation5 + $0x728] sm:$0xff]
    %v497 = vld [vmem:[#allocation5 + $0x730] sm:$0xff]
    %v498 = vld [vmem:[#allocation5 + $0x738] sm:$0xff]
    %v499 = vld [vmem:[#allocation5 + $0x740] sm:$0xff]
    %v500 = vld [vmem:[#allocation5 + $0x748] sm:$0xff]
    %v501 = vld [vmem:[#allocation5 + $0x750] sm:$0xff]
    %v502 = vld [vmem:[#allocation5 + $0x758] sm:$0xff]
    %v503 = vld [vmem:[#allocation5 + $0x760] sm:$0xff]
    %v504 = vld [vmem:[#allocation5 + $0x768] sm:$0xff]
    %v505 = vld [vmem:[#allocation5 + $0x770] sm:$0xff]
    %v506 = vld [vmem:[#allocation5 + $0x778] sm:$0xff]
    %v507 = vld [vmem:[#allocation5 + $0x780] sm:$0xff]
    %v508 = vld [vmem:[#allocation5 + $0x788] sm:$0xff]
    %v509 = vld [vmem:[#allocation5 + $0x790] sm:$0xff]
    %v510 = vld [vmem:[#allocation5 + $0x798] sm:$0xff]
    %v511 = vld [vmem:[#allocation5 + $0x7a0] sm:$0xff]
    %v512 = vld [vmem:[#allocation5 + $0x7a8] sm:$0xff]
    %v513 = vld [vmem:[#allocation5 + $0x7b0] sm:$0xff]
    %v514 = vld [vmem:[#allocation5 + $0x7b8] sm:$0xff]
    %v515 = vld [vmem:[#allocation5 + $0x7c0] sm:$0xff]
    %v516 = vld [vmem:[#allocation5 + $0x7c8] sm:$0xff]
    %v517 = vld [vmem:[#allocation5 + $0x7d0] sm:$0xff]
    %v518 = vld [vmem:[#allocation5 + $0x7d8] sm:$0xff]
    %v519 = vld [vmem:[#allocation5 + $0x7e0] sm:$0xff]
    %v520 = vld [vmem:[#allocation5 + $0x7e8] sm:$0xff]
    %v521 = vld [vmem:[#allocation5 + $0x7f0] sm:$0xff]
    %v522 = vld [vmem:[#allocation5 + $0x7f8] sm:$0xff]
    %v523 = vld [vmem:[#allocation5 + $0x800] sm:$0xff]
    %v524 = vld [vmem:[#allocation5 + $0x808] sm:$0xff]
    %v525 = vld [vmem:[#allocation5 + $0x810] sm:$0xff]
    %v526 = vld [vmem:[#allocation5 + $0x818] sm:$0xff]
    %v527 = vld [vmem:[#allocation5 + $0x820] sm:$0xff]
    %v528 = vld [vmem:[#allocation5 + $0x828] sm:$0xff]
    %v529 = vld [vmem:[#allocation5 + $0x830] sm:$0xff]
    %v530 = vld [vmem:[#allocation5 + $0x838] sm:$0xff]
    %v531 = vld [vmem:[#allocation5 + $0x840] sm:$0xff]
    %v532 = vld [vmem:[#allocation5 + $0x848] sm:$0xff]
    %v533 = vld [vmem:[#allocation5 + $0x850] sm:$0xff]
    %v534 = vld [vmem:[#allocation5 + $0x858] sm:$0xff]
    %v535 = vld [vmem:[#allocation5 + $0x860] sm:$0xff]
    %v536 = vld [vmem:[#allocation5 + $0x868] sm:$0xff]
    %v537 = vld [vmem:[#allocation5 + $0x870] sm:$0xff]
    %v538 = vld [vmem:[#allocation5 + $0x878] sm:$0xff]
    %v539 = vld [vmem:[#allocation5 + $0x880] sm:$0xff]
    %v540 = vld [vmem:[#allocation5 + $0x888] sm:$0xff]
    %v541 = vld [vmem:[#allocation5 + $0x890] sm:$0xff]
    %v542 = vld [vmem:[#allocation5 + $0x898] sm:$0xff]
    %v543 = vld [vmem:[#allocation5 + $0x8a0] sm:$0xff]
    %v544 = vld [vmem:[#allocation5 + $0x8a8] sm:$0xff]
    %v545 = vld [vmem:[#allocation5 + $0x8b0] sm:$0xff]
    %v546 = vld [vmem:[#allocation5 + $0x8b8] sm:$0xff]
    %v547 = vld [vmem:[#allocation5 + $0x8c0] sm:$0xff]
    %v548 = vld [vmem:[#allocation5 + $0x8c8] sm:$0xff]
    %v549 = vld [vmem:[#allocation5 + $0x8d0] sm:$0xff]
    %v550 = vld [vmem:[#allocation5 + $0x8d8] sm:$0xff]
    %v551 = vld [vmem:[#allocation5 + $0x8e0] sm:$0xff]
    %v552 = vld [vmem:[#allocation5 + $0x8e8] sm:$0xff]
    %v553 = vld [vmem:[#allocation5 + $0x8f0] sm:$0xff]
    %v554 = vld [vmem:[#allocation5 + $0x8f8] sm:$0xff]
    %v555 = vld [vmem:[#allocation5 + $0x900] sm:$0xff]
    %v556 = vld [vmem:[#allocation5 + $0x908] sm:$0xff]
    %v557 = vld [vmem:[#allocation5 + $0x910] sm:$0xff]
    %v558 = vld [vmem:[#allocation5 + $0x918] sm:$0xff]
    %v559 = vld [vmem:[#allocation5 + $0x920] sm:$0xff]
    %v560 = vld [vmem:[#allocation5 + $0x928] sm:$0xff]
    %v561 = vld [vmem:[#allocation5 + $0x930] sm:$0xff]
    %v562 = vld [vmem:[#allocation5 + $0x938] sm:$0xff]
    %v563 = vld [vmem:[#allocation5 + $0x940] sm:$0xff]
    %v564 = vld [vmem:[#allocation5 + $0x948] sm:$0xff]
    %v565 = vld [vmem:[#allocation5 + $0x950] sm:$0xff]
    %v566 = vld [vmem:[#allocation5 + $0x958] sm:$0xff]
    %v567 = vld [vmem:[#allocation5 + $0x960] sm:$0xff]
    %v568 = vld [vmem:[#allocation5 + $0x968] sm:$0xff]
    %v569 = vld [vmem:[#allocation5 + $0x970] sm:$0xff]
    %v570 = vld [vmem:[#allocation5 + $0x978] sm:$0xff]
    %v571 = vld [vmem:[#allocation5 + $0x980] sm:$0xff]
    %v572 = vld [vmem:[#allocation5 + $0x988] sm:$0xff]
    %v573 = vld [vmem:[#allocation5 + $0x990] sm:$0xff]
    %v574 = vld [vmem:[#allocation5 + $0x998] sm:$0xff]
    %v575 = vld [vmem:[#allocation5 + $0x9a0] sm:$0xff]
    %v576 = vld [vmem:[#allocation5 + $0x9a8] sm:$0xff]
    %v577 = vld [vmem:[#allocation5 + $0x9b0] sm:$0xff]
    %v578 = vld [vmem:[#allocation5 + $0x9b8] sm:$0xff]
    %v579 = vld [vmem:[#allocation5 + $0x9c0] sm:$0xff]
    %v580 = vld [vmem:[#allocation5 + $0x9c8] sm:$0xff]
    %v581 = vld [vmem:[#allocation5 + $0x9d0] sm:$0xff]
    %v582 = vld [vmem:[#allocation5 + $0x9d8] sm:$0xff]
    %v583 = vld [vmem:[#allocation5 + $0x9e0] sm:$0xff]
    %v584 = vld [vmem:[#allocation5 + $0x9e8] sm:$0xff]
    %v585 = vld [vmem:[#allocation5 + $0x9f0] sm:$0xff]
    %v586 = vld [vmem:[#allocation5 + $0x9f8] sm:$0xff]
    %v587 = vld [vmem:[#allocation5 + $0xa00] sm:$0xff]
    %v588 = vld [vmem:[#allocation5 + $0xa08] sm:$0xff]
    %v589 = vld [vmem:[#allocation5 + $0xa10] sm:$0xff]
    %v590 = vld [vmem:[#allocation5 + $0xa18] sm:$0xff]
    %v591 = vld [vmem:[#allocation5 + $0xa20] sm:$0xff]
    %v592 = vld [vmem:[#allocation5 + $0xa28] sm:$0xff]
    %v593 = vld [vmem:[#allocation5 + $0xa30] sm:$0xff]
    %v594 = vld [vmem:[#allocation5 + $0xa38] sm:$0xff]
    %v595 = vld [vmem:[#allocation5 + $0xa40] sm:$0xff]
    %v596 = vld [vmem:[#allocation5 + $0xa48] sm:$0xff]
    %v597 = vld [vmem:[#allocation5 + $0xa50] sm:$0xff]
    %v598 = vld [vmem:[#allocation5 + $0xa58] sm:$0xff]
    %v599 = vld [vmem:[#allocation5 + $0xa60] sm:$0xff]
    %v600 = vld [vmem:[#allocation5 + $0xa68] sm:$0xff]
    %v601 = vld [vmem:[#allocation5 + $0xa70] sm:$0xff]
    %v602 = vld [vmem:[#allocation5 + $0xa78] sm:$0xff]
    %v603 = vld [vmem:[#allocation5 + $0xa80] sm:$0xff]
    %v604 = vld [vmem:[#allocation5 + $0xa88] sm:$0xff]
    %v605 = vld [vmem:[#allocation5 + $0xa90] sm:$0xff]
    %v606 = vld [vmem:[#allocation5 + $0xa98] sm:$0xff]
    %v607 = vld [vmem:[#allocation5 + $0xaa0] sm:$0xff]
    %v608 = vld [vmem:[#allocation5 + $0xaa8] sm:$0xff]
    %v609 = vld [vmem:[#allocation5 + $0xab0] sm:$0xff]
    %v610 = vld [vmem:[#allocation5 + $0xab8] sm:$0xff]
    %v611 = vld [vmem:[#allocation5 + $0xac0] sm:$0xff]
    %v612 = vld [vmem:[#allocation5 + $0xac8] sm:$0xff]
    %v613 = vld [vmem:[#allocation5 + $0xad0] sm:$0xff]
    %v614 = vld [vmem:[#allocation5 + $0xad8] sm:$0xff]
    %v615 = vld [vmem:[#allocation5 + $0xae0] sm:$0xff]
    %v616 = vld [vmem:[#allocation5 + $0xae8] sm:$0xff]
    %v617 = vld [vmem:[#allocation5 + $0xaf0] sm:$0xff]
    %v618 = vld [vmem:[#allocation5 + $0xaf8] sm:$0xff]
    %v619 = vld [vmem:[#allocation5 + $0xb00] sm:$0xff]
    %v620 = vld [vmem:[#allocation5 + $0xb08] sm:$0xff]
    %v621 = vld [vmem:[#allocation5 + $0xb10] sm:$0xff]
    %v622 = vld [vmem:[#allocation5 + $0xb18] sm:$0xff]
    %v623 = vld [vmem:[#allocation5 + $0xb20] sm:$0xff]
    %v624 = vld [vmem:[#allocation5 + $0xb28] sm:$0xff]
    %v625 = vld [vmem:[#allocation5 + $0xb30] sm:$0xff]
    %v626 = vld [vmem:[#allocation5 + $0xb38] sm:$0xff]
    %v627 = vld [vmem:[#allocation5 + $0xb40] sm:$0xff]
    %v628 = vld [vmem:[#allocation5 + $0xb48] sm:$0xff]
    %v629 = vld [vmem:[#allocation5 + $0xb50] sm:$0xff]
    %v630 = vld [vmem:[#allocation5 + $0xb58] sm:$0xff]
    %v631 = vld [vmem:[#allocation5 + $0xb60] sm:$0xff]
    %v632 = vld [vmem:[#allocation5 + $0xb68] sm:$0xff]
    %v633 = vld [vmem:[#allocation5 + $0xb70] sm:$0xff]
    %v634 = vld [vmem:[#allocation5 + $0xb78] sm:$0xff]
    %v635 = vld [vmem:[#allocation5 + $0xb80] sm:$0xff]
    %v636 = vld [vmem:[#allocation5 + $0xb88] sm:$0xff]
    %v637 = vld [vmem:[#allocation5 + $0xb90] sm:$0xff]
    %v638 = vld [vmem:[#allocation5 + $0xb98] sm:$0xff]
    %v639 = vld [vmem:[#allocation5 + $0xba0] sm:$0xff]
    %v640 = vld [vmem:[#allocation5 + $0xba8] sm:$0xff]
    %v641 = vld [vmem:[#allocation5 + $0xbb0] sm:$0xff]
    %v642 = vld [vmem:[#allocation5 + $0xbb8] sm:$0xff]
    %v643 = vld [vmem:[#allocation5 + $0xbc0] sm:$0xff]
    %v644 = vld [vmem:[#allocation5 + $0xbc8] sm:$0xff]
    %v645 = vld [vmem:[#allocation5 + $0xbd0] sm:$0xff]
    %v646 = vld [vmem:[#allocation5 + $0xbd8] sm:$0xff]
    %v647 = vld [vmem:[#allocation5 + $0xbe0] sm:$0xff]
    %v648 = vld [vmem:[#allocation5 + $0xbe8] sm:$0xff]
    %v649 = vld [vmem:[#allocation5 + $0xbf0] sm:$0xff]
    %v650 = vld [vmem:[#allocation5 + $0xbf8] sm:$0xff]
    %v651 = vld [vmem:[#allocation5 + $0xc00] sm:$0xff]
    %v652 = vld [vmem:[#allocation5 + $0xc08] sm:$0xff]
    %v653 = vld [vmem:[#allocation5 + $0xc10] sm:$0xff]
    %v654 = vld [vmem:[#allocation5 + $0xc18] sm:$0xff]
    %v655 = vld [vmem:[#allocation5 + $0xc20] sm:$0xff]
    %v656 = vld [vmem:[#allocation5 + $0xc28] sm:$0xff]
    %v657 = vld [vmem:[#allocation5 + $0xc30] sm:$0xff]
    %v658 = vld [vmem:[#allocation5 + $0xc38] sm:$0xff]
    %v659 = vld [vmem:[#allocation5 + $0xc40] sm:$0xff]
    %v660 = vld [vmem:[#allocation5 + $0xc48] sm:$0xff]
    %v661 = vld [vmem:[#allocation5 + $0xc50] sm:$0xff]
    %v662 = vld [vmem:[#allocation5 + $0xc58] sm:$0xff]
    %v663 = vld [vmem:[#allocation5 + $0xc60] sm:$0xff]
    %v664 = vld [vmem:[#allocation5 + $0xc68] sm:$0xff]
    %v665 = vld [vmem:[#allocation5 + $0xc70] sm:$0xff]
    %v666 = vld [vmem:[#allocation5 + $0xc78] sm:$0xff]
    %v667 = vld [vmem:[#allocation5 + $0xc80] sm:$0xff]
    %v668 = vld [vmem:[#allocation5 + $0xc88] sm:$0xff]
    %v669 = vld [vmem:[#allocation5 + $0xc90] sm:$0xff]
    %v670 = vld [vmem:[#allocation5 + $0xc98] sm:$0xff]
    %v671 = vld [vmem:[#allocation5 + $0xca0] sm:$0xff]
    %v672 = vld [vmem:[#allocation5 + $0xca8] sm:$0xff]
    %v673 = vld [vmem:[#allocation5 + $0xcb0] sm:$0xff]
    %v674 = vld [vmem:[#allocation5 + $0xcb8] sm:$0xff]
    %v675 = vld [vmem:[#allocation5 + $0xcc0] sm:$0xff]
    %v676 = vld [vmem:[#allocation5 + $0xcc8] sm:$0xff]
    %v677 = vld [vmem:[#allocation5 + $0xcd0] sm:$0xff]
    %v678 = vld [vmem:[#allocation5 + $0xcd8] sm:$0xff]
    %v679 = vld [vmem:[#allocation5 + $0xce0] sm:$0xff]
    %v680 = vld [vmem:[#allocation5 + $0xce8] sm:$0xff]
    %v681 = vld [vmem:[#allocation5 + $0xcf0] sm:$0xff]
    %v682 = vld [vmem:[#allocation5 + $0xcf8] sm:$0xff]
    %v683 = vld [vmem:[#allocation5 + $0xd00] sm:$0xff]
    %v684 = vld [vmem:[#allocation5 + $0xd08] sm:$0xff]
    %v685 = vld [vmem:[#allocation5 + $0xd10] sm:$0xff]
    %v686 = vld [vmem:[#allocation5 + $0xd18] sm:$0xff]
    %v687 = vld [vmem:[#allocation5 + $0xd20] sm:$0xff]
    %v688 = vld [vmem:[#allocation5 + $0xd28] sm:$0xff]
    %v689 = vld [vmem:[#allocation5 + $0xd30] sm:$0xff]
    %v690 = vld [vmem:[#allocation5 + $0xd38] sm:$0xff]
    %v691 = vld [vmem:[#allocation5 + $0xd40] sm:$0xff]
    %v692 = vld [vmem:[#allocation5 + $0xd48] sm:$0xff]
    %v693 = vld [vmem:[#allocation5 + $0xd50] sm:$0xff]
    %v694 = vld [vmem:[#allocation5 + $0xd58] sm:$0xff]
    %v695 = vld [vmem:[#allocation5 + $0xd60] sm:$0xff]
    %v696 = vld [vmem:[#allocation5 + $0xd68] sm:$0xff]
    %v697 = vld [vmem:[#allocation5 + $0xd70] sm:$0xff]
    %v698 = vld [vmem:[#allocation5 + $0xd78] sm:$0xff]
    %v699 = vld [vmem:[#allocation5 + $0xd80] sm:$0xff]
    %v700 = vld [vmem:[#allocation5 + $0xd88] sm:$0xff]
    %v701 = vld [vmem:[#allocation5 + $0xd90] sm:$0xff]
    %v702 = vld [vmem:[#allocation5 + $0xd98] sm:$0xff]
    %v703 = vld [vmem:[#allocation5 + $0xda0] sm:$0xff]
    %v704 = vld [vmem:[#allocation5 + $0xda8] sm:$0xff]
    %v705 = vld [vmem:[#allocation5 + $0xdb0] sm:$0xff]
    %v706 = vld [vmem:[#allocation5 + $0xdb8] sm:$0xff]
    %v707 = vld [vmem:[#allocation5 + $0xdc0] sm:$0xff]
    %v708 = vld [vmem:[#allocation5 + $0xdc8] sm:$0xff]
    %v709 = vld [vmem:[#allocation5 + $0xdd0] sm:$0xff]
    %v710 = vld [vmem:[#allocation5 + $0xdd8] sm:$0xff]
    %v711 = vld [vmem:[#allocation5 + $0xde0] sm:$0xff]
    %v712 = vld [vmem:[#allocation5 + $0xde8] sm:$0xff]
    %v713 = vld [vmem:[#allocation5 + $0xdf0] sm:$0xff]
    %v714 = vld [vmem:[#allocation5 + $0xdf8] sm:$0xff]
    %v715 = vld [vmem:[#allocation5 + $0xe00] sm:$0xff]
    %v716 = vld [vmem:[#allocation5 + $0xe08] sm:$0xff]
    %v717 = vld [vmem:[#allocation5 + $0xe10] sm:$0xff]
    %v718 = vld [vmem:[#allocation5 + $0xe18] sm:$0xff]
    %v719 = vld [vmem:[#allocation5 + $0xe20] sm:$0xff]
    %v720 = vld [vmem:[#allocation5 + $0xe28] sm:$0xff]
    %v721 = vld [vmem:[#allocation5 + $0xe30] sm:$0xff]
    %v722 = vld [vmem:[#allocation5 + $0xe38] sm:$0xff]
    %v723 = vld [vmem:[#allocation5 + $0xe40] sm:$0xff]
    %v724 = vld [vmem:[#allocation5 + $0xe48] sm:$0xff]
    %v725 = vld [vmem:[#allocation5 + $0xe50] sm:$0xff]
    %v726 = vld [vmem:[#allocation5 + $0xe58] sm:$0xff]
    %v727 = vld [vmem:[#allocation5 + $0xe60] sm:$0xff]
    %v728 = vld [vmem:[#allocation5 + $0xe68] sm:$0xff]
    %v729 = vld [vmem:[#allocation5 + $0xe70] sm:$0xff]
    %v730 = vld [vmem:[#allocation5 + $0xe78] sm:$0xff]
    %v731 = vld [vmem:[#allocation5 + $0xe80] sm:$0xff]
    %v732 = vld [vmem:[#allocation5 + $0xe88] sm:$0xff]
    %v733 = vld [vmem:[#allocation5 + $0xe90] sm:$0xff]
    %v734 = vld [vmem:[#allocation5 + $0xe98] sm:$0xff]
    %v735 = vld [vmem:[#allocation5 + $0xea0] sm:$0xff]
    %v736 = vld [vmem:[#allocation5 + $0xea8] sm:$0xff]
    %v737 = vld [vmem:[#allocation5 + $0xeb0] sm:$0xff]
    %v738 = vld [vmem:[#allocation5 + $0xeb8] sm:$0xff]
    %v739 = vld [vmem:[#allocation5 + $0xec0] sm:$0xff]
    %v740 = vld [vmem:[#allocation5 + $0xec8] sm:$0xff]
    %v741 = vld [vmem:[#allocation5 + $0xed0] sm:$0xff]
    %v742 = vld [vmem:[#allocation5 + $0xed8] sm:$0xff]
    %v743 = vld [vmem:[#allocation5 + $0xee0] sm:$0xff]
    %v744 = vld [vmem:[#allocation5 + $0xee8] sm:$0xff]
    %v745 = vld [vmem:[#allocation5 + $0xef0] sm:$0xff]
    %v746 = vld [vmem:[#allocation5 + $0xef8] sm:$0xff]
    %v747 = vld [vmem:[#allocation5 + $0xf00] sm:$0xff]
    %v748 = vld [vmem:[#allocation5 + $0xf08] sm:$0xff]
    %v749 = vld [vmem:[#allocation5 + $0xf10] sm:$0xff]
    %v750 = vld [vmem:[#allocation5 + $0xf18] sm:$0xff]
    %v751 = vld [vmem:[#allocation5 + $0xf20] sm:$0xff]
    %v752 = vld [vmem:[#allocation5 + $0xf28] sm:$0xff]
    %v753 = vld [vmem:[#allocation5 + $0xf30] sm:$0xff]
    %v754 = vld [vmem:[#allocation5 + $0xf38] sm:$0xff]
    %v755 = vld [vmem:[#allocation5 + $0xf40] sm:$0xff]
    %v756 = vld [vmem:[#allocation5 + $0xf48] sm:$0xff]
    %v757 = vld [vmem:[#allocation5 + $0xf50] sm:$0xff]
    %v758 = vld [vmem:[#allocation5 + $0xf58] sm:$0xff]
    %v759 = vld [vmem:[#allocation5 + $0xf60] sm:$0xff]
    %v760 = vld [vmem:[#allocation5 + $0xf68] sm:$0xff]
    %v761 = vld [vmem:[#allocation5 + $0xf70] sm:$0xff]
    %v762 = vld [vmem:[#allocation5 + $0xf78] sm:$0xff]
    %v763 = vld [vmem:[#allocation5 + $0xf80] sm:$0xff]
    %v764 = vld [vmem:[#allocation5 + $0xf88] sm:$0xff]
    %v765 = vld [vmem:[#allocation5 + $0xf90] sm:$0xff]
    %v766 = vld [vmem:[#allocation5 + $0xf98] sm:$0xff]
    %v767 = vld [vmem:[#allocation5 + $0xfa0] sm:$0xff]
    %v768 = vld [vmem:[#allocation5 + $0xfa8] sm:$0xff]
    %v769 = vld [vmem:[#allocation5 + $0xfb0] sm:$0xff]
    %v770 = vld [vmem:[#allocation5 + $0xfb8] sm:$0xff]
    %v771 = vld [vmem:[#allocation5 + $0xfc0] sm:$0xff]
    %v772 = vld [vmem:[#allocation5 + $0xfc8] sm:$0xff]
    %v773 = vld [vmem:[#allocation5 + $0xfd0] sm:$0xff]
    %v774 = vld [vmem:[#allocation5 + $0xfd8] sm:$0xff]
    %v775 = vld [vmem:[#allocation5 + $0xfe0] sm:$0xff]
    %v776 = vld [vmem:[#allocation5 + $0xfe8] sm:$0xff]
    %v777 = vld [vmem:[#allocation5 + $0xff0] sm:$0xff]
    %v778 = vld [vmem:[#allocation5 + $0xff8] sm:$0xff]
    %v779 = vld [vmem:[#allocation5 + $0x1000] sm:$0xff]
    %v780 = vld [vmem:[#allocation5 + $0x1008] sm:$0xff]
    %v781 = vld [vmem:[#allocation5 + $0x1010] sm:$0xff]
    %v782 = vld [vmem:[#allocation5 + $0x1018] sm:$0xff]
    %v783 = vld [vmem:[#allocation5 + $0x1020] sm:$0xff]
    %v784 = vld [vmem:[#allocation5 + $0x1028] sm:$0xff]
    %v785 = vld [vmem:[#allocation5 + $0x1030] sm:$0xff]
    %v786 = vld [vmem:[#allocation5 + $0x1038] sm:$0xff]
    %v787 = vld [vmem:[#allocation5 + $0x1040] sm:$0xff]
    %v788 = vld [vmem:[#allocation5 + $0x1048] sm:$0xff]
    %v789 = vld [vmem:[#allocation5 + $0x1050] sm:$0xff]
    %v790 = vld [vmem:[#allocation5 + $0x1058] sm:$0xff]
    %v791 = vld [vmem:[#allocation5 + $0x1060] sm:$0xff]
    %v792 = vld [vmem:[#allocation5 + $0x1068] sm:$0xff]
    %v793 = vld [vmem:[#allocation5 + $0x1070] sm:$0xff]
    %v794 = vld [vmem:[#allocation5 + $0x1078] sm:$0xff]
    %v795 = vld [vmem:[#allocation5 + $0x1080] sm:$0xff]
    %v796 = vld [vmem:[#allocation5 + $0x1088] sm:$0xff]
    %v797 = vld [vmem:[#allocation5 + $0x1090] sm:$0xff]
    %v798 = vld [vmem:[#allocation5 + $0x1098] sm:$0xff]
    %v799 = vld [vmem:[#allocation5 + $0x10a0] sm:$0xff]
    %v800 = vld [vmem:[#allocation5 + $0x10a8] sm:$0xff]
    %v801 = vld [vmem:[#allocation5 + $0x10b0] sm:$0xff]
    %v802 = vld [vmem:[#allocation5 + $0x10b8] sm:$0xff]
    %v803 = vld [vmem:[#allocation5 + $0x10c0] sm:$0xff]
    %v804 = vld [vmem:[#allocation5 + $0x10c8] sm:$0xff]
    %v805 = vld [vmem:[#allocation5 + $0x10d0] sm:$0xff]
    %v806 = vld [vmem:[#allocation5 + $0x10d8] sm:$0xff]
    %v807 = vld [vmem:[#allocation5 + $0x10e0] sm:$0xff]
    %v808 = vld [vmem:[#allocation5 + $0x10e8] sm:$0xff]
    %v809 = vld [vmem:[#allocation5 + $0x10f0] sm:$0xff]
    %v810 = vld [vmem:[#allocation5 + $0x10f8] sm:$0xff]
    %v811 = vld [vmem:[#allocation5 + $0x1100] sm:$0xff]
    %v812 = vld [vmem:[#allocation5 + $0x1108] sm:$0xff]
    %v813 = vld [vmem:[#allocation5 + $0x1110] sm:$0xff]
    %v814 = vld [vmem:[#allocation5 + $0x1118] sm:$0xff]
    %v815 = vld [vmem:[#allocation5 + $0x1120] sm:$0xff]
    %v816 = vld [vmem:[#allocation5 + $0x1128] sm:$0xff]
    %v817 = vld [vmem:[#allocation5 + $0x1130] sm:$0xff]
    %v818 = vld [vmem:[#allocation5 + $0x1138] sm:$0xff]
    %v819 = vld [vmem:[#allocation5 + $0x1140] sm:$0xff]
    %v820 = vld [vmem:[#allocation5 + $0x1148] sm:$0xff]
    %v821 = vld [vmem:[#allocation5 + $0x1150] sm:$0xff]
    %v822 = vld [vmem:[#allocation5 + $0x1158] sm:$0xff]
    %v823 = vld [vmem:[#allocation5 + $0x1160] sm:$0xff]
    %v824 = vld [vmem:[#allocation5 + $0x1168] sm:$0xff]
    %v825 = vld [vmem:[#allocation5 + $0x1170] sm:$0xff]
    %v826 = vld [vmem:[#allocation5 + $0x1178] sm:$0xff]
    %v827 = vld [vmem:[#allocation5 + $0x1180] sm:$0xff]
    %v828 = vld [vmem:[#allocation5 + $0x1188] sm:$0xff]
    %v829 = vld [vmem:[#allocation5 + $0x1190] sm:$0xff]
    %v830 = vld [vmem:[#allocation5 + $0x1198] sm:$0xff]
    %v831 = vld [vmem:[#allocation5 + $0x11a0] sm:$0xff]
    %v832 = vld [vmem:[#allocation5 + $0x11a8] sm:$0xff]
    %v833 = vld [vmem:[#allocation5 + $0x11b0] sm:$0xff]
    %v834 = vld [vmem:[#allocation5 + $0x11b8] sm:$0xff]
    %v835 = vld [vmem:[#allocation5 + $0x11c0] sm:$0xff]
    %v836 = vld [vmem:[#allocation5 + $0x11c8] sm:$0xff]
    %v837 = vld [vmem:[#allocation5 + $0x11d0] sm:$0xff]
    %v838 = vld [vmem:[#allocation5 + $0x11d8] sm:$0xff]
    %v839 = vld [vmem:[#allocation5 + $0x11e0] sm:$0xff]
    %v840 = vld [vmem:[#allocation5 + $0x11e8] sm:$0xff]
    %v841 = vld [vmem:[#allocation5 + $0x11f0] sm:$0xff]
    %v842 = vld [vmem:[#allocation5 + $0x11f8] sm:$0xff]
    %v843 = vld [vmem:[#allocation5 + $0x1200] sm:$0xff]
    %v844 = vld [vmem:[#allocation5 + $0x1208] sm:$0xff]
    %v845 = vld [vmem:[#allocation5 + $0x1210] sm:$0xff]
    %v846 = vld [vmem:[#allocation5 + $0x1218] sm:$0xff]
    %v847 = vld [vmem:[#allocation5 + $0x1220] sm:$0xff]
    %v848 = vld [vmem:[#allocation5 + $0x1228] sm:$0xff]
    %v849 = vld [vmem:[#allocation5 + $0x1230] sm:$0xff]
    %v850 = vld [vmem:[#allocation5 + $0x1238] sm:$0xff]
    %v851 = vld [vmem:[#allocation5 + $0x1240] sm:$0xff]
    %v852 = vld [vmem:[#allocation5 + $0x1248] sm:$0xff]
    %v853 = vld [vmem:[#allocation5 + $0x1250] sm:$0xff]
    %v854 = vld [vmem:[#allocation5 + $0x1258] sm:$0xff]
    %v855 = vld [vmem:[#allocation5 + $0x1260] sm:$0xff]
    %v856 = vld [vmem:[#allocation5 + $0x1268] sm:$0xff]
    %v857 = vld [vmem:[#allocation5 + $0x1270] sm:$0xff]
    %v858 = vld [vmem:[#allocation5 + $0x1278] sm:$0xff]
    %v859 = vld [vmem:[#allocation5 + $0x1280] sm:$0xff]
    %v860 = vld [vmem:[#allocation5 + $0x1288] sm:$0xff]
    %v861 = vld [vmem:[#allocation5 + $0x1290] sm:$0xff]
    %v862 = vld [vmem:[#allocation5 + $0x1298] sm:$0xff]
    %v863 = vld [vmem:[#allocation5 + $0x12a0] sm:$0xff]
    %v864 = vld [vmem:[#allocation5 + $0x12a8] sm:$0xff]
    %v865 = vld [vmem:[#allocation5 + $0x12b0] sm:$0xff]
    %v866 = vld [vmem:[#allocation5 + $0x12b8] sm:$0xff]
    %v867 = vld [vmem:[#allocation5 + $0x12c0] sm:$0xff]
    %v868 = vld [vmem:[#allocation5 + $0x12c8] sm:$0xff]
    %v869 = vld [vmem:[#allocation5 + $0x12d0] sm:$0xff]
    %v870 = vld [vmem:[#allocation5 + $0x12d8] sm:$0xff]
    %v871 = vld [vmem:[#allocation5 + $0x12e0] sm:$0xff]
    %v872 = vld [vmem:[#allocation5 + $0x12e8] sm:$0xff]
    %v873 = vld [vmem:[#allocation5 + $0x12f0] sm:$0xff]
    %v874 = vld [vmem:[#allocation5 + $0x12f8] sm:$0xff]
    %v875 = vld [vmem:[#allocation5 + $0x1300] sm:$0xff]
    %v876 = vld [vmem:[#allocation5 + $0x1308] sm:$0xff]
    %v877 = vld [vmem:[#allocation5 + $0x1310] sm:$0xff]
    %v878 = vld [vmem:[#allocation5 + $0x1318] sm:$0xff]
    %v879 = vld [vmem:[#allocation5 + $0x1320] sm:$0xff]
    %v880 = vld [vmem:[#allocation5 + $0x1328] sm:$0xff]
    %v881 = vld [vmem:[#allocation5 + $0x1330] sm:$0xff]
    %v882 = vld [vmem:[#allocation5 + $0x1338] sm:$0xff]
    %v883 = vld [vmem:[#allocation5 + $0x1340] sm:$0xff]
    %v884 = vld [vmem:[#allocation5 + $0x1348] sm:$0xff]
    %v885 = vld [vmem:[#allocation5 + $0x1350] sm:$0xff]
    %v886 = vld [vmem:[#allocation5 + $0x1358] sm:$0xff]
    %v887 = vld [vmem:[#allocation5 + $0x1360] sm:$0xff]
    %v888 = vld [vmem:[#allocation5 + $0x1368] sm:$0xff]
    %v889 = vld [vmem:[#allocation5 + $0x1370] sm:$0xff]
    %v890 = vld [vmem:[#allocation5 + $0x1378] sm:$0xff]
    %v891 = vld [vmem:[#allocation5 + $0x1380] sm:$0xff]
    %v892 = vld [vmem:[#allocation5 + $0x1388] sm:$0xff]
    %v893 = vld [vmem:[#allocation5 + $0x1390] sm:$0xff]
    %v894 = vld [vmem:[#allocation5 + $0x1398] sm:$0xff]
    %v895 = vld [vmem:[#allocation5 + $0x13a0] sm:$0xff]
    %v896 = vld [vmem:[#allocation5 + $0x13a8] sm:$0xff]
    %v897 = vld [vmem:[#allocation5 + $0x13b0] sm:$0xff]
    %v898 = vld [vmem:[#allocation5 + $0x13b8] sm:$0xff]
    %v899 = vld [vmem:[#allocation5 + $0x13c0] sm:$0xff]
    %v900 = vld [vmem:[#allocation5 + $0x13c8] sm:$0xff]
    %v901 = vld [vmem:[#allocation5 + $0x13d0] sm:$0xff]
    %v902 = vld [vmem:[#allocation5 + $0x13d8] sm:$0xff]
    %v903 = vld [vmem:[#allocation5 + $0x13e0] sm:$0xff]
    %v904 = vld [vmem:[#allocation5 + $0x13e8] sm:$0xff]
    %v905 = vld [vmem:[#allocation5 + $0x13f0] sm:$0xff]
    %v906 = vld [vmem:[#allocation5 + $0x13f8] sm:$0xff]
    %v907 = vld [vmem:[#allocation7] sm:$0x3]
    %v1548 = vunpack.c.l.b16 %v267
    %v1549 = vunpack.c.h.b16 %v267
    %v1550 = vunpack.c.l.b16 %v268
    %v1551 = vunpack.c.h.b16 %v268
    %v1552 = vunpack.c.l.b16 %v269
    %v1553 = vunpack.c.h.b16 %v269
    %v1554 = vunpack.c.l.b16 %v270
    %v1555 = vunpack.c.h.b16 %v270
    %v1556 = vunpack.c.l.b16 %v271
    %v1557 = vunpack.c.h.b16 %v271
    %v1558 = vunpack.c.l.b16 %v272
    %v1559 = vunpack.c.h.b16 %v272
    %v1560 = vunpack.c.l.b16 %v273
    %v1561 = vunpack.c.h.b16 %v273
    %v1562 = vunpack.c.l.b16 %v274
    %v1563 = vunpack.c.h.b16 %v274
    %v1564 = vunpack.c.l.b16 %v275
    %v1565 = vunpack.c.h.b16 %v275
    %v1566 = vunpack.c.l.b16 %v276
    %v1567 = vunpack.c.h.b16 %v276
    %v1568 = vunpack.c.l.b16 %v277
    %v1569 = vunpack.c.h.b16 %v277
    %v1570 = vunpack.c.l.b16 %v278
    %v1571 = vunpack.c.h.b16 %v278
    %v1572 = vunpack.c.l.b16 %v279
    %v1573 = vunpack.c.h.b16 %v279
    %v1574 = vunpack.c.l.b16 %v280
    %v1575 = vunpack.c.h.b16 %v280
    %v1576 = vunpack.c.l.b16 %v281
    %v1577 = vunpack.c.h.b16 %v281
    %v1578 = vunpack.c.l.b16 %v282
    %v1579 = vunpack.c.h.b16 %v282
    %v1580 = vunpack.c.l.b16 %v283
    %v1581 = vunpack.c.h.b16 %v283
    %v1582 = vunpack.c.l.b16 %v284
    %v1583 = vunpack.c.h.b16 %v284
    %v1584 = vunpack.c.l.b16 %v285
    %v1585 = vunpack.c.h.b16 %v285
    %v1586 = vunpack.c.l.b16 %v286
    %v1587 = vunpack.c.h.b16 %v286
    %v1588 = vunpack.c.l.b16 %v287
    %v1589 = vunpack.c.h.b16 %v287
    %v1590 = vunpack.c.l.b16 %v288
    %v1591 = vunpack.c.h.b16 %v288
    %v1592 = vunpack.c.l.b16 %v289
    %v1593 = vunpack.c.h.b16 %v289
    %v1594 = vunpack.c.l.b16 %v290
    %v1595 = vunpack.c.h.b16 %v290
    %v1596 = vunpack.c.l.b16 %v291
    %v1597 = vunpack.c.h.b16 %v291
    %v1598 = vunpack.c.l.b16 %v292
    %v1599 = vunpack.c.h.b16 %v292
    %v1600 = vunpack.c.l.b16 %v293
    %v1601 = vunpack.c.h.b16 %v293
    %v1602 = vunpack.c.l.b16 %v294
    %v1603 = vunpack.c.h.b16 %v294
    %v1604 = vunpack.c.l.b16 %v295
    %v1605 = vunpack.c.h.b16 %v295
    %v1606 = vunpack.c.l.b16 %v296
    %v1607 = vunpack.c.h.b16 %v296
    %v1608 = vunpack.c.l.b16 %v297
    %v1609 = vunpack.c.h.b16 %v297
    %v1610 = vunpack.c.l.b16 %v298
    %v1611 = vunpack.c.h.b16 %v298
    %v1612 = vunpack.c.l.b16 %v299
    %v1613 = vunpack.c.h.b16 %v299
    %v1614 = vunpack.c.l.b16 %v300
    %v1615 = vunpack.c.h.b16 %v300
    %v1616 = vunpack.c.l.b16 %v301
    %v1617 = vunpack.c.h.b16 %v301
    %v1618 = vunpack.c.l.b16 %v302
    %v1619 = vunpack.c.h.b16 %v302
    %v1620 = vunpack.c.l.b16 %v303
    %v1621 = vunpack.c.h.b16 %v303
    %v1622 = vunpack.c.l.b16 %v304
    %v1623 = vunpack.c.h.b16 %v304
    %v1624 = vunpack.c.l.b16 %v305
    %v1625 = vunpack.c.h.b16 %v305
    %v1626 = vunpack.c.l.b16 %v306
    %v1627 = vunpack.c.h.b16 %v306
    %v1628 = vunpack.c.l.b16 %v307
    %v1629 = vunpack.c.h.b16 %v307
    %v1630 = vunpack.c.l.b16 %v308
    %v1631 = vunpack.c.h.b16 %v308
    %v1632 = vunpack.c.l.b16 %v309
    %v1633 = vunpack.c.h.b16 %v309
    %v1634 = vunpack.c.l.b16 %v310
    %v1635 = vunpack.c.h.b16 %v310
    %v1636 = vunpack.c.l.b16 %v311
    %v1637 = vunpack.c.h.b16 %v311
    %v1638 = vunpack.c.l.b16 %v312
    %v1639 = vunpack.c.h.b16 %v312
    %v1640 = vunpack.c.l.b16 %v313
    %v1641 = vunpack.c.h.b16 %v313
    %v1642 = vunpack.c.l.b16 %v314
    %v1643 = vunpack.c.h.b16 %v314
    %v1644 = vunpack.c.l.b16 %v315
    %v1645 = vunpack.c.h.b16 %v315
    %v1646 = vunpack.c.l.b16 %v316
    %v1647 = vunpack.c.h.b16 %v316
    %v1648 = vunpack.c.l.b16 %v317
    %v1649 = vunpack.c.h.b16 %v317
    %v1650 = vunpack.c.l.b16 %v318
    %v1651 = vunpack.c.h.b16 %v318
    %v1652 = vunpack.c.l.b16 %v319
    %v1653 = vunpack.c.h.b16 %v319
    %v1654 = vunpack.c.l.b16 %v320
    %v1655 = vunpack.c.h.b16 %v320
    %v1656 = vunpack.c.l.b16 %v321
    %v1657 = vunpack.c.h.b16 %v321
    %v1658 = vunpack.c.l.b16 %v322
    %v1659 = vunpack.c.h.b16 %v322
    %v1660 = vunpack.c.l.b16 %v323
    %v1661 = vunpack.c.h.b16 %v323
    %v1662 = vunpack.c.l.b16 %v324
    %v1663 = vunpack.c.h.b16 %v324
    %v1664 = vunpack.c.l.b16 %v325
    %v1665 = vunpack.c.h.b16 %v325
    %v1666 = vunpack.c.l.b16 %v326
    %v1667 = vunpack.c.h.b16 %v326
    %v1668 = vunpack.c.l.b16 %v327
    %v1669 = vunpack.c.h.b16 %v327
    %v1670 = vunpack.c.l.b16 %v328
    %v1671 = vunpack.c.h.b16 %v328
    %v1672 = vunpack.c.l.b16 %v329
    %v1673 = vunpack.c.h.b16 %v329
    %v1674 = vunpack.c.l.b16 %v330
    %v1675 = vunpack.c.h.b16 %v330
    %v1676 = vunpack.c.l.b16 %v331
    %v1677 = vunpack.c.h.b16 %v331
    %v1678 = vunpack.c.l.b16 %v332
    %v1679 = vunpack.c.h.b16 %v332
    %v1680 = vunpack.c.l.b16 %v333
    %v1681 = vunpack.c.h.b16 %v333
    %v1682 = vunpack.c.l.b16 %v334
    %v1683 = vunpack.c.h.b16 %v334
    %v1684 = vunpack.c.l.b16 %v335
    %v1685 = vunpack.c.h.b16 %v335
    %v1686 = vunpack.c.l.b16 %v336
    %v1687 = vunpack.c.h.b16 %v336
    %v1688 = vunpack.c.l.b16 %v337
    %v1689 = vunpack.c.h.b16 %v337
    %v1690 = vunpack.c.l.b16 %v338
    %v1691 = vunpack.c.h.b16 %v338
    %v1692 = vunpack.c.l.b16 %v339
    %v1693 = vunpack.c.h.b16 %v339
    %v1694 = vunpack.c.l.b16 %v340
    %v1695 = vunpack.c.h.b16 %v340
    %v1696 = vunpack.c.l.b16 %v341
    %v1697 = vunpack.c.h.b16 %v341
    %v1698 = vunpack.c.l.b16 %v342
    %v1699 = vunpack.c.h.b16 %v342
    %v1700 = vunpack.c.l.b16 %v343
    %v1701 = vunpack.c.h.b16 %v343
    %v1702 = vunpack.c.l.b16 %v344
    %v1703 = vunpack.c.h.b16 %v344
    %v1704 = vunpack.c.l.b16 %v345
    %v1705 = vunpack.c.h.b16 %v345
    %v1706 = vunpack.c.l.b16 %v346
    %v1707 = vunpack.c.h.b16 %v346
    %v1708 = vunpack.c.l.b16 %v347
    %v1709 = vunpack.c.h.b16 %v347
    %v1710 = vunpack.c.l.b16 %v348
    %v1711 = vunpack.c.h.b16 %v348
    %v1712 = vunpack.c.l.b16 %v349
    %v1713 = vunpack.c.h.b16 %v349
    %v1714 = vunpack.c.l.b16 %v350
    %v1715 = vunpack.c.h.b16 %v350
    %v1716 = vunpack.c.l.b16 %v351
    %v1717 = vunpack.c.h.b16 %v351
    %v1718 = vunpack.c.l.b16 %v352
    %v1719 = vunpack.c.h.b16 %v352
    %v1720 = vunpack.c.l.b16 %v353
    %v1721 = vunpack.c.h.b16 %v353
    %v1722 = vunpack.c.l.b16 %v354
    %v1723 = vunpack.c.h.b16 %v354
    %v1724 = vunpack.c.l.b16 %v355
    %v1725 = vunpack.c.h.b16 %v355
    %v1726 = vunpack.c.l.b16 %v356
    %v1727 = vunpack.c.h.b16 %v356
    %v1728 = vunpack.c.l.b16 %v357
    %v1729 = vunpack.c.h.b16 %v357
    %v1730 = vunpack.c.l.b16 %v358
    %v1731 = vunpack.c.h.b16 %v358
    %v1732 = vunpack.c.l.b16 %v359
    %v1733 = vunpack.c.h.b16 %v359
    %v1734 = vunpack.c.l.b16 %v360
    %v1735 = vunpack.c.h.b16 %v360
    %v1736 = vunpack.c.l.b16 %v361
    %v1737 = vunpack.c.h.b16 %v361
    %v1738 = vunpack.c.l.b16 %v362
    %v1739 = vunpack.c.h.b16 %v362
    %v1740 = vunpack.c.l.b16 %v363
    %v1741 = vunpack.c.h.b16 %v363
    %v1742 = vunpack.c.l.b16 %v364
    %v1743 = vunpack.c.h.b16 %v364
    %v1744 = vunpack.c.l.b16 %v365
    %v1745 = vunpack.c.h.b16 %v365
    %v1746 = vunpack.c.l.b16 %v366
    %v1747 = vunpack.c.h.b16 %v366
    %v1748 = vunpack.c.l.b16 %v367
    %v1749 = vunpack.c.h.b16 %v367
    %v1750 = vunpack.c.l.b16 %v368
    %v1751 = vunpack.c.h.b16 %v368
    %v1752 = vunpack.c.l.b16 %v369
    %v1753 = vunpack.c.h.b16 %v369
    %v1754 = vunpack.c.l.b16 %v370
    %v1755 = vunpack.c.h.b16 %v370
    %v1756 = vunpack.c.l.b16 %v371
    %v1757 = vunpack.c.h.b16 %v371
    %v1758 = vunpack.c.l.b16 %v372
    %v1759 = vunpack.c.h.b16 %v372
    %v1760 = vunpack.c.l.b16 %v373
    %v1761 = vunpack.c.h.b16 %v373
    %v1762 = vunpack.c.l.b16 %v374
    %v1763 = vunpack.c.h.b16 %v374
    %v1764 = vunpack.c.l.b16 %v375
    %v1765 = vunpack.c.h.b16 %v375
    %v1766 = vunpack.c.l.b16 %v376
    %v1767 = vunpack.c.h.b16 %v376
    %v1768 = vunpack.c.l.b16 %v377
    %v1769 = vunpack.c.h.b16 %v377
    %v1770 = vunpack.c.l.b16 %v378
    %v1771 = vunpack.c.h.b16 %v378
    %v1772 = vunpack.c.l.b16 %v379
    %v1773 = vunpack.c.h.b16 %v379
    %v1774 = vunpack.c.l.b16 %v380
    %v1775 = vunpack.c.h.b16 %v380
    %v1776 = vunpack.c.l.b16 %v381
    %v1777 = vunpack.c.h.b16 %v381
    %v1778 = vunpack.c.l.b16 %v382
    %v1779 = vunpack.c.h.b16 %v382
    %v1780 = vunpack.c.l.b16 %v383
    %v1781 = vunpack.c.h.b16 %v383
    %v1782 = vunpack.c.l.b16 %v384
    %v1783 = vunpack.c.h.b16 %v384
    %v1784 = vunpack.c.l.b16 %v385
    %v1785 = vunpack.c.h.b16 %v385
    %v1786 = vunpack.c.l.b16 %v386
    %v1787 = vunpack.c.h.b16 %v386
    %v1788 = vunpack.c.l.b16 %v387
    %v1789 = vunpack.c.h.b16 %v387
    %v1790 = vunpack.c.l.b16 %v388
    %v1791 = vunpack.c.h.b16 %v388
    %v1792 = vunpack.c.l.b16 %v389
    %v1793 = vunpack.c.h.b16 %v389
    %v1794 = vunpack.c.l.b16 %v390
    %v1795 = vunpack.c.h.b16 %v390
    %v1796 = vunpack.c.l.b16 %v391
    %v1797 = vunpack.c.h.b16 %v391
    %v1798 = vunpack.c.l.b16 %v392
    %v1799 = vunpack.c.h.b16 %v392
    %v1800 = vunpack.c.l.b16 %v393
    %v1801 = vunpack.c.h.b16 %v393
    %v1802 = vunpack.c.l.b16 %v394
    %v1803 = vunpack.c.h.b16 %v394
    %v1804 = vunpack.c.l.b16 %v395
    %v1805 = vunpack.c.h.b16 %v395
    %v1806 = vunpack.c.l.b16 %v396
    %v1807 = vunpack.c.h.b16 %v396
    %v1808 = vunpack.c.l.b16 %v397
    %v1809 = vunpack.c.h.b16 %v397
    %v1810 = vunpack.c.l.b16 %v398
    %v1811 = vunpack.c.h.b16 %v398
    %v1812 = vunpack.c.l.b16 %v399
    %v1813 = vunpack.c.h.b16 %v399
    %v1814 = vunpack.c.l.b16 %v400
    %v1815 = vunpack.c.h.b16 %v400
    %v1816 = vunpack.c.l.b16 %v401
    %v1817 = vunpack.c.h.b16 %v401
    %v1818 = vunpack.c.l.b16 %v402
    %v1819 = vunpack.c.h.b16 %v402
    %v1820 = vunpack.c.l.b16 %v403
    %v1821 = vunpack.c.h.b16 %v403
    %v1822 = vunpack.c.l.b16 %v404
    %v1823 = vunpack.c.h.b16 %v404
    %v1824 = vunpack.c.l.b16 %v405
    %v1825 = vunpack.c.h.b16 %v405
    %v1826 = vunpack.c.l.b16 %v406
    %v1827 = vunpack.c.h.b16 %v406
    %v1828 = vunpack.c.l.b16 %v407
    %v1829 = vunpack.c.h.b16 %v407
    %v1830 = vunpack.c.l.b16 %v408
    %v1831 = vunpack.c.h.b16 %v408
    %v1832 = vunpack.c.l.b16 %v409
    %v1833 = vunpack.c.h.b16 %v409
    %v1834 = vunpack.c.l.b16 %v410
    %v1835 = vunpack.c.h.b16 %v410
    %v1836 = vunpack.c.l.b16 %v411
    %v1837 = vunpack.c.h.b16 %v411
    %v1838 = vunpack.c.l.b16 %v412
    %v1839 = vunpack.c.h.b16 %v412
    %v1840 = vunpack.c.l.b16 %v413
    %v1841 = vunpack.c.h.b16 %v413
    %v1842 = vunpack.c.l.b16 %v414
    %v1843 = vunpack.c.h.b16 %v414
    %v1844 = vunpack.c.l.b16 %v415
    %v1845 = vunpack.c.h.b16 %v415
    %v1846 = vunpack.c.l.b16 %v416
    %v1847 = vunpack.c.h.b16 %v416
    %v1848 = vunpack.c.l.b16 %v417
    %v1849 = vunpack.c.h.b16 %v417
    %v1850 = vunpack.c.l.b16 %v418
    %v1851 = vunpack.c.h.b16 %v418
    %v1852 = vunpack.c.l.b16 %v419
    %v1853 = vunpack.c.h.b16 %v419
    %v1854 = vunpack.c.l.b16 %v420
    %v1855 = vunpack.c.h.b16 %v420
    %v1856 = vunpack.c.l.b16 %v421
    %v1857 = vunpack.c.h.b16 %v421
    %v1858 = vunpack.c.l.b16 %v422
    %v1859 = vunpack.c.h.b16 %v422
    %v1860 = vunpack.c.l.b16 %v423
    %v1861 = vunpack.c.h.b16 %v423
    %v1862 = vunpack.c.l.b16 %v424
    %v1863 = vunpack.c.h.b16 %v424
    %v1864 = vunpack.c.l.b16 %v425
    %v1865 = vunpack.c.h.b16 %v425
    %v1866 = vunpack.c.l.b16 %v426
    %v1867 = vunpack.c.h.b16 %v426
    %v1868 = vunpack.c.l.b16 %v427
    %v1869 = vunpack.c.h.b16 %v427
    %v1870 = vunpack.c.l.b16 %v428
    %v1871 = vunpack.c.h.b16 %v428
    %v1872 = vunpack.c.l.b16 %v429
    %v1873 = vunpack.c.h.b16 %v429
    %v1874 = vunpack.c.l.b16 %v430
    %v1875 = vunpack.c.h.b16 %v430
    %v1876 = vunpack.c.l.b16 %v431
    %v1877 = vunpack.c.h.b16 %v431
    %v1878 = vunpack.c.l.b16 %v432
    %v1879 = vunpack.c.h.b16 %v432
    %v1880 = vunpack.c.l.b16 %v433
    %v1881 = vunpack.c.h.b16 %v433
    %v1882 = vunpack.c.l.b16 %v434
    %v1883 = vunpack.c.h.b16 %v434
    %v1884 = vunpack.c.l.b16 %v435
    %v1885 = vunpack.c.h.b16 %v435
    %v1886 = vunpack.c.l.b16 %v436
    %v1887 = vunpack.c.h.b16 %v436
    %v1888 = vunpack.c.l.b16 %v437
    %v1889 = vunpack.c.h.b16 %v437
    %v1890 = vunpack.c.l.b16 %v438
    %v1891 = vunpack.c.h.b16 %v438
    %v1892 = vunpack.c.l.b16 %v439
    %v1893 = vunpack.c.h.b16 %v439
    %v1894 = vunpack.c.l.b16 %v440
    %v1895 = vunpack.c.h.b16 %v440
    %v1896 = vunpack.c.l.b16 %v441
    %v1897 = vunpack.c.h.b16 %v441
    %v1898 = vunpack.c.l.b16 %v442
    %v1899 = vunpack.c.h.b16 %v442
    %v1900 = vunpack.c.l.b16 %v443
    %v1901 = vunpack.c.h.b16 %v443
    %v1902 = vunpack.c.l.b16 %v444
    %v1903 = vunpack.c.h.b16 %v444
    %v1904 = vunpack.c.l.b16 %v445
    %v1905 = vunpack.c.h.b16 %v445
    %v1906 = vunpack.c.l.b16 %v446
    %v1907 = vunpack.c.h.b16 %v446
    %v1908 = vunpack.c.l.b16 %v447
    %v1909 = vunpack.c.h.b16 %v447
    %v1910 = vunpack.c.l.b16 %v448
    %v1911 = vunpack.c.h.b16 %v448
    %v1912 = vunpack.c.l.b16 %v449
    %v1913 = vunpack.c.h.b16 %v449
    %v1914 = vunpack.c.l.b16 %v450
    %v1915 = vunpack.c.h.b16 %v450
    %v1916 = vunpack.c.l.b16 %v451
    %v1917 = vunpack.c.h.b16 %v451
    %v1918 = vunpack.c.l.b16 %v452
    %v1919 = vunpack.c.h.b16 %v452
    %v1920 = vunpack.c.l.b16 %v453
    %v1921 = vunpack.c.h.b16 %v453
    %v1922 = vunpack.c.l.b16 %v454
    %v1923 = vunpack.c.h.b16 %v454
    %v1924 = vunpack.c.l.b16 %v455
    %v1925 = vunpack.c.h.b16 %v455
    %v1926 = vunpack.c.l.b16 %v456
    %v1927 = vunpack.c.h.b16 %v456
    %v1928 = vunpack.c.l.b16 %v457
    %v1929 = vunpack.c.h.b16 %v457
    %v1930 = vunpack.c.l.b16 %v458
    %v1931 = vunpack.c.h.b16 %v458
    %v1932 = vunpack.c.l.b16 %v459
    %v1933 = vunpack.c.h.b16 %v459
    %v1934 = vunpack.c.l.b16 %v460
    %v1935 = vunpack.c.h.b16 %v460
    %v1936 = vunpack.c.l.b16 %v461
    %v1937 = vunpack.c.h.b16 %v461
    %v1938 = vunpack.c.l.b16 %v462
    %v1939 = vunpack.c.h.b16 %v462
    %v1940 = vunpack.c.l.b16 %v463
    %v1941 = vunpack.c.h.b16 %v463
    %v1942 = vunpack.c.l.b16 %v464
    %v1943 = vunpack.c.h.b16 %v464
    %v1944 = vunpack.c.l.b16 %v465
    %v1945 = vunpack.c.h.b16 %v465
    %v1946 = vunpack.c.l.b16 %v466
    %v1947 = vunpack.c.h.b16 %v466
    %v1948 = vunpack.c.l.b16 %v467
    %v1949 = vunpack.c.h.b16 %v467
    %v1950 = vunpack.c.l.b16 %v468
    %v1951 = vunpack.c.h.b16 %v468
    %v1952 = vunpack.c.l.b16 %v469
    %v1953 = vunpack.c.h.b16 %v469
    %v1954 = vunpack.c.l.b16 %v470
    %v1955 = vunpack.c.h.b16 %v470
    %v1956 = vunpack.c.l.b16 %v471
    %v1957 = vunpack.c.h.b16 %v471
    %v1958 = vunpack.c.l.b16 %v472
    %v1959 = vunpack.c.h.b16 %v472
    %v1960 = vunpack.c.l.b16 %v473
    %v1961 = vunpack.c.h.b16 %v473
    %v1962 = vunpack.c.l.b16 %v474
    %v1963 = vunpack.c.h.b16 %v474
    %v1964 = vunpack.c.l.b16 %v475
    %v1965 = vunpack.c.h.b16 %v475
    %v1966 = vunpack.c.l.b16 %v476
    %v1967 = vunpack.c.h.b16 %v476
    %v1968 = vunpack.c.l.b16 %v477
    %v1969 = vunpack.c.h.b16 %v477
    %v1970 = vunpack.c.l.b16 %v478
    %v1971 = vunpack.c.h.b16 %v478
    %v1972 = vunpack.c.l.b16 %v479
    %v1973 = vunpack.c.h.b16 %v479
    %v1974 = vunpack.c.l.b16 %v480
    %v1975 = vunpack.c.h.b16 %v480
    %v1976 = vunpack.c.l.b16 %v481
    %v1977 = vunpack.c.h.b16 %v481
    %v1978 = vunpack.c.l.b16 %v482
    %v1979 = vunpack.c.h.b16 %v482
    %v1980 = vunpack.c.l.b16 %v483
    %v1981 = vunpack.c.h.b16 %v483
    %v1982 = vunpack.c.l.b16 %v484
    %v1983 = vunpack.c.h.b16 %v484
    %v1984 = vunpack.c.l.b16 %v485
    %v1985 = vunpack.c.h.b16 %v485
    %v1986 = vunpack.c.l.b16 %v486
    %v1987 = vunpack.c.h.b16 %v486
    %v1988 = vunpack.c.l.b16 %v487
    %v1989 = vunpack.c.h.b16 %v487
    %v1990 = vunpack.c.l.b16 %v488
    %v1991 = vunpack.c.h.b16 %v488
    %v1992 = vunpack.c.l.b16 %v489
    %v1993 = vunpack.c.h.b16 %v489
    %v1994 = vunpack.c.l.b16 %v490
    %v1995 = vunpack.c.h.b16 %v490
    %v1996 = vunpack.c.l.b16 %v491
    %v1997 = vunpack.c.h.b16 %v491
    %v1998 = vunpack.c.l.b16 %v492
    %v1999 = vunpack.c.h.b16 %v492
    %v2000 = vunpack.c.l.b16 %v493
    %v2001 = vunpack.c.h.b16 %v493
    %v2002 = vunpack.c.l.b16 %v494
    %v2003 = vunpack.c.h.b16 %v494
    %v2004 = vunpack.c.l.b16 %v495
    %v2005 = vunpack.c.h.b16 %v495
    %v2006 = vunpack.c.l.b16 %v496
    %v2007 = vunpack.c.h.b16 %v496
    %v2008 = vunpack.c.l.b16 %v497
    %v2009 = vunpack.c.h.b16 %v497
    %v2010 = vunpack.c.l.b16 %v498
    %v2011 = vunpack.c.h.b16 %v498
    %v2012 = vunpack.c.l.b16 %v499
    %v2013 = vunpack.c.h.b16 %v499
    %v2014 = vunpack.c.l.b16 %v500
    %v2015 = vunpack.c.h.b16 %v500
    %v2016 = vunpack.c.l.b16 %v501
    %v2017 = vunpack.c.h.b16 %v501
    %v2018 = vunpack.c.l.b16 %v502
    %v2019 = vunpack.c.h.b16 %v502
    %v2020 = vunpack.c.l.b16 %v503
    %v2021 = vunpack.c.h.b16 %v503
    %v2022 = vunpack.c.l.b16 %v504
    %v2023 = vunpack.c.h.b16 %v504
    %v2024 = vunpack.c.l.b16 %v505
    %v2025 = vunpack.c.h.b16 %v505
    %v2026 = vunpack.c.l.b16 %v506
    %v2027 = vunpack.c.h.b16 %v506
    %v2028 = vunpack.c.l.b16 %v507
    %v2029 = vunpack.c.h.b16 %v507
    %v2030 = vunpack.c.l.b16 %v508
    %v2031 = vunpack.c.h.b16 %v508
    %v2032 = vunpack.c.l.b16 %v509
    %v2033 = vunpack.c.h.b16 %v509
    %v2034 = vunpack.c.l.b16 %v510
    %v2035 = vunpack.c.h.b16 %v510
    %v2036 = vunpack.c.l.b16 %v511
    %v2037 = vunpack.c.h.b16 %v511
    %v2038 = vunpack.c.l.b16 %v512
    %v2039 = vunpack.c.h.b16 %v512
    %v2040 = vunpack.c.l.b16 %v513
    %v2041 = vunpack.c.h.b16 %v513
    %v2042 = vunpack.c.l.b16 %v514
    %v2043 = vunpack.c.h.b16 %v514
    %v2044 = vunpack.c.l.b16 %v515
    %v2045 = vunpack.c.h.b16 %v515
    %v2046 = vunpack.c.l.b16 %v516
    %v2047 = vunpack.c.h.b16 %v516
    %v2048 = vunpack.c.l.b16 %v517
    %v2049 = vunpack.c.h.b16 %v517
    %v2050 = vunpack.c.l.b16 %v518
    %v2051 = vunpack.c.h.b16 %v518
    %v2052 = vunpack.c.l.b16 %v519
    %v2053 = vunpack.c.h.b16 %v519
    %v2054 = vunpack.c.l.b16 %v520
    %v2055 = vunpack.c.h.b16 %v520
    %v2056 = vunpack.c.l.b16 %v521
    %v2057 = vunpack.c.h.b16 %v521
    %v2058 = vunpack.c.l.b16 %v522
    %v2059 = vunpack.c.h.b16 %v522
    %v2060 = vunpack.c.l.b16 %v523
    %v2061 = vunpack.c.h.b16 %v523
    %v2062 = vunpack.c.l.b16 %v524
    %v2063 = vunpack.c.h.b16 %v524
    %v2064 = vunpack.c.l.b16 %v525
    %v2065 = vunpack.c.h.b16 %v525
    %v2066 = vunpack.c.l.b16 %v526
    %v2067 = vunpack.c.h.b16 %v526
    %v2068 = vunpack.c.l.b16 %v527
    %v2069 = vunpack.c.h.b16 %v527
    %v2070 = vunpack.c.l.b16 %v528
    %v2071 = vunpack.c.h.b16 %v528
    %v2072 = vunpack.c.l.b16 %v529
    %v2073 = vunpack.c.h.b16 %v529
    %v2074 = vunpack.c.l.b16 %v530
    %v2075 = vunpack.c.h.b16 %v530
    %v2076 = vunpack.c.l.b16 %v531
    %v2077 = vunpack.c.h.b16 %v531
    %v2078 = vunpack.c.l.b16 %v532
    %v2079 = vunpack.c.h.b16 %v532
    %v2080 = vunpack.c.l.b16 %v533
    %v2081 = vunpack.c.h.b16 %v533
    %v2082 = vunpack.c.l.b16 %v534
    %v2083 = vunpack.c.h.b16 %v534
    %v2084 = vunpack.c.l.b16 %v535
    %v2085 = vunpack.c.h.b16 %v535
    %v2086 = vunpack.c.l.b16 %v536
    %v2087 = vunpack.c.h.b16 %v536
    %v2088 = vunpack.c.l.b16 %v537
    %v2089 = vunpack.c.h.b16 %v537
    %v2090 = vunpack.c.l.b16 %v538
    %v2091 = vunpack.c.h.b16 %v538
    %v2092 = vunpack.c.l.b16 %v539
    %v2093 = vunpack.c.h.b16 %v539
    %v2094 = vunpack.c.l.b16 %v540
    %v2095 = vunpack.c.h.b16 %v540
    %v2096 = vunpack.c.l.b16 %v541
    %v2097 = vunpack.c.h.b16 %v541
    %v2098 = vunpack.c.l.b16 %v542
    %v2099 = vunpack.c.h.b16 %v542
    %v2100 = vunpack.c.l.b16 %v543
    %v2101 = vunpack.c.h.b16 %v543
    %v2102 = vunpack.c.l.b16 %v544
    %v2103 = vunpack.c.h.b16 %v544
    %v2104 = vunpack.c.l.b16 %v545
    %v2105 = vunpack.c.h.b16 %v545
    %v2106 = vunpack.c.l.b16 %v546
    %v2107 = vunpack.c.h.b16 %v546
    %v2108 = vunpack.c.l.b16 %v547
    %v2109 = vunpack.c.h.b16 %v547
    %v2110 = vunpack.c.l.b16 %v548
    %v2111 = vunpack.c.h.b16 %v548
    %v2112 = vunpack.c.l.b16 %v549
    %v2113 = vunpack.c.h.b16 %v549
    %v2114 = vunpack.c.l.b16 %v550
    %v2115 = vunpack.c.h.b16 %v550
    %v2116 = vunpack.c.l.b16 %v551
    %v2117 = vunpack.c.h.b16 %v551
    %v2118 = vunpack.c.l.b16 %v552
    %v2119 = vunpack.c.h.b16 %v552
    %v2120 = vunpack.c.l.b16 %v553
    %v2121 = vunpack.c.h.b16 %v553
    %v2122 = vunpack.c.l.b16 %v554
    %v2123 = vunpack.c.h.b16 %v554
    %v2124 = vunpack.c.l.b16 %v555
    %v2125 = vunpack.c.h.b16 %v555
    %v2126 = vunpack.c.l.b16 %v556
    %v2127 = vunpack.c.h.b16 %v556
    %v2128 = vunpack.c.l.b16 %v557
    %v2129 = vunpack.c.h.b16 %v557
    %v2130 = vunpack.c.l.b16 %v558
    %v2131 = vunpack.c.h.b16 %v558
    %v2132 = vunpack.c.l.b16 %v559
    %v2133 = vunpack.c.h.b16 %v559
    %v2134 = vunpack.c.l.b16 %v560
    %v2135 = vunpack.c.h.b16 %v560
    %v2136 = vunpack.c.l.b16 %v561
    %v2137 = vunpack.c.h.b16 %v561
    %v2138 = vunpack.c.l.b16 %v562
    %v2139 = vunpack.c.h.b16 %v562
    %v2140 = vunpack.c.l.b16 %v563
    %v2141 = vunpack.c.h.b16 %v563
    %v2142 = vunpack.c.l.b16 %v564
    %v2143 = vunpack.c.h.b16 %v564
    %v2144 = vunpack.c.l.b16 %v565
    %v2145 = vunpack.c.h.b16 %v565
    %v2146 = vunpack.c.l.b16 %v566
    %v2147 = vunpack.c.h.b16 %v566
    %v2148 = vunpack.c.l.b16 %v567
    %v2149 = vunpack.c.h.b16 %v567
    %v2150 = vunpack.c.l.b16 %v568
    %v2151 = vunpack.c.h.b16 %v568
    %v2152 = vunpack.c.l.b16 %v569
    %v2153 = vunpack.c.h.b16 %v569
    %v2154 = vunpack.c.l.b16 %v570
    %v2155 = vunpack.c.h.b16 %v570
    %v2156 = vunpack.c.l.b16 %v571
    %v2157 = vunpack.c.h.b16 %v571
    %v2158 = vunpack.c.l.b16 %v572
    %v2159 = vunpack.c.h.b16 %v572
    %v2160 = vunpack.c.l.b16 %v573
    %v2161 = vunpack.c.h.b16 %v573
    %v2162 = vunpack.c.l.b16 %v574
    %v2163 = vunpack.c.h.b16 %v574
    %v2164 = vunpack.c.l.b16 %v575
    %v2165 = vunpack.c.h.b16 %v575
    %v2166 = vunpack.c.l.b16 %v576
    %v2167 = vunpack.c.h.b16 %v576
    %v2168 = vunpack.c.l.b16 %v577
    %v2169 = vunpack.c.h.b16 %v577
    %v2170 = vunpack.c.l.b16 %v578
    %v2171 = vunpack.c.h.b16 %v578
    %v2172 = vunpack.c.l.b16 %v579
    %v2173 = vunpack.c.h.b16 %v579
    %v2174 = vunpack.c.l.b16 %v580
    %v2175 = vunpack.c.h.b16 %v580
    %v2176 = vunpack.c.l.b16 %v581
    %v2177 = vunpack.c.h.b16 %v581
    %v2178 = vunpack.c.l.b16 %v582
    %v2179 = vunpack.c.h.b16 %v582
    %v2180 = vunpack.c.l.b16 %v583
    %v2181 = vunpack.c.h.b16 %v583
    %v2182 = vunpack.c.l.b16 %v584
    %v2183 = vunpack.c.h.b16 %v584
    %v2184 = vunpack.c.l.b16 %v585
    %v2185 = vunpack.c.h.b16 %v585
    %v2186 = vunpack.c.l.b16 %v586
    %v2187 = vunpack.c.h.b16 %v586
    %v2188 = vunpack.c.l.b16 %v587
    %v2189 = vunpack.c.h.b16 %v587
    %v2190 = vunpack.c.l.b16 %v588
    %v2191 = vunpack.c.h.b16 %v588
    %v2192 = vunpack.c.l.b16 %v589
    %v2193 = vunpack.c.h.b16 %v589
    %v2194 = vunpack.c.l.b16 %v590
    %v2195 = vunpack.c.h.b16 %v590
    %v2196 = vunpack.c.l.b16 %v591
    %v2197 = vunpack.c.h.b16 %v591
    %v2198 = vunpack.c.l.b16 %v592
    %v2199 = vunpack.c.h.b16 %v592
    %v2200 = vunpack.c.l.b16 %v593
    %v2201 = vunpack.c.h.b16 %v593
    %v2202 = vunpack.c.l.b16 %v594
    %v2203 = vunpack.c.h.b16 %v594
    %v2204 = vunpack.c.l.b16 %v595
    %v2205 = vunpack.c.h.b16 %v595
    %v2206 = vunpack.c.l.b16 %v596
    %v2207 = vunpack.c.h.b16 %v596
    %v2208 = vunpack.c.l.b16 %v597
    %v2209 = vunpack.c.h.b16 %v597
    %v2210 = vunpack.c.l.b16 %v598
    %v2211 = vunpack.c.h.b16 %v598
    %v2212 = vunpack.c.l.b16 %v599
    %v2213 = vunpack.c.h.b16 %v599
    %v2214 = vunpack.c.l.b16 %v600
    %v2215 = vunpack.c.h.b16 %v600
    %v2216 = vunpack.c.l.b16 %v601
    %v2217 = vunpack.c.h.b16 %v601
    %v2218 = vunpack.c.l.b16 %v602
    %v2219 = vunpack.c.h.b16 %v602
    %v2220 = vunpack.c.l.b16 %v603
    %v2221 = vunpack.c.h.b16 %v603
    %v2222 = vunpack.c.l.b16 %v604
    %v2223 = vunpack.c.h.b16 %v604
    %v2224 = vunpack.c.l.b16 %v605
    %v2225 = vunpack.c.h.b16 %v605
    %v2226 = vunpack.c.l.b16 %v606
    %v2227 = vunpack.c.h.b16 %v606
    %v2228 = vunpack.c.l.b16 %v607
    %v2229 = vunpack.c.h.b16 %v607
    %v2230 = vunpack.c.l.b16 %v608
    %v2231 = vunpack.c.h.b16 %v608
    %v2232 = vunpack.c.l.b16 %v609
    %v2233 = vunpack.c.h.b16 %v609
    %v2234 = vunpack.c.l.b16 %v610
    %v2235 = vunpack.c.h.b16 %v610
    %v2236 = vunpack.c.l.b16 %v611
    %v2237 = vunpack.c.h.b16 %v611
    %v2238 = vunpack.c.l.b16 %v612
    %v2239 = vunpack.c.h.b16 %v612
    %v2240 = vunpack.c.l.b16 %v613
    %v2241 = vunpack.c.h.b16 %v613
    %v2242 = vunpack.c.l.b16 %v614
    %v2243 = vunpack.c.h.b16 %v614
    %v2244 = vunpack.c.l.b16 %v615
    %v2245 = vunpack.c.h.b16 %v615
    %v2246 = vunpack.c.l.b16 %v616
    %v2247 = vunpack.c.h.b16 %v616
    %v2248 = vunpack.c.l.b16 %v617
    %v2249 = vunpack.c.h.b16 %v617
    %v2250 = vunpack.c.l.b16 %v618
    %v2251 = vunpack.c.h.b16 %v618
    %v2252 = vunpack.c.l.b16 %v619
    %v2253 = vunpack.c.h.b16 %v619
    %v2254 = vunpack.c.l.b16 %v620
    %v2255 = vunpack.c.h.b16 %v620
    %v2256 = vunpack.c.l.b16 %v621
    %v2257 = vunpack.c.h.b16 %v621
    %v2258 = vunpack.c.l.b16 %v622
    %v2259 = vunpack.c.h.b16 %v622
    %v2260 = vunpack.c.l.b16 %v623
    %v2261 = vunpack.c.h.b16 %v623
    %v2262 = vunpack.c.l.b16 %v624
    %v2263 = vunpack.c.h.b16 %v624
    %v2264 = vunpack.c.l.b16 %v625
    %v2265 = vunpack.c.h.b16 %v625
    %v2266 = vunpack.c.l.b16 %v626
    %v2267 = vunpack.c.h.b16 %v626
    %v2268 = vunpack.c.l.b16 %v627
    %v2269 = vunpack.c.h.b16 %v627
    %v2270 = vunpack.c.l.b16 %v628
    %v2271 = vunpack.c.h.b16 %v628
    %v2272 = vunpack.c.l.b16 %v629
    %v2273 = vunpack.c.h.b16 %v629
    %v2274 = vunpack.c.l.b16 %v630
    %v2275 = vunpack.c.h.b16 %v630
    %v2276 = vunpack.c.l.b16 %v631
    %v2277 = vunpack.c.h.b16 %v631
    %v2278 = vunpack.c.l.b16 %v632
    %v2279 = vunpack.c.h.b16 %v632
    %v2280 = vunpack.c.l.b16 %v633
    %v2281 = vunpack.c.h.b16 %v633
    %v2282 = vunpack.c.l.b16 %v634
    %v2283 = vunpack.c.h.b16 %v634
    %v2284 = vunpack.c.l.b16 %v635
    %v2285 = vunpack.c.h.b16 %v635
    %v2286 = vunpack.c.l.b16 %v636
    %v2287 = vunpack.c.h.b16 %v636
    %v2288 = vunpack.c.l.b16 %v637
    %v2289 = vunpack.c.h.b16 %v637
    %v2290 = vunpack.c.l.b16 %v638
    %v2291 = vunpack.c.h.b16 %v638
    %v2292 = vunpack.c.l.b16 %v639
    %v2293 = vunpack.c.h.b16 %v639
    %v2294 = vunpack.c.l.b16 %v640
    %v2295 = vunpack.c.h.b16 %v640
    %v2296 = vunpack.c.l.b16 %v641
    %v2297 = vunpack.c.h.b16 %v641
    %v2298 = vunpack.c.l.b16 %v642
    %v2299 = vunpack.c.h.b16 %v642
    %v2300 = vunpack.c.l.b16 %v643
    %v2301 = vunpack.c.h.b16 %v643
    %v2302 = vunpack.c.l.b16 %v644
    %v2303 = vunpack.c.h.b16 %v644
    %v2304 = vunpack.c.l.b16 %v645
    %v2305 = vunpack.c.h.b16 %v645
    %v2306 = vunpack.c.l.b16 %v646
    %v2307 = vunpack.c.h.b16 %v646
    %v2308 = vunpack.c.l.b16 %v647
    %v2309 = vunpack.c.h.b16 %v647
    %v2310 = vunpack.c.l.b16 %v648
    %v2311 = vunpack.c.h.b16 %v648
    %v2312 = vunpack.c.l.b16 %v649
    %v2313 = vunpack.c.h.b16 %v649
    %v2314 = vunpack.c.l.b16 %v650
    %v2315 = vunpack.c.h.b16 %v650
    %v2316 = vunpack.c.l.b16 %v651
    %v2317 = vunpack.c.h.b16 %v651
    %v2318 = vunpack.c.l.b16 %v652
    %v2319 = vunpack.c.h.b16 %v652
    %v2320 = vunpack.c.l.b16 %v653
    %v2321 = vunpack.c.h.b16 %v653
    %v2322 = vunpack.c.l.b16 %v654
    %v2323 = vunpack.c.h.b16 %v654
    %v2324 = vunpack.c.l.b16 %v655
    %v2325 = vunpack.c.h.b16 %v655
    %v2326 = vunpack.c.l.b16 %v656
    %v2327 = vunpack.c.h.b16 %v656
    %v2328 = vunpack.c.l.b16 %v657
    %v2329 = vunpack.c.h.b16 %v657
    %v2330 = vunpack.c.l.b16 %v658
    %v2331 = vunpack.c.h.b16 %v658
    %v2332 = vunpack.c.l.b16 %v659
    %v2333 = vunpack.c.h.b16 %v659
    %v2334 = vunpack.c.l.b16 %v660
    %v2335 = vunpack.c.h.b16 %v660
    %v2336 = vunpack.c.l.b16 %v661
    %v2337 = vunpack.c.h.b16 %v661
    %v2338 = vunpack.c.l.b16 %v662
    %v2339 = vunpack.c.h.b16 %v662
    %v2340 = vunpack.c.l.b16 %v663
    %v2341 = vunpack.c.h.b16 %v663
    %v2342 = vunpack.c.l.b16 %v664
    %v2343 = vunpack.c.h.b16 %v664
    %v2344 = vunpack.c.l.b16 %v665
    %v2345 = vunpack.c.h.b16 %v665
    %v2346 = vunpack.c.l.b16 %v666
    %v2347 = vunpack.c.h.b16 %v666
    %v2348 = vunpack.c.l.b16 %v667
    %v2349 = vunpack.c.h.b16 %v667
    %v2350 = vunpack.c.l.b16 %v668
    %v2351 = vunpack.c.h.b16 %v668
    %v2352 = vunpack.c.l.b16 %v669
    %v2353 = vunpack.c.h.b16 %v669
    %v2354 = vunpack.c.l.b16 %v670
    %v2355 = vunpack.c.h.b16 %v670
    %v2356 = vunpack.c.l.b16 %v671
    %v2357 = vunpack.c.h.b16 %v671
    %v2358 = vunpack.c.l.b16 %v672
    %v2359 = vunpack.c.h.b16 %v672
    %v2360 = vunpack.c.l.b16 %v673
    %v2361 = vunpack.c.h.b16 %v673
    %v2362 = vunpack.c.l.b16 %v674
    %v2363 = vunpack.c.h.b16 %v674
    %v2364 = vunpack.c.l.b16 %v675
    %v2365 = vunpack.c.h.b16 %v675
    %v2366 = vunpack.c.l.b16 %v676
    %v2367 = vunpack.c.h.b16 %v676
    %v2368 = vunpack.c.l.b16 %v677
    %v2369 = vunpack.c.h.b16 %v677
    %v2370 = vunpack.c.l.b16 %v678
    %v2371 = vunpack.c.h.b16 %v678
    %v2372 = vunpack.c.l.b16 %v679
    %v2373 = vunpack.c.h.b16 %v679
    %v2374 = vunpack.c.l.b16 %v680
    %v2375 = vunpack.c.h.b16 %v680
    %v2376 = vunpack.c.l.b16 %v681
    %v2377 = vunpack.c.h.b16 %v681
    %v2378 = vunpack.c.l.b16 %v682
    %v2379 = vunpack.c.h.b16 %v682
    %v2380 = vunpack.c.l.b16 %v683
    %v2381 = vunpack.c.h.b16 %v683
    %v2382 = vunpack.c.l.b16 %v684
    %v2383 = vunpack.c.h.b16 %v684
    %v2384 = vunpack.c.l.b16 %v685
    %v2385 = vunpack.c.h.b16 %v685
    %v2386 = vunpack.c.l.b16 %v686
    %v2387 = vunpack.c.h.b16 %v686
    %v2388 = vunpack.c.l.b16 %v687
    %v2389 = vunpack.c.h.b16 %v687
    %v2390 = vunpack.c.l.b16 %v688
    %v2391 = vunpack.c.h.b16 %v688
    %v2392 = vunpack.c.l.b16 %v689
    %v2393 = vunpack.c.h.b16 %v689
    %v2394 = vunpack.c.l.b16 %v690
    %v2395 = vunpack.c.h.b16 %v690
    %v2396 = vunpack.c.l.b16 %v691
    %v2397 = vunpack.c.h.b16 %v691
    %v2398 = vunpack.c.l.b16 %v692
    %v2399 = vunpack.c.h.b16 %v692
    %v2400 = vunpack.c.l.b16 %v693
    %v2401 = vunpack.c.h.b16 %v693
    %v2402 = vunpack.c.l.b16 %v694
    %v2403 = vunpack.c.h.b16 %v694
    %v2404 = vunpack.c.l.b16 %v695
    %v2405 = vunpack.c.h.b16 %v695
    %v2406 = vunpack.c.l.b16 %v696
    %v2407 = vunpack.c.h.b16 %v696
    %v2408 = vunpack.c.l.b16 %v697
    %v2409 = vunpack.c.h.b16 %v697
    %v2410 = vunpack.c.l.b16 %v698
    %v2411 = vunpack.c.h.b16 %v698
    %v2412 = vunpack.c.l.b16 %v699
    %v2413 = vunpack.c.h.b16 %v699
    %v2414 = vunpack.c.l.b16 %v700
    %v2415 = vunpack.c.h.b16 %v700
    %v2416 = vunpack.c.l.b16 %v701
    %v2417 = vunpack.c.h.b16 %v701
    %v2418 = vunpack.c.l.b16 %v702
    %v2419 = vunpack.c.h.b16 %v702
    %v2420 = vunpack.c.l.b16 %v703
    %v2421 = vunpack.c.h.b16 %v703
    %v2422 = vunpack.c.l.b16 %v704
    %v2423 = vunpack.c.h.b16 %v704
    %v2424 = vunpack.c.l.b16 %v705
    %v2425 = vunpack.c.h.b16 %v705
    %v2426 = vunpack.c.l.b16 %v706
    %v2427 = vunpack.c.h.b16 %v706
    %v2428 = vunpack.c.l.b16 %v707
    %v2429 = vunpack.c.h.b16 %v707
    %v2430 = vunpack.c.l.b16 %v708
    %v2431 = vunpack.c.h.b16 %v708
    %v2432 = vunpack.c.l.b16 %v709
    %v2433 = vunpack.c.h.b16 %v709
    %v2434 = vunpack.c.l.b16 %v710
    %v2435 = vunpack.c.h.b16 %v710
    %v2436 = vunpack.c.l.b16 %v711
    %v2437 = vunpack.c.h.b16 %v711
    %v2438 = vunpack.c.l.b16 %v712
    %v2439 = vunpack.c.h.b16 %v712
    %v2440 = vunpack.c.l.b16 %v713
    %v2441 = vunpack.c.h.b16 %v713
    %v2442 = vunpack.c.l.b16 %v714
    %v2443 = vunpack.c.h.b16 %v714
    %v2444 = vunpack.c.l.b16 %v715
    %v2445 = vunpack.c.h.b16 %v715
    %v2446 = vunpack.c.l.b16 %v716
    %v2447 = vunpack.c.h.b16 %v716
    %v2448 = vunpack.c.l.b16 %v717
    %v2449 = vunpack.c.h.b16 %v717
    %v2450 = vunpack.c.l.b16 %v718
    %v2451 = vunpack.c.h.b16 %v718
    %v2452 = vunpack.c.l.b16 %v719
    %v2453 = vunpack.c.h.b16 %v719
    %v2454 = vunpack.c.l.b16 %v720
    %v2455 = vunpack.c.h.b16 %v720
    %v2456 = vunpack.c.l.b16 %v721
    %v2457 = vunpack.c.h.b16 %v721
    %v2458 = vunpack.c.l.b16 %v722
    %v2459 = vunpack.c.h.b16 %v722
    %v2460 = vunpack.c.l.b16 %v723
    %v2461 = vunpack.c.h.b16 %v723
    %v2462 = vunpack.c.l.b16 %v724
    %v2463 = vunpack.c.h.b16 %v724
    %v2464 = vunpack.c.l.b16 %v725
    %v2465 = vunpack.c.h.b16 %v725
    %v2466 = vunpack.c.l.b16 %v726
    %v2467 = vunpack.c.h.b16 %v726
    %v2468 = vunpack.c.l.b16 %v727
    %v2469 = vunpack.c.h.b16 %v727
    %v2470 = vunpack.c.l.b16 %v728
    %v2471 = vunpack.c.h.b16 %v728
    %v2472 = vunpack.c.l.b16 %v729
    %v2473 = vunpack.c.h.b16 %v729
    %v2474 = vunpack.c.l.b16 %v730
    %v2475 = vunpack.c.h.b16 %v730
    %v2476 = vunpack.c.l.b16 %v731
    %v2477 = vunpack.c.h.b16 %v731
    %v2478 = vunpack.c.l.b16 %v732
    %v2479 = vunpack.c.h.b16 %v732
    %v2480 = vunpack.c.l.b16 %v733
    %v2481 = vunpack.c.h.b16 %v733
    %v2482 = vunpack.c.l.b16 %v734
    %v2483 = vunpack.c.h.b16 %v734
    %v2484 = vunpack.c.l.b16 %v735
    %v2485 = vunpack.c.h.b16 %v735
    %v2486 = vunpack.c.l.b16 %v736
    %v2487 = vunpack.c.h.b16 %v736
    %v2488 = vunpack.c.l.b16 %v737
    %v2489 = vunpack.c.h.b16 %v737
    %v2490 = vunpack.c.l.b16 %v738
    %v2491 = vunpack.c.h.b16 %v738
    %v2492 = vunpack.c.l.b16 %v739
    %v2493 = vunpack.c.h.b16 %v739
    %v2494 = vunpack.c.l.b16 %v740
    %v2495 = vunpack.c.h.b16 %v740
    %v2496 = vunpack.c.l.b16 %v741
    %v2497 = vunpack.c.h.b16 %v741
    %v2498 = vunpack.c.l.b16 %v742
    %v2499 = vunpack.c.h.b16 %v742
    %v2500 = vunpack.c.l.b16 %v743
    %v2501 = vunpack.c.h.b16 %v743
    %v2502 = vunpack.c.l.b16 %v744
    %v2503 = vunpack.c.h.b16 %v744
    %v2504 = vunpack.c.l.b16 %v745
    %v2505 = vunpack.c.h.b16 %v745
    %v2506 = vunpack.c.l.b16 %v746
    %v2507 = vunpack.c.h.b16 %v746
    %v2508 = vunpack.c.l.b16 %v747
    %v2509 = vunpack.c.h.b16 %v747
    %v2510 = vunpack.c.l.b16 %v748
    %v2511 = vunpack.c.h.b16 %v748
    %v2512 = vunpack.c.l.b16 %v749
    %v2513 = vunpack.c.h.b16 %v749
    %v2514 = vunpack.c.l.b16 %v750
    %v2515 = vunpack.c.h.b16 %v750
    %v2516 = vunpack.c.l.b16 %v751
    %v2517 = vunpack.c.h.b16 %v751
    %v2518 = vunpack.c.l.b16 %v752
    %v2519 = vunpack.c.h.b16 %v752
    %v2520 = vunpack.c.l.b16 %v753
    %v2521 = vunpack.c.h.b16 %v753
    %v2522 = vunpack.c.l.b16 %v754
    %v2523 = vunpack.c.h.b16 %v754
    %v2524 = vunpack.c.l.b16 %v755
    %v2525 = vunpack.c.h.b16 %v755
    %v2526 = vunpack.c.l.b16 %v756
    %v2527 = vunpack.c.h.b16 %v756
    %v2528 = vunpack.c.l.b16 %v757
    %v2529 = vunpack.c.h.b16 %v757
    %v2530 = vunpack.c.l.b16 %v758
    %v2531 = vunpack.c.h.b16 %v758
    %v2532 = vunpack.c.l.b16 %v759
    %v2533 = vunpack.c.h.b16 %v759
    %v2534 = vunpack.c.l.b16 %v760
    %v2535 = vunpack.c.h.b16 %v760
    %v2536 = vunpack.c.l.b16 %v761
    %v2537 = vunpack.c.h.b16 %v761
    %v2538 = vunpack.c.l.b16 %v762
    %v2539 = vunpack.c.h.b16 %v762
    %v2540 = vunpack.c.l.b16 %v763
    %v2541 = vunpack.c.h.b16 %v763
    %v2542 = vunpack.c.l.b16 %v764
    %v2543 = vunpack.c.h.b16 %v764
    %v2544 = vunpack.c.l.b16 %v765
    %v2545 = vunpack.c.h.b16 %v765
    %v2546 = vunpack.c.l.b16 %v766
    %v2547 = vunpack.c.h.b16 %v766
    %v2548 = vunpack.c.l.b16 %v767
    %v2549 = vunpack.c.h.b16 %v767
    %v2550 = vunpack.c.l.b16 %v768
    %v2551 = vunpack.c.h.b16 %v768
    %v2552 = vunpack.c.l.b16 %v769
    %v2553 = vunpack.c.h.b16 %v769
    %v2554 = vunpack.c.l.b16 %v770
    %v2555 = vunpack.c.h.b16 %v770
    %v2556 = vunpack.c.l.b16 %v771
    %v2557 = vunpack.c.h.b16 %v771
    %v2558 = vunpack.c.l.b16 %v772
    %v2559 = vunpack.c.h.b16 %v772
    %v2560 = vunpack.c.l.b16 %v773
    %v2561 = vunpack.c.h.b16 %v773
    %v2562 = vunpack.c.l.b16 %v774
    %v2563 = vunpack.c.h.b16 %v774
    %v2564 = vunpack.c.l.b16 %v775
    %v2565 = vunpack.c.h.b16 %v775
    %v2566 = vunpack.c.l.b16 %v776
    %v2567 = vunpack.c.h.b16 %v776
    %v2568 = vunpack.c.l.b16 %v777
    %v2569 = vunpack.c.h.b16 %v777
    %v2570 = vunpack.c.l.b16 %v778
    %v2571 = vunpack.c.h.b16 %v778
    %v2572 = vunpack.c.l.b16 %v779
    %v2573 = vunpack.c.h.b16 %v779
    %v2574 = vunpack.c.l.b16 %v780
    %v2575 = vunpack.c.h.b16 %v780
    %v2576 = vunpack.c.l.b16 %v781
    %v2577 = vunpack.c.h.b16 %v781
    %v2578 = vunpack.c.l.b16 %v782
    %v2579 = vunpack.c.h.b16 %v782
    %v2580 = vunpack.c.l.b16 %v783
    %v2581 = vunpack.c.h.b16 %v783
    %v2582 = vunpack.c.l.b16 %v784
    %v2583 = vunpack.c.h.b16 %v784
    %v2584 = vunpack.c.l.b16 %v785
    %v2585 = vunpack.c.h.b16 %v785
    %v2586 = vunpack.c.l.b16 %v786
    %v2587 = vunpack.c.h.b16 %v786
    %v2588 = vunpack.c.l.b16 %v787
    %v2589 = vunpack.c.h.b16 %v787
    %v2590 = vunpack.c.l.b16 %v788
    %v2591 = vunpack.c.h.b16 %v788
    %v2592 = vunpack.c.l.b16 %v789
    %v2593 = vunpack.c.h.b16 %v789
    %v2594 = vunpack.c.l.b16 %v790
    %v2595 = vunpack.c.h.b16 %v790
    %v2596 = vunpack.c.l.b16 %v791
    %v2597 = vunpack.c.h.b16 %v791
    %v2598 = vunpack.c.l.b16 %v792
    %v2599 = vunpack.c.h.b16 %v792
    %v2600 = vunpack.c.l.b16 %v793
    %v2601 = vunpack.c.h.b16 %v793
    %v2602 = vunpack.c.l.b16 %v794
    %v2603 = vunpack.c.h.b16 %v794
    %v2604 = vunpack.c.l.b16 %v795
    %v2605 = vunpack.c.h.b16 %v795
    %v2606 = vunpack.c.l.b16 %v796
    %v2607 = vunpack.c.h.b16 %v796
    %v2608 = vunpack.c.l.b16 %v797
    %v2609 = vunpack.c.h.b16 %v797
    %v2610 = vunpack.c.l.b16 %v798
    %v2611 = vunpack.c.h.b16 %v798
    %v2612 = vunpack.c.l.b16 %v799
    %v2613 = vunpack.c.h.b16 %v799
    %v2614 = vunpack.c.l.b16 %v800
    %v2615 = vunpack.c.h.b16 %v800
    %v2616 = vunpack.c.l.b16 %v801
    %v2617 = vunpack.c.h.b16 %v801
    %v2618 = vunpack.c.l.b16 %v802
    %v2619 = vunpack.c.h.b16 %v802
    %v2620 = vunpack.c.l.b16 %v803
    %v2621 = vunpack.c.h.b16 %v803
    %v2622 = vunpack.c.l.b16 %v804
    %v2623 = vunpack.c.h.b16 %v804
    %v2624 = vunpack.c.l.b16 %v805
    %v2625 = vunpack.c.h.b16 %v805
    %v2626 = vunpack.c.l.b16 %v806
    %v2627 = vunpack.c.h.b16 %v806
    %v2628 = vunpack.c.l.b16 %v807
    %v2629 = vunpack.c.h.b16 %v807
    %v2630 = vunpack.c.l.b16 %v808
    %v2631 = vunpack.c.h.b16 %v808
    %v2632 = vunpack.c.l.b16 %v809
    %v2633 = vunpack.c.h.b16 %v809
    %v2634 = vunpack.c.l.b16 %v810
    %v2635 = vunpack.c.h.b16 %v810
    %v2636 = vunpack.c.l.b16 %v811
    %v2637 = vunpack.c.h.b16 %v811
    %v2638 = vunpack.c.l.b16 %v812
    %v2639 = vunpack.c.h.b16 %v812
    %v2640 = vunpack.c.l.b16 %v813
    %v2641 = vunpack.c.h.b16 %v813
    %v2642 = vunpack.c.l.b16 %v814
    %v2643 = vunpack.c.h.b16 %v814
    %v2644 = vunpack.c.l.b16 %v815
    %v2645 = vunpack.c.h.b16 %v815
    %v2646 = vunpack.c.l.b16 %v816
    %v2647 = vunpack.c.h.b16 %v816
    %v2648 = vunpack.c.l.b16 %v817
    %v2649 = vunpack.c.h.b16 %v817
    %v2650 = vunpack.c.l.b16 %v818
    %v2651 = vunpack.c.h.b16 %v818
    %v2652 = vunpack.c.l.b16 %v819
    %v2653 = vunpack.c.h.b16 %v819
    %v2654 = vunpack.c.l.b16 %v820
    %v2655 = vunpack.c.h.b16 %v820
    %v2656 = vunpack.c.l.b16 %v821
    %v2657 = vunpack.c.h.b16 %v821
    %v2658 = vunpack.c.l.b16 %v822
    %v2659 = vunpack.c.h.b16 %v822
    %v2660 = vunpack.c.l.b16 %v823
    %v2661 = vunpack.c.h.b16 %v823
    %v2662 = vunpack.c.l.b16 %v824
    %v2663 = vunpack.c.h.b16 %v824
    %v2664 = vunpack.c.l.b16 %v825
    %v2665 = vunpack.c.h.b16 %v825
    %v2666 = vunpack.c.l.b16 %v826
    %v2667 = vunpack.c.h.b16 %v826
    %v2668 = vunpack.c.l.b16 %v827
    %v2669 = vunpack.c.h.b16 %v827
    %v2670 = vunpack.c.l.b16 %v828
    %v2671 = vunpack.c.h.b16 %v828
    %v2672 = vunpack.c.l.b16 %v829
    %v2673 = vunpack.c.h.b16 %v829
    %v2674 = vunpack.c.l.b16 %v830
    %v2675 = vunpack.c.h.b16 %v830
    %v2676 = vunpack.c.l.b16 %v831
    %v2677 = vunpack.c.h.b16 %v831
    %v2678 = vunpack.c.l.b16 %v832
    %v2679 = vunpack.c.h.b16 %v832
    %v2680 = vunpack.c.l.b16 %v833
    %v2681 = vunpack.c.h.b16 %v833
    %v2682 = vunpack.c.l.b16 %v834
    %v2683 = vunpack.c.h.b16 %v834
    %v2684 = vunpack.c.l.b16 %v835
    %v2685 = vunpack.c.h.b16 %v835
    %v2686 = vunpack.c.l.b16 %v836
    %v2687 = vunpack.c.h.b16 %v836
    %v2688 = vunpack.c.l.b16 %v837
    %v2689 = vunpack.c.h.b16 %v837
    %v2690 = vunpack.c.l.b16 %v838
    %v2691 = vunpack.c.h.b16 %v838
    %v2692 = vunpack.c.l.b16 %v839
    %v2693 = vunpack.c.h.b16 %v839
    %v2694 = vunpack.c.l.b16 %v840
    %v2695 = vunpack.c.h.b16 %v840
    %v2696 = vunpack.c.l.b16 %v841
    %v2697 = vunpack.c.h.b16 %v841
    %v2698 = vunpack.c.l.b16 %v842
    %v2699 = vunpack.c.h.b16 %v842
    %v2700 = vunpack.c.l.b16 %v843
    %v2701 = vunpack.c.h.b16 %v843
    %v2702 = vunpack.c.l.b16 %v844
    %v2703 = vunpack.c.h.b16 %v844
    %v2704 = vunpack.c.l.b16 %v845
    %v2705 = vunpack.c.h.b16 %v845
    %v2706 = vunpack.c.l.b16 %v846
    %v2707 = vunpack.c.h.b16 %v846
    %v2708 = vunpack.c.l.b16 %v847
    %v2709 = vunpack.c.h.b16 %v847
    %v2710 = vunpack.c.l.b16 %v848
    %v2711 = vunpack.c.h.b16 %v848
    %v2712 = vunpack.c.l.b16 %v849
    %v2713 = vunpack.c.h.b16 %v849
    %v2714 = vunpack.c.l.b16 %v850
    %v2715 = vunpack.c.h.b16 %v850
    %v2716 = vunpack.c.l.b16 %v851
    %v2717 = vunpack.c.h.b16 %v851
    %v2718 = vunpack.c.l.b16 %v852
    %v2719 = vunpack.c.h.b16 %v852
    %v2720 = vunpack.c.l.b16 %v853
    %v2721 = vunpack.c.h.b16 %v853
    %v2722 = vunpack.c.l.b16 %v854
    %v2723 = vunpack.c.h.b16 %v854
    %v2724 = vunpack.c.l.b16 %v855
    %v2725 = vunpack.c.h.b16 %v855
    %v2726 = vunpack.c.l.b16 %v856
    %v2727 = vunpack.c.h.b16 %v856
    %v2728 = vunpack.c.l.b16 %v857
    %v2729 = vunpack.c.h.b16 %v857
    %v2730 = vunpack.c.l.b16 %v858
    %v2731 = vunpack.c.h.b16 %v858
    %v2732 = vunpack.c.l.b16 %v859
    %v2733 = vunpack.c.h.b16 %v859
    %v2734 = vunpack.c.l.b16 %v860
    %v2735 = vunpack.c.h.b16 %v860
    %v2736 = vunpack.c.l.b16 %v861
    %v2737 = vunpack.c.h.b16 %v861
    %v2738 = vunpack.c.l.b16 %v862
    %v2739 = vunpack.c.h.b16 %v862
    %v2740 = vunpack.c.l.b16 %v863
    %v2741 = vunpack.c.h.b16 %v863
    %v2742 = vunpack.c.l.b16 %v864
    %v2743 = vunpack.c.h.b16 %v864
    %v2744 = vunpack.c.l.b16 %v865
    %v2745 = vunpack.c.h.b16 %v865
    %v2746 = vunpack.c.l.b16 %v866
    %v2747 = vunpack.c.h.b16 %v866
    %v2748 = vunpack.c.l.b16 %v867
    %v2749 = vunpack.c.h.b16 %v867
    %v2750 = vunpack.c.l.b16 %v868
    %v2751 = vunpack.c.h.b16 %v868
    %v2752 = vunpack.c.l.b16 %v869
    %v2753 = vunpack.c.h.b16 %v869
    %v2754 = vunpack.c.l.b16 %v870
    %v2755 = vunpack.c.h.b16 %v870
    %v2756 = vunpack.c.l.b16 %v871
    %v2757 = vunpack.c.h.b16 %v871
    %v2758 = vunpack.c.l.b16 %v872
    %v2759 = vunpack.c.h.b16 %v872
    %v2760 = vunpack.c.l.b16 %v873
    %v2761 = vunpack.c.h.b16 %v873
    %v2762 = vunpack.c.l.b16 %v874
    %v2763 = vunpack.c.h.b16 %v874
    %v2764 = vunpack.c.l.b16 %v875
    %v2765 = vunpack.c.h.b16 %v875
    %v2766 = vunpack.c.l.b16 %v876
    %v2767 = vunpack.c.h.b16 %v876
    %v2768 = vunpack.c.l.b16 %v877
    %v2769 = vunpack.c.h.b16 %v877
    %v2770 = vunpack.c.l.b16 %v878
    %v2771 = vunpack.c.h.b16 %v878
    %v2772 = vunpack.c.l.b16 %v879
    %v2773 = vunpack.c.h.b16 %v879
    %v2774 = vunpack.c.l.b16 %v880
    %v2775 = vunpack.c.h.b16 %v880
    %v2776 = vunpack.c.l.b16 %v881
    %v2777 = vunpack.c.h.b16 %v881
    %v2778 = vunpack.c.l.b16 %v882
    %v2779 = vunpack.c.h.b16 %v882
    %v2780 = vunpack.c.l.b16 %v883
    %v2781 = vunpack.c.h.b16 %v883
    %v2782 = vunpack.c.l.b16 %v884
    %v2783 = vunpack.c.h.b16 %v884
    %v2784 = vunpack.c.l.b16 %v885
    %v2785 = vunpack.c.h.b16 %v885
    %v2786 = vunpack.c.l.b16 %v886
    %v2787 = vunpack.c.h.b16 %v886
    %v2788 = vunpack.c.l.b16 %v887
    %v2789 = vunpack.c.h.b16 %v887
    %v2790 = vunpack.c.l.b16 %v888
    %v2791 = vunpack.c.h.b16 %v888
    %v2792 = vunpack.c.l.b16 %v889
    %v2793 = vunpack.c.h.b16 %v889
    %v2794 = vunpack.c.l.b16 %v890
    %v2795 = vunpack.c.h.b16 %v890
    %v2796 = vunpack.c.l.b16 %v891
    %v2797 = vunpack.c.h.b16 %v891
    %v2798 = vunpack.c.l.b16 %v892
    %v2799 = vunpack.c.h.b16 %v892
    %v2800 = vunpack.c.l.b16 %v893
    %v2801 = vunpack.c.h.b16 %v893
    %v2802 = vunpack.c.l.b16 %v894
    %v2803 = vunpack.c.h.b16 %v894
    %v2804 = vunpack.c.l.b16 %v895
    %v2805 = vunpack.c.h.b16 %v895
    %v2806 = vunpack.c.l.b16 %v896
    %v2807 = vunpack.c.h.b16 %v896
    %v2808 = vunpack.c.l.b16 %v897
    %v2809 = vunpack.c.h.b16 %v897
    %v2810 = vunpack.c.l.b16 %v898
    %v2811 = vunpack.c.h.b16 %v898
    %v2812 = vunpack.c.l.b16 %v899
    %v2813 = vunpack.c.h.b16 %v899
    %v2814 = vunpack.c.l.b16 %v900
    %v2815 = vunpack.c.h.b16 %v900
    %v2816 = vunpack.c.l.b16 %v901
    %v2817 = vunpack.c.h.b16 %v901
    %v2818 = vunpack.c.l.b16 %v902
    %v2819 = vunpack.c.h.b16 %v902
    %v2820 = vunpack.c.l.b16 %v903
    %v2821 = vunpack.c.h.b16 %v903
    %v2822 = vunpack.c.l.b16 %v904
    %v2823 = vunpack.c.h.b16 %v904
    %v2824 = vunpack.c.l.b16 %v905
    %v2825 = vunpack.c.h.b16 %v905
    %v2826 = vunpack.c.l.b16 %v906
    %v2827 = vunpack.c.h.b16 %v906
    %v2828 = vpack.c.b16 %v1612, %v1548
    %v2829 = vpack.c.b16 %v1613, %v1549
    %v2830 = vpack.c.b16 %v1614, %v1550
    %v2831 = vpack.c.b16 %v1615, %v1551
    %v2832 = vpack.c.b16 %v1616, %v1552
    %v2833 = vpack.c.b16 %v1617, %v1553
    %v2834 = vpack.c.b16 %v1618, %v1554
    %v2835 = vpack.c.b16 %v1619, %v1555
    %v2836 = vpack.c.b16 %v1620, %v1556
    %v2837 = vpack.c.b16 %v1621, %v1557
    %v2838 = vpack.c.b16 %v1622, %v1558
    %v2839 = vpack.c.b16 %v1623, %v1559
    %v2840 = vpack.c.b16 %v1624, %v1560
    %v2841 = vpack.c.b16 %v1625, %v1561
    %v2842 = vpack.c.b16 %v1626, %v1562
    %v2843 = vpack.c.b16 %v1627, %v1563
    %v2844 = vpack.c.b16 %v1628, %v1564
    %v2845 = vpack.c.b16 %v1629, %v1565
    %v2846 = vpack.c.b16 %v1630, %v1566
    %v2847 = vpack.c.b16 %v1631, %v1567
    %v2848 = vpack.c.b16 %v1632, %v1568
    %v2849 = vpack.c.b16 %v1633, %v1569
    %v2850 = vpack.c.b16 %v1634, %v1570
    %v2851 = vpack.c.b16 %v1635, %v1571
    %v2852 = vpack.c.b16 %v1636, %v1572
    %v2853 = vpack.c.b16 %v1637, %v1573
    %v2854 = vpack.c.b16 %v1638, %v1574
    %v2855 = vpack.c.b16 %v1639, %v1575
    %v2856 = vpack.c.b16 %v1640, %v1576
    %v2857 = vpack.c.b16 %v1641, %v1577
    %v2858 = vpack.c.b16 %v1642, %v1578
    %v2859 = vpack.c.b16 %v1643, %v1579
    %v2860 = vpack.c.b16 %v1644, %v1580
    %v2861 = vpack.c.b16 %v1645, %v1581
    %v2862 = vpack.c.b16 %v1646, %v1582
    %v2863 = vpack.c.b16 %v1647, %v1583
    %v2864 = vpack.c.b16 %v1648, %v1584
    %v2865 = vpack.c.b16 %v1649, %v1585
    %v2866 = vpack.c.b16 %v1650, %v1586
    %v2867 = vpack.c.b16 %v1651, %v1587
    %v2868 = vpack.c.b16 %v1652, %v1588
    %v2869 = vpack.c.b16 %v1653, %v1589
    %v2870 = vpack.c.b16 %v1654, %v1590
    %v2871 = vpack.c.b16 %v1655, %v1591
    %v2872 = vpack.c.b16 %v1656, %v1592
    %v2873 = vpack.c.b16 %v1657, %v1593
    %v2874 = vpack.c.b16 %v1658, %v1594
    %v2875 = vpack.c.b16 %v1659, %v1595
    %v2876 = vpack.c.b16 %v1660, %v1596
    %v2877 = vpack.c.b16 %v1661, %v1597
    %v2878 = vpack.c.b16 %v1662, %v1598
    %v2879 = vpack.c.b16 %v1663, %v1599
    %v2880 = vpack.c.b16 %v1664, %v1600
    %v2881 = vpack.c.b16 %v1665, %v1601
    %v2882 = vpack.c.b16 %v1666, %v1602
    %v2883 = vpack.c.b16 %v1667, %v1603
    %v2884 = vpack.c.b16 %v1668, %v1604
    %v2885 = vpack.c.b16 %v1669, %v1605
    %v2886 = vpack.c.b16 %v1670, %v1606
    %v2887 = vpack.c.b16 %v1671, %v1607
    %v2888 = vpack.c.b16 %v1672, %v1608
    %v2889 = vpack.c.b16 %v1673, %v1609
    %v2890 = vpack.c.b16 %v1674, %v1610
    %v2891 = vpack.c.b16 %v1675, %v1611
    %v2892 = vpack.c.b16 %v1740, %v1676
    %v2893 = vpack.c.b16 %v1741, %v1677
    %v2894 = vpack.c.b16 %v1742, %v1678
    %v2895 = vpack.c.b16 %v1743, %v1679
    %v2896 = vpack.c.b16 %v1744, %v1680
    %v2897 = vpack.c.b16 %v1745, %v1681
    %v2898 = vpack.c.b16 %v1746, %v1682
    %v2899 = vpack.c.b16 %v1747, %v1683
    %v2900 = vpack.c.b16 %v1748, %v1684
    %v2901 = vpack.c.b16 %v1749, %v1685
    %v2902 = vpack.c.b16 %v1750, %v1686
    %v2903 = vpack.c.b16 %v1751, %v1687
    %v2904 = vpack.c.b16 %v1752, %v1688
    %v2905 = vpack.c.b16 %v1753, %v1689
    %v2906 = vpack.c.b16 %v1754, %v1690
    %v2907 = vpack.c.b16 %v1755, %v1691
    %v2908 = vpack.c.b16 %v1756, %v1692
    %v2909 = vpack.c.b16 %v1757, %v1693
    %v2910 = vpack.c.b16 %v1758, %v1694
    %v2911 = vpack.c.b16 %v1759, %v1695
    %v2912 = vpack.c.b16 %v1760, %v1696
    %v2913 = vpack.c.b16 %v1761, %v1697
    %v2914 = vpack.c.b16 %v1762, %v1698
    %v2915 = vpack.c.b16 %v1763, %v1699
    %v2916 = vpack.c.b16 %v1764, %v1700
    %v2917 = vpack.c.b16 %v1765, %v1701
    %v2918 = vpack.c.b16 %v1766, %v1702
    %v2919 = vpack.c.b16 %v1767, %v1703
    %v2920 = vpack.c.b16 %v1768, %v1704
    %v2921 = vpack.c.b16 %v1769, %v1705
    %v2922 = vpack.c.b16 %v1770, %v1706
    %v2923 = vpack.c.b16 %v1771, %v1707
    %v2924 = vpack.c.b16 %v1772, %v1708
    %v2925 = vpack.c.b16 %v1773, %v1709
    %v2926 = vpack.c.b16 %v1774, %v1710
    %v2927 = vpack.c.b16 %v1775, %v1711
    %v2928 = vpack.c.b16 %v1776, %v1712
    %v2929 = vpack.c.b16 %v1777, %v1713
    %v2930 = vpack.c.b16 %v1778, %v1714
    %v2931 = vpack.c.b16 %v1779, %v1715
    %v2932 = vpack.c.b16 %v1780, %v1716
    %v2933 = vpack.c.b16 %v1781, %v1717
    %v2934 = vpack.c.b16 %v1782, %v1718
    %v2935 = vpack.c.b16 %v1783, %v1719
    %v2936 = vpack.c.b16 %v1784, %v1720
    %v2937 = vpack.c.b16 %v1785, %v1721
    %v2938 = vpack.c.b16 %v1786, %v1722
    %v2939 = vpack.c.b16 %v1787, %v1723
    %v2940 = vpack.c.b16 %v1788, %v1724
    %v2941 = vpack.c.b16 %v1789, %v1725
    %v2942 = vpack.c.b16 %v1790, %v1726
    %v2943 = vpack.c.b16 %v1791, %v1727
    %v2944 = vpack.c.b16 %v1792, %v1728
    %v2945 = vpack.c.b16 %v1793, %v1729
    %v2946 = vpack.c.b16 %v1794, %v1730
    %v2947 = vpack.c.b16 %v1795, %v1731
    %v2948 = vpack.c.b16 %v1796, %v1732
    %v2949 = vpack.c.b16 %v1797, %v1733
    %v2950 = vpack.c.b16 %v1798, %v1734
    %v2951 = vpack.c.b16 %v1799, %v1735
    %v2952 = vpack.c.b16 %v1800, %v1736
    %v2953 = vpack.c.b16 %v1801, %v1737
    %v2954 = vpack.c.b16 %v1802, %v1738
    %v2955 = vpack.c.b16 %v1803, %v1739
    %v2956 = vpack.c.b16 %v1868, %v1804
    %v2957 = vpack.c.b16 %v1869, %v1805
    %v2958 = vpack.c.b16 %v1870, %v1806
    %v2959 = vpack.c.b16 %v1871, %v1807
    %v2960 = vpack.c.b16 %v1872, %v1808
    %v2961 = vpack.c.b16 %v1873, %v1809
    %v2962 = vpack.c.b16 %v1874, %v1810
    %v2963 = vpack.c.b16 %v1875, %v1811
    %v2964 = vpack.c.b16 %v1876, %v1812
    %v2965 = vpack.c.b16 %v1877, %v1813
    %v2966 = vpack.c.b16 %v1878, %v1814
    %v2967 = vpack.c.b16 %v1879, %v1815
    %v2968 = vpack.c.b16 %v1880, %v1816
    %v2969 = vpack.c.b16 %v1881, %v1817
    %v2970 = vpack.c.b16 %v1882, %v1818
    %v2971 = vpack.c.b16 %v1883, %v1819
    %v2972 = vpack.c.b16 %v1884, %v1820
    %v2973 = vpack.c.b16 %v1885, %v1821
    %v2974 = vpack.c.b16 %v1886, %v1822
    %v2975 = vpack.c.b16 %v1887, %v1823
    %v2976 = vpack.c.b16 %v1888, %v1824
    %v2977 = vpack.c.b16 %v1889, %v1825
    %v2978 = vpack.c.b16 %v1890, %v1826
    %v2979 = vpack.c.b16 %v1891, %v1827
    %v2980 = vpack.c.b16 %v1892, %v1828
    %v2981 = vpack.c.b16 %v1893, %v1829
    %v2982 = vpack.c.b16 %v1894, %v1830
    %v2983 = vpack.c.b16 %v1895, %v1831
    %v2984 = vpack.c.b16 %v1896, %v1832
    %v2985 = vpack.c.b16 %v1897, %v1833
    %v2986 = vpack.c.b16 %v1898, %v1834
    %v2987 = vpack.c.b16 %v1899, %v1835
    %v2988 = vpack.c.b16 %v1900, %v1836
    %v2989 = vpack.c.b16 %v1901, %v1837
    %v2990 = vpack.c.b16 %v1902, %v1838
    %v2991 = vpack.c.b16 %v1903, %v1839
    %v2992 = vpack.c.b16 %v1904, %v1840
    %v2993 = vpack.c.b16 %v1905, %v1841
    %v2994 = vpack.c.b16 %v1906, %v1842
    %v2995 = vpack.c.b16 %v1907, %v1843
    %v2996 = vpack.c.b16 %v1908, %v1844
    %v2997 = vpack.c.b16 %v1909, %v1845
    %v2998 = vpack.c.b16 %v1910, %v1846
    %v2999 = vpack.c.b16 %v1911, %v1847
    %v3000 = vpack.c.b16 %v1912, %v1848
    %v3001 = vpack.c.b16 %v1913, %v1849
    %v3002 = vpack.c.b16 %v1914, %v1850
    %v3003 = vpack.c.b16 %v1915, %v1851
    %v3004 = vpack.c.b16 %v1916, %v1852
    %v3005 = vpack.c.b16 %v1917, %v1853
    %v3006 = vpack.c.b16 %v1918, %v1854
    %v3007 = vpack.c.b16 %v1919, %v1855
    %v3008 = vpack.c.b16 %v1920, %v1856
    %v3009 = vpack.c.b16 %v1921, %v1857
    %v3010 = vpack.c.b16 %v1922, %v1858
    %v3011 = vpack.c.b16 %v1923, %v1859
    %v3012 = vpack.c.b16 %v1924, %v1860
    %v3013 = vpack.c.b16 %v1925, %v1861
    %v3014 = vpack.c.b16 %v1926, %v1862
    %v3015 = vpack.c.b16 %v1927, %v1863
    %v3016 = vpack.c.b16 %v1928, %v1864
    %v3017 = vpack.c.b16 %v1929, %v1865
    %v3018 = vpack.c.b16 %v1930, %v1866
    %v3019 = vpack.c.b16 %v1931, %v1867
    %v3020 = vpack.c.b16 %v1996, %v1932
    %v3021 = vpack.c.b16 %v1997, %v1933
    %v3022 = vpack.c.b16 %v1998, %v1934
    %v3023 = vpack.c.b16 %v1999, %v1935
    %v3024 = vpack.c.b16 %v2000, %v1936
    %v3025 = vpack.c.b16 %v2001, %v1937
    %v3026 = vpack.c.b16 %v2002, %v1938
    %v3027 = vpack.c.b16 %v2003, %v1939
    %v3028 = vpack.c.b16 %v2004, %v1940
    %v3029 = vpack.c.b16 %v2005, %v1941
    %v3030 = vpack.c.b16 %v2006, %v1942
    %v3031 = vpack.c.b16 %v2007, %v1943
    %v3032 = vpack.c.b16 %v2008, %v1944
    %v3033 = vpack.c.b16 %v2009, %v1945
    %v3034 = vpack.c.b16 %v2010, %v1946
    %v3035 = vpack.c.b16 %v2011, %v1947
    %v3036 = vpack.c.b16 %v2012, %v1948
    %v3037 = vpack.c.b16 %v2013, %v1949
    %v3038 = vpack.c.b16 %v2014, %v1950
    %v3039 = vpack.c.b16 %v2015, %v1951
    %v3040 = vpack.c.b16 %v2016, %v1952
    %v3041 = vpack.c.b16 %v2017, %v1953
    %v3042 = vpack.c.b16 %v2018, %v1954
    %v3043 = vpack.c.b16 %v2019, %v1955
    %v3044 = vpack.c.b16 %v2020, %v1956
    %v3045 = vpack.c.b16 %v2021, %v1957
    %v3046 = vpack.c.b16 %v2022, %v1958
    %v3047 = vpack.c.b16 %v2023, %v1959
    %v3048 = vpack.c.b16 %v2024, %v1960
    %v3049 = vpack.c.b16 %v2025, %v1961
    %v3050 = vpack.c.b16 %v2026, %v1962
    %v3051 = vpack.c.b16 %v2027, %v1963
    %v3052 = vpack.c.b16 %v2028, %v1964
    %v3053 = vpack.c.b16 %v2029, %v1965
    %v3054 = vpack.c.b16 %v2030, %v1966
    %v3055 = vpack.c.b16 %v2031, %v1967
    %v3056 = vpack.c.b16 %v2032, %v1968
    %v3057 = vpack.c.b16 %v2033, %v1969
    %v3058 = vpack.c.b16 %v2034, %v1970
    %v3059 = vpack.c.b16 %v2035, %v1971
    %v3060 = vpack.c.b16 %v2036, %v1972
    %v3061 = vpack.c.b16 %v2037, %v1973
    %v3062 = vpack.c.b16 %v2038, %v1974
    %v3063 = vpack.c.b16 %v2039, %v1975
    %v3064 = vpack.c.b16 %v2040, %v1976
    %v3065 = vpack.c.b16 %v2041, %v1977
    %v3066 = vpack.c.b16 %v2042, %v1978
    %v3067 = vpack.c.b16 %v2043, %v1979
    %v3068 = vpack.c.b16 %v2044, %v1980
    %v3069 = vpack.c.b16 %v2045, %v1981
    %v3070 = vpack.c.b16 %v2046, %v1982
    %v3071 = vpack.c.b16 %v2047, %v1983
    %v3072 = vpack.c.b16 %v2048, %v1984
    %v3073 = vpack.c.b16 %v2049, %v1985
    %v3074 = vpack.c.b16 %v2050, %v1986
    %v3075 = vpack.c.b16 %v2051, %v1987
    %v3076 = vpack.c.b16 %v2052, %v1988
    %v3077 = vpack.c.b16 %v2053, %v1989
    %v3078 = vpack.c.b16 %v2054, %v1990
    %v3079 = vpack.c.b16 %v2055, %v1991
    %v3080 = vpack.c.b16 %v2056, %v1992
    %v3081 = vpack.c.b16 %v2057, %v1993
    %v3082 = vpack.c.b16 %v2058, %v1994
    %v3083 = vpack.c.b16 %v2059, %v1995
    %v3084 = vpack.c.b16 %v2124, %v2060
    %v3085 = vpack.c.b16 %v2125, %v2061
    %v3086 = vpack.c.b16 %v2126, %v2062
    %v3087 = vpack.c.b16 %v2127, %v2063
    %v3088 = vpack.c.b16 %v2128, %v2064
    %v3089 = vpack.c.b16 %v2129, %v2065
    %v3090 = vpack.c.b16 %v2130, %v2066
    %v3091 = vpack.c.b16 %v2131, %v2067
    %v3092 = vpack.c.b16 %v2132, %v2068
    %v3093 = vpack.c.b16 %v2133, %v2069
    %v3094 = vpack.c.b16 %v2134, %v2070
    %v3095 = vpack.c.b16 %v2135, %v2071
    %v3096 = vpack.c.b16 %v2136, %v2072
    %v3097 = vpack.c.b16 %v2137, %v2073
    %v3098 = vpack.c.b16 %v2138, %v2074
    %v3099 = vpack.c.b16 %v2139, %v2075
    %v3100 = vpack.c.b16 %v2140, %v2076
    %v3101 = vpack.c.b16 %v2141, %v2077
    %v3102 = vpack.c.b16 %v2142, %v2078
    %v3103 = vpack.c.b16 %v2143, %v2079
    %v3104 = vpack.c.b16 %v2144, %v2080
    %v3105 = vpack.c.b16 %v2145, %v2081
    %v3106 = vpack.c.b16 %v2146, %v2082
    %v3107 = vpack.c.b16 %v2147, %v2083
    %v3108 = vpack.c.b16 %v2148, %v2084
    %v3109 = vpack.c.b16 %v2149, %v2085
    %v3110 = vpack.c.b16 %v2150, %v2086
    %v3111 = vpack.c.b16 %v2151, %v2087
    %v3112 = vpack.c.b16 %v2152, %v2088
    %v3113 = vpack.c.b16 %v2153, %v2089
    %v3114 = vpack.c.b16 %v2154, %v2090
    %v3115 = vpack.c.b16 %v2155, %v2091
    %v3116 = vpack.c.b16 %v2156, %v2092
    %v3117 = vpack.c.b16 %v2157, %v2093
    %v3118 = vpack.c.b16 %v2158, %v2094
    %v3119 = vpack.c.b16 %v2159, %v2095
    %v3120 = vpack.c.b16 %v2160, %v2096
    %v3121 = vpack.c.b16 %v2161, %v2097
    %v3122 = vpack.c.b16 %v2162, %v2098
    %v3123 = vpack.c.b16 %v2163, %v2099
    %v3124 = vpack.c.b16 %v2164, %v2100
    %v3125 = vpack.c.b16 %v2165, %v2101
    %v3126 = vpack.c.b16 %v2166, %v2102
    %v3127 = vpack.c.b16 %v2167, %v2103
    %v3128 = vpack.c.b16 %v2168, %v2104
    %v3129 = vpack.c.b16 %v2169, %v2105
    %v3130 = vpack.c.b16 %v2170, %v2106
    %v3131 = vpack.c.b16 %v2171, %v2107
    %v3132 = vpack.c.b16 %v2172, %v2108
    %v3133 = vpack.c.b16 %v2173, %v2109
    %v3134 = vpack.c.b16 %v2174, %v2110
    %v3135 = vpack.c.b16 %v2175, %v2111
    %v3136 = vpack.c.b16 %v2176, %v2112
    %v3137 = vpack.c.b16 %v2177, %v2113
    %v3138 = vpack.c.b16 %v2178, %v2114
    %v3139 = vpack.c.b16 %v2179, %v2115
    %v3140 = vpack.c.b16 %v2180, %v2116
    %v3141 = vpack.c.b16 %v2181, %v2117
    %v3142 = vpack.c.b16 %v2182, %v2118
    %v3143 = vpack.c.b16 %v2183, %v2119
    %v3144 = vpack.c.b16 %v2184, %v2120
    %v3145 = vpack.c.b16 %v2185, %v2121
    %v3146 = vpack.c.b16 %v2186, %v2122
    %v3147 = vpack.c.b16 %v2187, %v2123
    %v3148 = vpack.c.b16 %v2252, %v2188
    %v3149 = vpack.c.b16 %v2253, %v2189
    %v3150 = vpack.c.b16 %v2254, %v2190
    %v3151 = vpack.c.b16 %v2255, %v2191
    %v3152 = vpack.c.b16 %v2256, %v2192
    %v3153 = vpack.c.b16 %v2257, %v2193
    %v3154 = vpack.c.b16 %v2258, %v2194
    %v3155 = vpack.c.b16 %v2259, %v2195
    %v3156 = vpack.c.b16 %v2260, %v2196
    %v3157 = vpack.c.b16 %v2261, %v2197
    %v3158 = vpack.c.b16 %v2262, %v2198
    %v3159 = vpack.c.b16 %v2263, %v2199
    %v3160 = vpack.c.b16 %v2264, %v2200
    %v3161 = vpack.c.b16 %v2265, %v2201
    %v3162 = vpack.c.b16 %v2266, %v2202
    %v3163 = vpack.c.b16 %v2267, %v2203
    %v3164 = vpack.c.b16 %v2268, %v2204
    %v3165 = vpack.c.b16 %v2269, %v2205
    %v3166 = vpack.c.b16 %v2270, %v2206
    %v3167 = vpack.c.b16 %v2271, %v2207
    %v3168 = vpack.c.b16 %v2272, %v2208
    %v3169 = vpack.c.b16 %v2273, %v2209
    %v3170 = vpack.c.b16 %v2274, %v2210
    %v3171 = vpack.c.b16 %v2275, %v2211
    %v3172 = vpack.c.b16 %v2276, %v2212
    %v3173 = vpack.c.b16 %v2277, %v2213
    %v3174 = vpack.c.b16 %v2278, %v2214
    %v3175 = vpack.c.b16 %v2279, %v2215
    %v3176 = vpack.c.b16 %v2280, %v2216
    %v3177 = vpack.c.b16 %v2281, %v2217
    %v3178 = vpack.c.b16 %v2282, %v2218
    %v3179 = vpack.c.b16 %v2283, %v2219
    %v3180 = vpack.c.b16 %v2284, %v2220
    %v3181 = vpack.c.b16 %v2285, %v2221
    %v3182 = vpack.c.b16 %v2286, %v2222
    %v3183 = vpack.c.b16 %v2287, %v2223
    %v3184 = vpack.c.b16 %v2288, %v2224
    %v3185 = vpack.c.b16 %v2289, %v2225
    %v3186 = vpack.c.b16 %v2290, %v2226
    %v3187 = vpack.c.b16 %v2291, %v2227
    %v3188 = vpack.c.b16 %v2292, %v2228
    %v3189 = vpack.c.b16 %v2293, %v2229
    %v3190 = vpack.c.b16 %v2294, %v2230
    %v3191 = vpack.c.b16 %v2295, %v2231
    %v3192 = vpack.c.b16 %v2296, %v2232
    %v3193 = vpack.c.b16 %v2297, %v2233
    %v3194 = vpack.c.b16 %v2298, %v2234
    %v3195 = vpack.c.b16 %v2299, %v2235
    %v3196 = vpack.c.b16 %v2300, %v2236
    %v3197 = vpack.c.b16 %v2301, %v2237
    %v3198 = vpack.c.b16 %v2302, %v2238
    %v3199 = vpack.c.b16 %v2303, %v2239
    %v3200 = vpack.c.b16 %v2304, %v2240
    %v3201 = vpack.c.b16 %v2305, %v2241
    %v3202 = vpack.c.b16 %v2306, %v2242
    %v3203 = vpack.c.b16 %v2307, %v2243
    %v3204 = vpack.c.b16 %v2308, %v2244
    %v3205 = vpack.c.b16 %v2309, %v2245
    %v3206 = vpack.c.b16 %v2310, %v2246
    %v3207 = vpack.c.b16 %v2311, %v2247
    %v3208 = vpack.c.b16 %v2312, %v2248
    %v3209 = vpack.c.b16 %v2313, %v2249
    %v3210 = vpack.c.b16 %v2314, %v2250
    %v3211 = vpack.c.b16 %v2315, %v2251
    %v3212 = vpack.c.b16 %v2380, %v2316
    %v3213 = vpack.c.b16 %v2381, %v2317
    %v3214 = vpack.c.b16 %v2382, %v2318
    %v3215 = vpack.c.b16 %v2383, %v2319
    %v3216 = vpack.c.b16 %v2384, %v2320
    %v3217 = vpack.c.b16 %v2385, %v2321
    %v3218 = vpack.c.b16 %v2386, %v2322
    %v3219 = vpack.c.b16 %v2387, %v2323
    %v3220 = vpack.c.b16 %v2388, %v2324
    %v3221 = vpack.c.b16 %v2389, %v2325
    %v3222 = vpack.c.b16 %v2390, %v2326
    %v3223 = vpack.c.b16 %v2391, %v2327
    %v3224 = vpack.c.b16 %v2392, %v2328
    %v3225 = vpack.c.b16 %v2393, %v2329
    %v3226 = vpack.c.b16 %v2394, %v2330
    %v3227 = vpack.c.b16 %v2395, %v2331
    %v3228 = vpack.c.b16 %v2396, %v2332
    %v3229 = vpack.c.b16 %v2397, %v2333
    %v3230 = vpack.c.b16 %v2398, %v2334
    %v3231 = vpack.c.b16 %v2399, %v2335
    %v3232 = vpack.c.b16 %v2400, %v2336
    %v3233 = vpack.c.b16 %v2401, %v2337
    %v3234 = vpack.c.b16 %v2402, %v2338
    %v3235 = vpack.c.b16 %v2403, %v2339
    %v3236 = vpack.c.b16 %v2404, %v2340
    %v3237 = vpack.c.b16 %v2405, %v2341
    %v3238 = vpack.c.b16 %v2406, %v2342
    %v3239 = vpack.c.b16 %v2407, %v2343
    %v3240 = vpack.c.b16 %v2408, %v2344
    %v3241 = vpack.c.b16 %v2409, %v2345
    %v3242 = vpack.c.b16 %v2410, %v2346
    %v3243 = vpack.c.b16 %v2411, %v2347
    %v3244 = vpack.c.b16 %v2412, %v2348
    %v3245 = vpack.c.b16 %v2413, %v2349
    %v3246 = vpack.c.b16 %v2414, %v2350
    %v3247 = vpack.c.b16 %v2415, %v2351
    %v3248 = vpack.c.b16 %v2416, %v2352
    %v3249 = vpack.c.b16 %v2417, %v2353
    %v3250 = vpack.c.b16 %v2418, %v2354
    %v3251 = vpack.c.b16 %v2419, %v2355
    %v3252 = vpack.c.b16 %v2420, %v2356
    %v3253 = vpack.c.b16 %v2421, %v2357
    %v3254 = vpack.c.b16 %v2422, %v2358
    %v3255 = vpack.c.b16 %v2423, %v2359
    %v3256 = vpack.c.b16 %v2424, %v2360
    %v3257 = vpack.c.b16 %v2425, %v2361
    %v3258 = vpack.c.b16 %v2426, %v2362
    %v3259 = vpack.c.b16 %v2427, %v2363
    %v3260 = vpack.c.b16 %v2428, %v2364
    %v3261 = vpack.c.b16 %v2429, %v2365
    %v3262 = vpack.c.b16 %v2430, %v2366
    %v3263 = vpack.c.b16 %v2431, %v2367
    %v3264 = vpack.c.b16 %v2432, %v2368
    %v3265 = vpack.c.b16 %v2433, %v2369
    %v3266 = vpack.c.b16 %v2434, %v2370
    %v3267 = vpack.c.b16 %v2435, %v2371
    %v3268 = vpack.c.b16 %v2436, %v2372
    %v3269 = vpack.c.b16 %v2437, %v2373
    %v3270 = vpack.c.b16 %v2438, %v2374
    %v3271 = vpack.c.b16 %v2439, %v2375
    %v3272 = vpack.c.b16 %v2440, %v2376
    %v3273 = vpack.c.b16 %v2441, %v2377
    %v3274 = vpack.c.b16 %v2442, %v2378
    %v3275 = vpack.c.b16 %v2443, %v2379
    %v3276 = vpack.c.b16 %v2508, %v2444
    %v3277 = vpack.c.b16 %v2509, %v2445
    %v3278 = vpack.c.b16 %v2510, %v2446
    %v3279 = vpack.c.b16 %v2511, %v2447
    %v3280 = vpack.c.b16 %v2512, %v2448
    %v3281 = vpack.c.b16 %v2513, %v2449
    %v3282 = vpack.c.b16 %v2514, %v2450
    %v3283 = vpack.c.b16 %v2515, %v2451
    %v3284 = vpack.c.b16 %v2516, %v2452
    %v3285 = vpack.c.b16 %v2517, %v2453
    %v3286 = vpack.c.b16 %v2518, %v2454
    %v3287 = vpack.c.b16 %v2519, %v2455
    %v3288 = vpack.c.b16 %v2520, %v2456
    %v3289 = vpack.c.b16 %v2521, %v2457
    %v3290 = vpack.c.b16 %v2522, %v2458
    %v3291 = vpack.c.b16 %v2523, %v2459
    %v3292 = vpack.c.b16 %v2524, %v2460
    %v3293 = vpack.c.b16 %v2525, %v2461
    %v3294 = vpack.c.b16 %v2526, %v2462
    %v3295 = vpack.c.b16 %v2527, %v2463
    %v3296 = vpack.c.b16 %v2528, %v2464
    %v3297 = vpack.c.b16 %v2529, %v2465
    %v3298 = vpack.c.b16 %v2530, %v2466
    %v3299 = vpack.c.b16 %v2531, %v2467
    %v3300 = vpack.c.b16 %v2532, %v2468
    %v3301 = vpack.c.b16 %v2533, %v2469
    %v3302 = vpack.c.b16 %v2534, %v2470
    %v3303 = vpack.c.b16 %v2535, %v2471
    %v3304 = vpack.c.b16 %v2536, %v2472
    %v3305 = vpack.c.b16 %v2537, %v2473
    %v3306 = vpack.c.b16 %v2538, %v2474
    %v3307 = vpack.c.b16 %v2539, %v2475
    %v3308 = vpack.c.b16 %v2540, %v2476
    %v3309 = vpack.c.b16 %v2541, %v2477
    %v3310 = vpack.c.b16 %v2542, %v2478
    %v3311 = vpack.c.b16 %v2543, %v2479
    %v3312 = vpack.c.b16 %v2544, %v2480
    %v3313 = vpack.c.b16 %v2545, %v2481
    %v3314 = vpack.c.b16 %v2546, %v2482
    %v3315 = vpack.c.b16 %v2547, %v2483
    %v3316 = vpack.c.b16 %v2548, %v2484
    %v3317 = vpack.c.b16 %v2549, %v2485
    %v3318 = vpack.c.b16 %v2550, %v2486
    %v3319 = vpack.c.b16 %v2551, %v2487
    %v3320 = vpack.c.b16 %v2552, %v2488
    %v3321 = vpack.c.b16 %v2553, %v2489
    %v3322 = vpack.c.b16 %v2554, %v2490
    %v3323 = vpack.c.b16 %v2555, %v2491
    %v3324 = vpack.c.b16 %v2556, %v2492
    %v3325 = vpack.c.b16 %v2557, %v2493
    %v3326 = vpack.c.b16 %v2558, %v2494
    %v3327 = vpack.c.b16 %v2559, %v2495
    %v3328 = vpack.c.b16 %v2560, %v2496
    %v3329 = vpack.c.b16 %v2561, %v2497
    %v3330 = vpack.c.b16 %v2562, %v2498
    %v3331 = vpack.c.b16 %v2563, %v2499
    %v3332 = vpack.c.b16 %v2564, %v2500
    %v3333 = vpack.c.b16 %v2565, %v2501
    %v3334 = vpack.c.b16 %v2566, %v2502
    %v3335 = vpack.c.b16 %v2567, %v2503
    %v3336 = vpack.c.b16 %v2568, %v2504
    %v3337 = vpack.c.b16 %v2569, %v2505
    %v3338 = vpack.c.b16 %v2570, %v2506
    %v3339 = vpack.c.b16 %v2571, %v2507
    %v3340 = vpack.c.b16 %v2636, %v2572
    %v3341 = vpack.c.b16 %v2637, %v2573
    %v3342 = vpack.c.b16 %v2638, %v2574
    %v3343 = vpack.c.b16 %v2639, %v2575
    %v3344 = vpack.c.b16 %v2640, %v2576
    %v3345 = vpack.c.b16 %v2641, %v2577
    %v3346 = vpack.c.b16 %v2642, %v2578
    %v3347 = vpack.c.b16 %v2643, %v2579
    %v3348 = vpack.c.b16 %v2644, %v2580
    %v3349 = vpack.c.b16 %v2645, %v2581
    %v3350 = vpack.c.b16 %v2646, %v2582
    %v3351 = vpack.c.b16 %v2647, %v2583
    %v3352 = vpack.c.b16 %v2648, %v2584
    %v3353 = vpack.c.b16 %v2649, %v2585
    %v3354 = vpack.c.b16 %v2650, %v2586
    %v3355 = vpack.c.b16 %v2651, %v2587
    %v3356 = vpack.c.b16 %v2652, %v2588
    %v3357 = vpack.c.b16 %v2653, %v2589
    %v3358 = vpack.c.b16 %v2654, %v2590
    %v3359 = vpack.c.b16 %v2655, %v2591
    %v3360 = vpack.c.b16 %v2656, %v2592
    %v3361 = vpack.c.b16 %v2657, %v2593
    %v3362 = vpack.c.b16 %v2658, %v2594
    %v3363 = vpack.c.b16 %v2659, %v2595
    %v3364 = vpack.c.b16 %v2660, %v2596
    %v3365 = vpack.c.b16 %v2661, %v2597
    %v3366 = vpack.c.b16 %v2662, %v2598
    %v3367 = vpack.c.b16 %v2663, %v2599
    %v3368 = vpack.c.b16 %v2664, %v2600
    %v3369 = vpack.c.b16 %v2665, %v2601
    %v3370 = vpack.c.b16 %v2666, %v2602
    %v3371 = vpack.c.b16 %v2667, %v2603
    %v3372 = vpack.c.b16 %v2668, %v2604
    %v3373 = vpack.c.b16 %v2669, %v2605
    %v3374 = vpack.c.b16 %v2670, %v2606
    %v3375 = vpack.c.b16 %v2671, %v2607
    %v3376 = vpack.c.b16 %v2672, %v2608
    %v3377 = vpack.c.b16 %v2673, %v2609
    %v3378 = vpack.c.b16 %v2674, %v2610
    %v3379 = vpack.c.b16 %v2675, %v2611
    %v3380 = vpack.c.b16 %v2676, %v2612
    %v3381 = vpack.c.b16 %v2677, %v2613
    %v3382 = vpack.c.b16 %v2678, %v2614
    %v3383 = vpack.c.b16 %v2679, %v2615
    %v3384 = vpack.c.b16 %v2680, %v2616
    %v3385 = vpack.c.b16 %v2681, %v2617
    %v3386 = vpack.c.b16 %v2682, %v2618
    %v3387 = vpack.c.b16 %v2683, %v2619
    %v3388 = vpack.c.b16 %v2684, %v2620
    %v3389 = vpack.c.b16 %v2685, %v2621
    %v3390 = vpack.c.b16 %v2686, %v2622
    %v3391 = vpack.c.b16 %v2687, %v2623
    %v3392 = vpack.c.b16 %v2688, %v2624
    %v3393 = vpack.c.b16 %v2689, %v2625
    %v3394 = vpack.c.b16 %v2690, %v2626
    %v3395 = vpack.c.b16 %v2691, %v2627
    %v3396 = vpack.c.b16 %v2692, %v2628
    %v3397 = vpack.c.b16 %v2693, %v2629
    %v3398 = vpack.c.b16 %v2694, %v2630
    %v3399 = vpack.c.b16 %v2695, %v2631
    %v3400 = vpack.c.b16 %v2696, %v2632
    %v3401 = vpack.c.b16 %v2697, %v2633
    %v3402 = vpack.c.b16 %v2698, %v2634
    %v3403 = vpack.c.b16 %v2699, %v2635
    %v3404 = vpack.c.b16 %v2764, %v2700
    %v3405 = vpack.c.b16 %v2765, %v2701
    %v3406 = vpack.c.b16 %v2766, %v2702
    %v3407 = vpack.c.b16 %v2767, %v2703
    %v3408 = vpack.c.b16 %v2768, %v2704
    %v3409 = vpack.c.b16 %v2769, %v2705
    %v3410 = vpack.c.b16 %v2770, %v2706
    %v3411 = vpack.c.b16 %v2771, %v2707
    %v3412 = vpack.c.b16 %v2772, %v2708
    %v3413 = vpack.c.b16 %v2773, %v2709
    %v3414 = vpack.c.b16 %v2774, %v2710
    %v3415 = vpack.c.b16 %v2775, %v2711
    %v3416 = vpack.c.b16 %v2776, %v2712
    %v3417 = vpack.c.b16 %v2777, %v2713
    %v3418 = vpack.c.b16 %v2778, %v2714
    %v3419 = vpack.c.b16 %v2779, %v2715
    %v3420 = vpack.c.b16 %v2780, %v2716
    %v3421 = vpack.c.b16 %v2781, %v2717
    %v3422 = vpack.c.b16 %v2782, %v2718
    %v3423 = vpack.c.b16 %v2783, %v2719
    %v3424 = vpack.c.b16 %v2784, %v2720
    %v3425 = vpack.c.b16 %v2785, %v2721
    %v3426 = vpack.c.b16 %v2786, %v2722
    %v3427 = vpack.c.b16 %v2787, %v2723
    %v3428 = vpack.c.b16 %v2788, %v2724
    %v3429 = vpack.c.b16 %v2789, %v2725
    %v3430 = vpack.c.b16 %v2790, %v2726
    %v3431 = vpack.c.b16 %v2791, %v2727
    %v3432 = vpack.c.b16 %v2792, %v2728
    %v3433 = vpack.c.b16 %v2793, %v2729
    %v3434 = vpack.c.b16 %v2794, %v2730
    %v3435 = vpack.c.b16 %v2795, %v2731
    %v3436 = vpack.c.b16 %v2796, %v2732
    %v3437 = vpack.c.b16 %v2797, %v2733
    %v3438 = vpack.c.b16 %v2798, %v2734
    %v3439 = vpack.c.b16 %v2799, %v2735
    %v3440 = vpack.c.b16 %v2800, %v2736
    %v3441 = vpack.c.b16 %v2801, %v2737
    %v3442 = vpack.c.b16 %v2802, %v2738
    %v3443 = vpack.c.b16 %v2803, %v2739
    %v3444 = vpack.c.b16 %v2804, %v2740
    %v3445 = vpack.c.b16 %v2805, %v2741
    %v3446 = vpack.c.b16 %v2806, %v2742
    %v3447 = vpack.c.b16 %v2807, %v2743
    %v3448 = vpack.c.b16 %v2808, %v2744
    %v3449 = vpack.c.b16 %v2809, %v2745
    %v3450 = vpack.c.b16 %v2810, %v2746
    %v3451 = vpack.c.b16 %v2811, %v2747
    %v3452 = vpack.c.b16 %v2812, %v2748
    %v3453 = vpack.c.b16 %v2813, %v2749
    %v3454 = vpack.c.b16 %v2814, %v2750
    %v3455 = vpack.c.b16 %v2815, %v2751
    %v3456 = vpack.c.b16 %v2816, %v2752
    %v3457 = vpack.c.b16 %v2817, %v2753
    %v3458 = vpack.c.b16 %v2818, %v2754
    %v3459 = vpack.c.b16 %v2819, %v2755
    %v3460 = vpack.c.b16 %v2820, %v2756
    %v3461 = vpack.c.b16 %v2821, %v2757
    %v3462 = vpack.c.b16 %v2822, %v2758
    %v3463 = vpack.c.b16 %v2823, %v2759
    %v3464 = vpack.c.b16 %v2824, %v2760
    %v3465 = vpack.c.b16 %v2825, %v2761
    %v3466 = vpack.c.b16 %v2826, %v2762
    %v3467 = vpack.c.b16 %v2827, %v2763
    %v4109 = vperm.slane %v907, 0
    %v4110 = vperm.slane %v907, 1
    %4113 = vmatpush.bf16.xpose.msra.mxu0 %v3276
    %4114 = vmatpush.bf16.xpose.msra.mxu0 %v3212
    %4115 = vmatpush.bf16.xpose.msra.mxu0 %v3148
    %4116 = vmatpush.bf16.xpose.msra.mxu0 %v3084
    %4117 = vmatpush.bf16.xpose.msra.mxu0 %v3020
    %4118 = vmatpush.bf16.xpose.msra.mxu0 %v2956
    %4119 = vmatpush.bf16.xpose.msra.mxu0 %v2892
    %4120 = vmatpush.bf16.xpose.msra.mxu0 %v2828
    %4121 = vmatmul.bf16.gmra.mxu0 %v203
    %v4122 = vpop.f32.mrf.mxu0
    %v4123 = vadd.f32 %v4109, %v4122
    %v4124 = vpop.f32.mrf.mxu0
    %4125 = vdwg.mxu0
    %4126 = vmatpush.bf16.xpose.msra.mxu0 %v3277
    %4127 = vmatpush.bf16.xpose.msra.mxu0 %v3213
    %4128 = vmatpush.bf16.xpose.msra.mxu0 %v3149
    %4129 = vmatpush.bf16.xpose.msra.mxu0 %v3085
    %4130 = vmatpush.bf16.xpose.msra.mxu0 %v3021
    %4131 = vmatpush.bf16.xpose.msra.mxu0 %v2957
    %4132 = vmatpush.bf16.xpose.msra.mxu0 %v2893
    %4133 = vmatpush.bf16.xpose.msra.mxu0 %v2829
    %4134 = vmatmul.bf16.gmra.mxu0 %v204
    %v4135 = vpop.f32.mrf.mxu0
    %v4136 = vadd.f32 %v4123, %v4135
    %v4137 = vpop.f32.mrf.mxu0
    %4138 = vdwg.mxu0
    %4139 = vmatpush.bf16.xpose.msra.mxu0 %v3278
    %4140 = vmatpush.bf16.xpose.msra.mxu0 %v3214
    %4141 = vmatpush.bf16.xpose.msra.mxu0 %v3150
    %4142 = vmatpush.bf16.xpose.msra.mxu0 %v3086
    %4143 = vmatpush.bf16.xpose.msra.mxu0 %v3022
    %4144 = vmatpush.bf16.xpose.msra.mxu0 %v2958
    %4145 = vmatpush.bf16.xpose.msra.mxu0 %v2894
    %4146 = vmatpush.bf16.xpose.msra.mxu0 %v2830
    %4147 = vmatmul.bf16.gmra.mxu0 %v205
    %v4148 = vpop.f32.mrf.mxu0
    %v4149 = vadd.f32 %v4136, %v4148
    %v4150 = vpop.f32.mrf.mxu0
    %4151 = vdwg.mxu0
    %4152 = vmatpush.bf16.xpose.msra.mxu0 %v3279
    %4153 = vmatpush.bf16.xpose.msra.mxu0 %v3215
    %4154 = vmatpush.bf16.xpose.msra.mxu0 %v3151
    %4155 = vmatpush.bf16.xpose.msra.mxu0 %v3087
    %4156 = vmatpush.bf16.xpose.msra.mxu0 %v3023
    %4157 = vmatpush.bf16.xpose.msra.mxu0 %v2959
    %4158 = vmatpush.bf16.xpose.msra.mxu0 %v2895
    %4159 = vmatpush.bf16.xpose.msra.mxu0 %v2831
    %4160 = vmatmul.bf16.gmra.mxu0 %v206
    %v4161 = vpop.f32.mrf.mxu0
    %v4162 = vadd.f32 %v4149, %v4161
    %v4163 = vpop.f32.mrf.mxu0
    %4164 = vdwg.mxu0
    %4165 = vmatpush.bf16.xpose.msra.mxu0 %v3280
    %4166 = vmatpush.bf16.xpose.msra.mxu0 %v3216
    %4167 = vmatpush.bf16.xpose.msra.mxu0 %v3152
    %4168 = vmatpush.bf16.xpose.msra.mxu0 %v3088
    %4169 = vmatpush.bf16.xpose.msra.mxu0 %v3024
    %4170 = vmatpush.bf16.xpose.msra.mxu0 %v2960
    %4171 = vmatpush.bf16.xpose.msra.mxu0 %v2896
    %4172 = vmatpush.bf16.xpose.msra.mxu0 %v2832
    %4173 = vmatmul.bf16.gmra.mxu0 %v207
    %v4174 = vpop.f32.mrf.mxu0
    %v4175 = vadd.f32 %v4162, %v4174
    %v4176 = vpop.f32.mrf.mxu0
    %4177 = vdwg.mxu0
    %4178 = vmatpush.bf16.xpose.msra.mxu0 %v3281
    %4179 = vmatpush.bf16.xpose.msra.mxu0 %v3217
    %4180 = vmatpush.bf16.xpose.msra.mxu0 %v3153
    %4181 = vmatpush.bf16.xpose.msra.mxu0 %v3089
    %4182 = vmatpush.bf16.xpose.msra.mxu0 %v3025
    %4183 = vmatpush.bf16.xpose.msra.mxu0 %v2961
    %4184 = vmatpush.bf16.xpose.msra.mxu0 %v2897
    %4185 = vmatpush.bf16.xpose.msra.mxu0 %v2833
    %4186 = vmatmul.bf16.gmra.mxu0 %v208
    %v4187 = vpop.f32.mrf.mxu0
    %v4188 = vadd.f32 %v4175, %v4187
    %v4189 = vpop.f32.mrf.mxu0
    %4190 = vdwg.mxu0
    %4191 = vmatpush.bf16.xpose.msra.mxu0 %v3282
    %4192 = vmatpush.bf16.xpose.msra.mxu0 %v3218
    %4193 = vmatpush.bf16.xpose.msra.mxu0 %v3154
    %4194 = vmatpush.bf16.xpose.msra.mxu0 %v3090
    %4195 = vmatpush.bf16.xpose.msra.mxu0 %v3026
    %4196 = vmatpush.bf16.xpose.msra.mxu0 %v2962
    %4197 = vmatpush.bf16.xpose.msra.mxu0 %v2898
    %4198 = vmatpush.bf16.xpose.msra.mxu0 %v2834
    %4199 = vmatmul.bf16.gmra.mxu0 %v209
    %v4200 = vpop.f32.mrf.mxu0
    %v4201 = vadd.f32 %v4188, %v4200
    %v4202 = vpop.f32.mrf.mxu0
    %4203 = vdwg.mxu0
    %4204 = vmatpush.bf16.xpose.msra.mxu0 %v3283
    %4205 = vmatpush.bf16.xpose.msra.mxu0 %v3219
    %4206 = vmatpush.bf16.xpose.msra.mxu0 %v3155
    %4207 = vmatpush.bf16.xpose.msra.mxu0 %v3091
    %4208 = vmatpush.bf16.xpose.msra.mxu0 %v3027
    %4209 = vmatpush.bf16.xpose.msra.mxu0 %v2963
    %4210 = vmatpush.bf16.xpose.msra.mxu0 %v2899
    %4211 = vmatpush.bf16.xpose.msra.mxu0 %v2835
    %4212 = vmatmul.bf16.gmra.mxu0 %v210
    %v4213 = vpop.f32.mrf.mxu0
    %v4214 = vadd.f32 %v4201, %v4213
    %v4215 = vpop.f32.mrf.mxu0
    %4216 = vdwg.mxu0
    %4217 = vmatpush.bf16.xpose.msra.mxu0 %v3284
    %4218 = vmatpush.bf16.xpose.msra.mxu0 %v3220
    %4219 = vmatpush.bf16.xpose.msra.mxu0 %v3156
    %4220 = vmatpush.bf16.xpose.msra.mxu0 %v3092
    %4221 = vmatpush.bf16.xpose.msra.mxu0 %v3028
    %4222 = vmatpush.bf16.xpose.msra.mxu0 %v2964
    %4223 = vmatpush.bf16.xpose.msra.mxu0 %v2900
    %4224 = vmatpush.bf16.xpose.msra.mxu0 %v2836
    %4225 = vmatmul.bf16.gmra.mxu0 %v211
    %v4226 = vpop.f32.mrf.mxu0
    %v4227 = vadd.f32 %v4214, %v4226
    %v4228 = vpop.f32.mrf.mxu0
    %4229 = vdwg.mxu0
    %4230 = vmatpush.bf16.xpose.msra.mxu0 %v3285
    %4231 = vmatpush.bf16.xpose.msra.mxu0 %v3221
    %4232 = vmatpush.bf16.xpose.msra.mxu0 %v3157
    %4233 = vmatpush.bf16.xpose.msra.mxu0 %v3093
    %4234 = vmatpush.bf16.xpose.msra.mxu0 %v3029
    %4235 = vmatpush.bf16.xpose.msra.mxu0 %v2965
    %4236 = vmatpush.bf16.xpose.msra.mxu0 %v2901
    %4237 = vmatpush.bf16.xpose.msra.mxu0 %v2837
    %4238 = vmatmul.bf16.gmra.mxu0 %v212
    %v4239 = vpop.f32.mrf.mxu0
    %v4240 = vadd.f32 %v4227, %v4239
    %v4241 = vpop.f32.mrf.mxu0
    %4242 = vdwg.mxu0
    %4243 = vmatpush.bf16.xpose.msra.mxu0 %v3286
    %4244 = vmatpush.bf16.xpose.msra.mxu0 %v3222
    %4245 = vmatpush.bf16.xpose.msra.mxu0 %v3158
    %4246 = vmatpush.bf16.xpose.msra.mxu0 %v3094
    %4247 = vmatpush.bf16.xpose.msra.mxu0 %v3030
    %4248 = vmatpush.bf16.xpose.msra.mxu0 %v2966
    %4249 = vmatpush.bf16.xpose.msra.mxu0 %v2902
    %4250 = vmatpush.bf16.xpose.msra.mxu0 %v2838
    %4251 = vmatmul.bf16.gmra.mxu0 %v213
    %v4252 = vpop.f32.mrf.mxu0
    %v4253 = vadd.f32 %v4240, %v4252
    %v4254 = vpop.f32.mrf.mxu0
    %4255 = vdwg.mxu0
    %4256 = vmatpush.bf16.xpose.msra.mxu0 %v3287
    %4257 = vmatpush.bf16.xpose.msra.mxu0 %v3223
    %4258 = vmatpush.bf16.xpose.msra.mxu0 %v3159
    %4259 = vmatpush.bf16.xpose.msra.mxu0 %v3095
    %4260 = vmatpush.bf16.xpose.msra.mxu0 %v3031
    %4261 = vmatpush.bf16.xpose.msra.mxu0 %v2967
    %4262 = vmatpush.bf16.xpose.msra.mxu0 %v2903
    %4263 = vmatpush.bf16.xpose.msra.mxu0 %v2839
    %4264 = vmatmul.bf16.gmra.mxu0 %v214
    %v4265 = vpop.f32.mrf.mxu0
    %v4266 = vadd.f32 %v4253, %v4265
    %v4267 = vpop.f32.mrf.mxu0
    %4268 = vdwg.mxu0
    %4269 = vmatpush.bf16.xpose.msra.mxu0 %v3288
    %4270 = vmatpush.bf16.xpose.msra.mxu0 %v3224
    %4271 = vmatpush.bf16.xpose.msra.mxu0 %v3160
    %4272 = vmatpush.bf16.xpose.msra.mxu0 %v3096
    %4273 = vmatpush.bf16.xpose.msra.mxu0 %v3032
    %4274 = vmatpush.bf16.xpose.msra.mxu0 %v2968
    %4275 = vmatpush.bf16.xpose.msra.mxu0 %v2904
    %4276 = vmatpush.bf16.xpose.msra.mxu0 %v2840
    %4277 = vmatmul.bf16.gmra.mxu0 %v215
    %v4278 = vpop.f32.mrf.mxu0
    %v4279 = vadd.f32 %v4266, %v4278
    %v4280 = vpop.f32.mrf.mxu0
    %4281 = vdwg.mxu0
    %4282 = vmatpush.bf16.xpose.msra.mxu0 %v3289
    %4283 = vmatpush.bf16.xpose.msra.mxu0 %v3225
    %4284 = vmatpush.bf16.xpose.msra.mxu0 %v3161
    %4285 = vmatpush.bf16.xpose.msra.mxu0 %v3097
    %4286 = vmatpush.bf16.xpose.msra.mxu0 %v3033
    %4287 = vmatpush.bf16.xpose.msra.mxu0 %v2969
    %4288 = vmatpush.bf16.xpose.msra.mxu0 %v2905
    %4289 = vmatpush.bf16.xpose.msra.mxu0 %v2841
    %4290 = vmatmul.bf16.gmra.mxu0 %v216
    %v4291 = vpop.f32.mrf.mxu0
    %v4292 = vadd.f32 %v4279, %v4291
    %v4293 = vpop.f32.mrf.mxu0
    %4294 = vdwg.mxu0
    %4295 = vmatpush.bf16.xpose.msra.mxu0 %v3290
    %4296 = vmatpush.bf16.xpose.msra.mxu0 %v3226
    %4297 = vmatpush.bf16.xpose.msra.mxu0 %v3162
    %4298 = vmatpush.bf16.xpose.msra.mxu0 %v3098
    %4299 = vmatpush.bf16.xpose.msra.mxu0 %v3034
    %4300 = vmatpush.bf16.xpose.msra.mxu0 %v2970
    %4301 = vmatpush.bf16.xpose.msra.mxu0 %v2906
    %4302 = vmatpush.bf16.xpose.msra.mxu0 %v2842
    %4303 = vmatmul.bf16.gmra.mxu0 %v217
    %v4304 = vpop.f32.mrf.mxu0
    %v4305 = vadd.f32 %v4292, %v4304
    %v4306 = vpop.f32.mrf.mxu0
    %4307 = vdwg.mxu0
    %4308 = vmatpush.bf16.xpose.msra.mxu0 %v3291
    %4309 = vmatpush.bf16.xpose.msra.mxu0 %v3227
    %4310 = vmatpush.bf16.xpose.msra.mxu0 %v3163
    %4311 = vmatpush.bf16.xpose.msra.mxu0 %v3099
    %4312 = vmatpush.bf16.xpose.msra.mxu0 %v3035
    %4313 = vmatpush.bf16.xpose.msra.mxu0 %v2971
    %4314 = vmatpush.bf16.xpose.msra.mxu0 %v2907
    %4315 = vmatpush.bf16.xpose.msra.mxu0 %v2843
    %4316 = vmatmul.bf16.gmra.mxu0 %v218
    %v4317 = vpop.f32.mrf.mxu0
    %v4318 = vadd.f32 %v4305, %v4317
    %v4319 = vpop.f32.mrf.mxu0
    %4320 = vdwg.mxu0
    %4321 = vmatpush.bf16.xpose.msra.mxu0 %v3292
    %4322 = vmatpush.bf16.xpose.msra.mxu0 %v3228
    %4323 = vmatpush.bf16.xpose.msra.mxu0 %v3164
    %4324 = vmatpush.bf16.xpose.msra.mxu0 %v3100
    %4325 = vmatpush.bf16.xpose.msra.mxu0 %v3036
    %4326 = vmatpush.bf16.xpose.msra.mxu0 %v2972
    %4327 = vmatpush.bf16.xpose.msra.mxu0 %v2908
    %4328 = vmatpush.bf16.xpose.msra.mxu0 %v2844
    %4329 = vmatmul.bf16.gmra.mxu0 %v219
    %v4330 = vpop.f32.mrf.mxu0
    %v4331 = vadd.f32 %v4318, %v4330
    %v4332 = vpop.f32.mrf.mxu0
    %4333 = vdwg.mxu0
    %4334 = vmatpush.bf16.xpose.msra.mxu0 %v3293
    %4335 = vmatpush.bf16.xpose.msra.mxu0 %v3229
    %4336 = vmatpush.bf16.xpose.msra.mxu0 %v3165
    %4337 = vmatpush.bf16.xpose.msra.mxu0 %v3101
    %4338 = vmatpush.bf16.xpose.msra.mxu0 %v3037
    %4339 = vmatpush.bf16.xpose.msra.mxu0 %v2973
    %4340 = vmatpush.bf16.xpose.msra.mxu0 %v2909
    %4341 = vmatpush.bf16.xpose.msra.mxu0 %v2845
    %4342 = vmatmul.bf16.gmra.mxu0 %v220
    %v4343 = vpop.f32.mrf.mxu0
    %v4344 = vadd.f32 %v4331, %v4343
    %v4345 = vpop.f32.mrf.mxu0
    %4346 = vdwg.mxu0
    %4347 = vmatpush.bf16.xpose.msra.mxu0 %v3294
    %4348 = vmatpush.bf16.xpose.msra.mxu0 %v3230
    %4349 = vmatpush.bf16.xpose.msra.mxu0 %v3166
    %4350 = vmatpush.bf16.xpose.msra.mxu0 %v3102
    %4351 = vmatpush.bf16.xpose.msra.mxu0 %v3038
    %4352 = vmatpush.bf16.xpose.msra.mxu0 %v2974
    %4353 = vmatpush.bf16.xpose.msra.mxu0 %v2910
    %4354 = vmatpush.bf16.xpose.msra.mxu0 %v2846
    %4355 = vmatmul.bf16.gmra.mxu0 %v221
    %v4356 = vpop.f32.mrf.mxu0
    %v4357 = vadd.f32 %v4344, %v4356
    %v4358 = vpop.f32.mrf.mxu0
    %4359 = vdwg.mxu0
    %4360 = vmatpush.bf16.xpose.msra.mxu0 %v3295
    %4361 = vmatpush.bf16.xpose.msra.mxu0 %v3231
    %4362 = vmatpush.bf16.xpose.msra.mxu0 %v3167
    %4363 = vmatpush.bf16.xpose.msra.mxu0 %v3103
    %4364 = vmatpush.bf16.xpose.msra.mxu0 %v3039
    %4365 = vmatpush.bf16.xpose.msra.mxu0 %v2975
    %4366 = vmatpush.bf16.xpose.msra.mxu0 %v2911
    %4367 = vmatpush.bf16.xpose.msra.mxu0 %v2847
    %4368 = vmatmul.bf16.gmra.mxu0 %v222
    %v4369 = vpop.f32.mrf.mxu0
    %v4370 = vadd.f32 %v4357, %v4369
    %v4371 = vpop.f32.mrf.mxu0
    %4372 = vdwg.mxu0
    %4373 = vmatpush.bf16.xpose.msra.mxu0 %v3296
    %4374 = vmatpush.bf16.xpose.msra.mxu0 %v3232
    %4375 = vmatpush.bf16.xpose.msra.mxu0 %v3168
    %4376 = vmatpush.bf16.xpose.msra.mxu0 %v3104
    %4377 = vmatpush.bf16.xpose.msra.mxu0 %v3040
    %4378 = vmatpush.bf16.xpose.msra.mxu0 %v2976
    %4379 = vmatpush.bf16.xpose.msra.mxu0 %v2912
    %4380 = vmatpush.bf16.xpose.msra.mxu0 %v2848
    %4381 = vmatmul.bf16.gmra.mxu0 %v223
    %v4382 = vpop.f32.mrf.mxu0
    %v4383 = vadd.f32 %v4370, %v4382
    %v4384 = vpop.f32.mrf.mxu0
    %4385 = vdwg.mxu0
    %4386 = vmatpush.bf16.xpose.msra.mxu0 %v3297
    %4387 = vmatpush.bf16.xpose.msra.mxu0 %v3233
    %4388 = vmatpush.bf16.xpose.msra.mxu0 %v3169
    %4389 = vmatpush.bf16.xpose.msra.mxu0 %v3105
    %4390 = vmatpush.bf16.xpose.msra.mxu0 %v3041
    %4391 = vmatpush.bf16.xpose.msra.mxu0 %v2977
    %4392 = vmatpush.bf16.xpose.msra.mxu0 %v2913
    %4393 = vmatpush.bf16.xpose.msra.mxu0 %v2849
    %4394 = vmatmul.bf16.gmra.mxu0 %v224
    %v4395 = vpop.f32.mrf.mxu0
    %v4396 = vadd.f32 %v4383, %v4395
    %v4397 = vpop.f32.mrf.mxu0
    %4398 = vdwg.mxu0
    %4399 = vmatpush.bf16.xpose.msra.mxu0 %v3298
    %4400 = vmatpush.bf16.xpose.msra.mxu0 %v3234
    %4401 = vmatpush.bf16.xpose.msra.mxu0 %v3170
    %4402 = vmatpush.bf16.xpose.msra.mxu0 %v3106
    %4403 = vmatpush.bf16.xpose.msra.mxu0 %v3042
    %4404 = vmatpush.bf16.xpose.msra.mxu0 %v2978
    %4405 = vmatpush.bf16.xpose.msra.mxu0 %v2914
    %4406 = vmatpush.bf16.xpose.msra.mxu0 %v2850
    %4407 = vmatmul.bf16.gmra.mxu0 %v225
    %v4408 = vpop.f32.mrf.mxu0
    %v4409 = vadd.f32 %v4396, %v4408
    %v4410 = vpop.f32.mrf.mxu0
    %4411 = vdwg.mxu0
    %4412 = vmatpush.bf16.xpose.msra.mxu0 %v3299
    %4413 = vmatpush.bf16.xpose.msra.mxu0 %v3235
    %4414 = vmatpush.bf16.xpose.msra.mxu0 %v3171
    %4415 = vmatpush.bf16.xpose.msra.mxu0 %v3107
    %4416 = vmatpush.bf16.xpose.msra.mxu0 %v3043
    %4417 = vmatpush.bf16.xpose.msra.mxu0 %v2979
    %4418 = vmatpush.bf16.xpose.msra.mxu0 %v2915
    %4419 = vmatpush.bf16.xpose.msra.mxu0 %v2851
    %4420 = vmatmul.bf16.gmra.mxu0 %v226
    %v4421 = vpop.f32.mrf.mxu0
    %v4422 = vadd.f32 %v4409, %v4421
    %v4423 = vpop.f32.mrf.mxu0
    %4424 = vdwg.mxu0
    %4425 = vmatpush.bf16.xpose.msra.mxu0 %v3300
    %4426 = vmatpush.bf16.xpose.msra.mxu0 %v3236
    %4427 = vmatpush.bf16.xpose.msra.mxu0 %v3172
    %4428 = vmatpush.bf16.xpose.msra.mxu0 %v3108
    %4429 = vmatpush.bf16.xpose.msra.mxu0 %v3044
    %4430 = vmatpush.bf16.xpose.msra.mxu0 %v2980
    %4431 = vmatpush.bf16.xpose.msra.mxu0 %v2916
    %4432 = vmatpush.bf16.xpose.msra.mxu0 %v2852
    %4433 = vmatmul.bf16.gmra.mxu0 %v227
    %v4434 = vpop.f32.mrf.mxu0
    %v4435 = vadd.f32 %v4422, %v4434
    %v4436 = vpop.f32.mrf.mxu0
    %4437 = vdwg.mxu0
    %4438 = vmatpush.bf16.xpose.msra.mxu0 %v3301
    %4439 = vmatpush.bf16.xpose.msra.mxu0 %v3237
    %4440 = vmatpush.bf16.xpose.msra.mxu0 %v3173
    %4441 = vmatpush.bf16.xpose.msra.mxu0 %v3109
    %4442 = vmatpush.bf16.xpose.msra.mxu0 %v3045
    %4443 = vmatpush.bf16.xpose.msra.mxu0 %v2981
    %4444 = vmatpush.bf16.xpose.msra.mxu0 %v2917
    %4445 = vmatpush.bf16.xpose.msra.mxu0 %v2853
    %4446 = vmatmul.bf16.gmra.mxu0 %v228
    %v4447 = vpop.f32.mrf.mxu0
    %v4448 = vadd.f32 %v4435, %v4447
    %v4449 = vpop.f32.mrf.mxu0
    %4450 = vdwg.mxu0
    %4451 = vmatpush.bf16.xpose.msra.mxu0 %v3302
    %4452 = vmatpush.bf16.xpose.msra.mxu0 %v3238
    %4453 = vmatpush.bf16.xpose.msra.mxu0 %v3174
    %4454 = vmatpush.bf16.xpose.msra.mxu0 %v3110
    %4455 = vmatpush.bf16.xpose.msra.mxu0 %v3046
    %4456 = vmatpush.bf16.xpose.msra.mxu0 %v2982
    %4457 = vmatpush.bf16.xpose.msra.mxu0 %v2918
    %4458 = vmatpush.bf16.xpose.msra.mxu0 %v2854
    %4459 = vmatmul.bf16.gmra.mxu0 %v229
    %v4460 = vpop.f32.mrf.mxu0
    %v4461 = vadd.f32 %v4448, %v4460
    %v4462 = vpop.f32.mrf.mxu0
    %4463 = vdwg.mxu0
    %4464 = vmatpush.bf16.xpose.msra.mxu0 %v3303
    %4465 = vmatpush.bf16.xpose.msra.mxu0 %v3239
    %4466 = vmatpush.bf16.xpose.msra.mxu0 %v3175
    %4467 = vmatpush.bf16.xpose.msra.mxu0 %v3111
    %4468 = vmatpush.bf16.xpose.msra.mxu0 %v3047
    %4469 = vmatpush.bf16.xpose.msra.mxu0 %v2983
    %4470 = vmatpush.bf16.xpose.msra.mxu0 %v2919
    %4471 = vmatpush.bf16.xpose.msra.mxu0 %v2855
    %4472 = vmatmul.bf16.gmra.mxu0 %v230
    %v4473 = vpop.f32.mrf.mxu0
    %v4474 = vadd.f32 %v4461, %v4473
    %v4475 = vpop.f32.mrf.mxu0
    %4476 = vdwg.mxu0
    %4477 = vmatpush.bf16.xpose.msra.mxu0 %v3304
    %4478 = vmatpush.bf16.xpose.msra.mxu0 %v3240
    %4479 = vmatpush.bf16.xpose.msra.mxu0 %v3176
    %4480 = vmatpush.bf16.xpose.msra.mxu0 %v3112
    %4481 = vmatpush.bf16.xpose.msra.mxu0 %v3048
    %4482 = vmatpush.bf16.xpose.msra.mxu0 %v2984
    %4483 = vmatpush.bf16.xpose.msra.mxu0 %v2920
    %4484 = vmatpush.bf16.xpose.msra.mxu0 %v2856
    %4485 = vmatmul.bf16.gmra.mxu0 %v231
    %v4486 = vpop.f32.mrf.mxu0
    %v4487 = vadd.f32 %v4474, %v4486
    %v4488 = vpop.f32.mrf.mxu0
    %4489 = vdwg.mxu0
    %4490 = vmatpush.bf16.xpose.msra.mxu0 %v3305
    %4491 = vmatpush.bf16.xpose.msra.mxu0 %v3241
    %4492 = vmatpush.bf16.xpose.msra.mxu0 %v3177
    %4493 = vmatpush.bf16.xpose.msra.mxu0 %v3113
    %4494 = vmatpush.bf16.xpose.msra.mxu0 %v3049
    %4495 = vmatpush.bf16.xpose.msra.mxu0 %v2985
    %4496 = vmatpush.bf16.xpose.msra.mxu0 %v2921
    %4497 = vmatpush.bf16.xpose.msra.mxu0 %v2857
    %4498 = vmatmul.bf16.gmra.mxu0 %v232
    %v4499 = vpop.f32.mrf.mxu0
    %v4500 = vadd.f32 %v4487, %v4499
    %v4501 = vpop.f32.mrf.mxu0
    %4502 = vdwg.mxu0
    %4503 = vmatpush.bf16.xpose.msra.mxu0 %v3306
    %4504 = vmatpush.bf16.xpose.msra.mxu0 %v3242
    %4505 = vmatpush.bf16.xpose.msra.mxu0 %v3178
    %4506 = vmatpush.bf16.xpose.msra.mxu0 %v3114
    %4507 = vmatpush.bf16.xpose.msra.mxu0 %v3050
    %4508 = vmatpush.bf16.xpose.msra.mxu0 %v2986
    %4509 = vmatpush.bf16.xpose.msra.mxu0 %v2922
    %4510 = vmatpush.bf16.xpose.msra.mxu0 %v2858
    %4511 = vmatmul.bf16.gmra.mxu0 %v233
    %v4512 = vpop.f32.mrf.mxu0
    %v4513 = vadd.f32 %v4500, %v4512
    %v4514 = vpop.f32.mrf.mxu0
    %4515 = vdwg.mxu0
    %4516 = vmatpush.bf16.xpose.msra.mxu0 %v3307
    %4517 = vmatpush.bf16.xpose.msra.mxu0 %v3243
    %4518 = vmatpush.bf16.xpose.msra.mxu0 %v3179
    %4519 = vmatpush.bf16.xpose.msra.mxu0 %v3115
    %4520 = vmatpush.bf16.xpose.msra.mxu0 %v3051
    %4521 = vmatpush.bf16.xpose.msra.mxu0 %v2987
    %4522 = vmatpush.bf16.xpose.msra.mxu0 %v2923
    %4523 = vmatpush.bf16.xpose.msra.mxu0 %v2859
    %4524 = vmatmul.bf16.gmra.mxu0 %v234
    %v4525 = vpop.f32.mrf.mxu0
    %v4526 = vadd.f32 %v4513, %v4525
    %v4527 = vpop.f32.mrf.mxu0
    %4528 = vdwg.mxu0
    %4529 = vmatpush.bf16.xpose.msra.mxu0 %v3308
    %4530 = vmatpush.bf16.xpose.msra.mxu0 %v3244
    %4531 = vmatpush.bf16.xpose.msra.mxu0 %v3180
    %4532 = vmatpush.bf16.xpose.msra.mxu0 %v3116
    %4533 = vmatpush.bf16.xpose.msra.mxu0 %v3052
    %4534 = vmatpush.bf16.xpose.msra.mxu0 %v2988
    %4535 = vmatpush.bf16.xpose.msra.mxu0 %v2924
    %4536 = vmatpush.bf16.xpose.msra.mxu0 %v2860
    %4537 = vmatmul.bf16.gmra.mxu0 %v235
    %v4538 = vpop.f32.mrf.mxu0
    %v4539 = vadd.f32 %v4526, %v4538
    %v4540 = vpop.f32.mrf.mxu0
    %4541 = vdwg.mxu0
    %4542 = vmatpush.bf16.xpose.msra.mxu0 %v3309
    %4543 = vmatpush.bf16.xpose.msra.mxu0 %v3245
    %4544 = vmatpush.bf16.xpose.msra.mxu0 %v3181
    %4545 = vmatpush.bf16.xpose.msra.mxu0 %v3117
    %4546 = vmatpush.bf16.xpose.msra.mxu0 %v3053
    %4547 = vmatpush.bf16.xpose.msra.mxu0 %v2989
    %4548 = vmatpush.bf16.xpose.msra.mxu0 %v2925
    %4549 = vmatpush.bf16.xpose.msra.mxu0 %v2861
    %4550 = vmatmul.bf16.gmra.mxu0 %v236
    %v4551 = vpop.f32.mrf.mxu0
    %v4552 = vadd.f32 %v4539, %v4551
    %v4553 = vpop.f32.mrf.mxu0
    %4554 = vdwg.mxu0
    %4555 = vmatpush.bf16.xpose.msra.mxu0 %v3310
    %4556 = vmatpush.bf16.xpose.msra.mxu0 %v3246
    %4557 = vmatpush.bf16.xpose.msra.mxu0 %v3182
    %4558 = vmatpush.bf16.xpose.msra.mxu0 %v3118
    %4559 = vmatpush.bf16.xpose.msra.mxu0 %v3054
    %4560 = vmatpush.bf16.xpose.msra.mxu0 %v2990
    %4561 = vmatpush.bf16.xpose.msra.mxu0 %v2926
    %4562 = vmatpush.bf16.xpose.msra.mxu0 %v2862
    %4563 = vmatmul.bf16.gmra.mxu0 %v237
    %v4564 = vpop.f32.mrf.mxu0
    %v4565 = vadd.f32 %v4552, %v4564
    %v4566 = vpop.f32.mrf.mxu0
    %4567 = vdwg.mxu0
    %4568 = vmatpush.bf16.xpose.msra.mxu0 %v3311
    %4569 = vmatpush.bf16.xpose.msra.mxu0 %v3247
    %4570 = vmatpush.bf16.xpose.msra.mxu0 %v3183
    %4571 = vmatpush.bf16.xpose.msra.mxu0 %v3119
    %4572 = vmatpush.bf16.xpose.msra.mxu0 %v3055
    %4573 = vmatpush.bf16.xpose.msra.mxu0 %v2991
    %4574 = vmatpush.bf16.xpose.msra.mxu0 %v2927
    %4575 = vmatpush.bf16.xpose.msra.mxu0 %v2863
    %4576 = vmatmul.bf16.gmra.mxu0 %v238
    %v4577 = vpop.f32.mrf.mxu0
    %v4578 = vadd.f32 %v4565, %v4577
    %v4579 = vpop.f32.mrf.mxu0
    %4580 = vdwg.mxu0
    %4581 = vmatpush.bf16.xpose.msra.mxu0 %v3312
    %4582 = vmatpush.bf16.xpose.msra.mxu0 %v3248
    %4583 = vmatpush.bf16.xpose.msra.mxu0 %v3184
    %4584 = vmatpush.bf16.xpose.msra.mxu0 %v3120
    %4585 = vmatpush.bf16.xpose.msra.mxu0 %v3056
    %4586 = vmatpush.bf16.xpose.msra.mxu0 %v2992
    %4587 = vmatpush.bf16.xpose.msra.mxu0 %v2928
    %4588 = vmatpush.bf16.xpose.msra.mxu0 %v2864
    %4589 = vmatmul.bf16.gmra.mxu0 %v239
    %v4590 = vpop.f32.mrf.mxu0
    %v4591 = vadd.f32 %v4578, %v4590
    %v4592 = vpop.f32.mrf.mxu0
    %4593 = vdwg.mxu0
    %4594 = vmatpush.bf16.xpose.msra.mxu0 %v3313
    %4595 = vmatpush.bf16.xpose.msra.mxu0 %v3249
    %4596 = vmatpush.bf16.xpose.msra.mxu0 %v3185
    %4597 = vmatpush.bf16.xpose.msra.mxu0 %v3121
    %4598 = vmatpush.bf16.xpose.msra.mxu0 %v3057
    %4599 = vmatpush.bf16.xpose.msra.mxu0 %v2993
    %4600 = vmatpush.bf16.xpose.msra.mxu0 %v2929
    %4601 = vmatpush.bf16.xpose.msra.mxu0 %v2865
    %4602 = vmatmul.bf16.gmra.mxu0 %v240
    %v4603 = vpop.f32.mrf.mxu0
    %v4604 = vadd.f32 %v4591, %v4603
    %v4605 = vpop.f32.mrf.mxu0
    %4606 = vdwg.mxu0
    %4607 = vmatpush.bf16.xpose.msra.mxu0 %v3314
    %4608 = vmatpush.bf16.xpose.msra.mxu0 %v3250
    %4609 = vmatpush.bf16.xpose.msra.mxu0 %v3186
    %4610 = vmatpush.bf16.xpose.msra.mxu0 %v3122
    %4611 = vmatpush.bf16.xpose.msra.mxu0 %v3058
    %4612 = vmatpush.bf16.xpose.msra.mxu0 %v2994
    %4613 = vmatpush.bf16.xpose.msra.mxu0 %v2930
    %4614 = vmatpush.bf16.xpose.msra.mxu0 %v2866
    %4615 = vmatmul.bf16.gmra.mxu0 %v241
    %v4616 = vpop.f32.mrf.mxu0
    %v4617 = vadd.f32 %v4604, %v4616
    %v4618 = vpop.f32.mrf.mxu0
    %4619 = vdwg.mxu0
    %4620 = vmatpush.bf16.xpose.msra.mxu0 %v3315
    %4621 = vmatpush.bf16.xpose.msra.mxu0 %v3251
    %4622 = vmatpush.bf16.xpose.msra.mxu0 %v3187
    %4623 = vmatpush.bf16.xpose.msra.mxu0 %v3123
    %4624 = vmatpush.bf16.xpose.msra.mxu0 %v3059
    %4625 = vmatpush.bf16.xpose.msra.mxu0 %v2995
    %4626 = vmatpush.bf16.xpose.msra.mxu0 %v2931
    %4627 = vmatpush.bf16.xpose.msra.mxu0 %v2867
    %4628 = vmatmul.bf16.gmra.mxu0 %v242
    %v4629 = vpop.f32.mrf.mxu0
    %v4630 = vadd.f32 %v4617, %v4629
    %v4631 = vpop.f32.mrf.mxu0
    %4632 = vdwg.mxu0
    %4633 = vmatpush.bf16.xpose.msra.mxu0 %v3316
    %4634 = vmatpush.bf16.xpose.msra.mxu0 %v3252
    %4635 = vmatpush.bf16.xpose.msra.mxu0 %v3188
    %4636 = vmatpush.bf16.xpose.msra.mxu0 %v3124
    %4637 = vmatpush.bf16.xpose.msra.mxu0 %v3060
    %4638 = vmatpush.bf16.xpose.msra.mxu0 %v2996
    %4639 = vmatpush.bf16.xpose.msra.mxu0 %v2932
    %4640 = vmatpush.bf16.xpose.msra.mxu0 %v2868
    %4641 = vmatmul.bf16.gmra.mxu0 %v243
    %v4642 = vpop.f32.mrf.mxu0
    %v4643 = vadd.f32 %v4630, %v4642
    %v4644 = vpop.f32.mrf.mxu0
    %4645 = vdwg.mxu0
    %4646 = vmatpush.bf16.xpose.msra.mxu0 %v3317
    %4647 = vmatpush.bf16.xpose.msra.mxu0 %v3253
    %4648 = vmatpush.bf16.xpose.msra.mxu0 %v3189
    %4649 = vmatpush.bf16.xpose.msra.mxu0 %v3125
    %4650 = vmatpush.bf16.xpose.msra.mxu0 %v3061
    %4651 = vmatpush.bf16.xpose.msra.mxu0 %v2997
    %4652 = vmatpush.bf16.xpose.msra.mxu0 %v2933
    %4653 = vmatpush.bf16.xpose.msra.mxu0 %v2869
    %4654 = vmatmul.bf16.gmra.mxu0 %v244
    %v4655 = vpop.f32.mrf.mxu0
    %v4656 = vadd.f32 %v4643, %v4655
    %v4657 = vpop.f32.mrf.mxu0
    %4658 = vdwg.mxu0
    %4659 = vmatpush.bf16.xpose.msra.mxu0 %v3318
    %4660 = vmatpush.bf16.xpose.msra.mxu0 %v3254
    %4661 = vmatpush.bf16.xpose.msra.mxu0 %v3190
    %4662 = vmatpush.bf16.xpose.msra.mxu0 %v3126
    %4663 = vmatpush.bf16.xpose.msra.mxu0 %v3062
    %4664 = vmatpush.bf16.xpose.msra.mxu0 %v2998
    %4665 = vmatpush.bf16.xpose.msra.mxu0 %v2934
    %4666 = vmatpush.bf16.xpose.msra.mxu0 %v2870
    %4667 = vmatmul.bf16.gmra.mxu0 %v245
    %v4668 = vpop.f32.mrf.mxu0
    %v4669 = vadd.f32 %v4656, %v4668
    %v4670 = vpop.f32.mrf.mxu0
    %4671 = vdwg.mxu0
    %4672 = vmatpush.bf16.xpose.msra.mxu0 %v3319
    %4673 = vmatpush.bf16.xpose.msra.mxu0 %v3255
    %4674 = vmatpush.bf16.xpose.msra.mxu0 %v3191
    %4675 = vmatpush.bf16.xpose.msra.mxu0 %v3127
    %4676 = vmatpush.bf16.xpose.msra.mxu0 %v3063
    %4677 = vmatpush.bf16.xpose.msra.mxu0 %v2999
    %4678 = vmatpush.bf16.xpose.msra.mxu0 %v2935
    %4679 = vmatpush.bf16.xpose.msra.mxu0 %v2871
    %4680 = vmatmul.bf16.gmra.mxu0 %v246
    %v4681 = vpop.f32.mrf.mxu0
    %v4682 = vadd.f32 %v4669, %v4681
    %v4683 = vpop.f32.mrf.mxu0
    %4684 = vdwg.mxu0
    %4685 = vmatpush.bf16.xpose.msra.mxu0 %v3320
    %4686 = vmatpush.bf16.xpose.msra.mxu0 %v3256
    %4687 = vmatpush.bf16.xpose.msra.mxu0 %v3192
    %4688 = vmatpush.bf16.xpose.msra.mxu0 %v3128
    %4689 = vmatpush.bf16.xpose.msra.mxu0 %v3064
    %4690 = vmatpush.bf16.xpose.msra.mxu0 %v3000
    %4691 = vmatpush.bf16.xpose.msra.mxu0 %v2936
    %4692 = vmatpush.bf16.xpose.msra.mxu0 %v2872
    %4693 = vmatmul.bf16.gmra.mxu0 %v247
    %v4694 = vpop.f32.mrf.mxu0
    %v4695 = vadd.f32 %v4682, %v4694
    %v4696 = vpop.f32.mrf.mxu0
    %4697 = vdwg.mxu0
    %4698 = vmatpush.bf16.xpose.msra.mxu0 %v3321
    %4699 = vmatpush.bf16.xpose.msra.mxu0 %v3257
    %4700 = vmatpush.bf16.xpose.msra.mxu0 %v3193
    %4701 = vmatpush.bf16.xpose.msra.mxu0 %v3129
    %4702 = vmatpush.bf16.xpose.msra.mxu0 %v3065
    %4703 = vmatpush.bf16.xpose.msra.mxu0 %v3001
    %4704 = vmatpush.bf16.xpose.msra.mxu0 %v2937
    %4705 = vmatpush.bf16.xpose.msra.mxu0 %v2873
    %4706 = vmatmul.bf16.gmra.mxu0 %v248
    %v4707 = vpop.f32.mrf.mxu0
    %v4708 = vadd.f32 %v4695, %v4707
    %v4709 = vpop.f32.mrf.mxu0
    %4710 = vdwg.mxu0
    %4711 = vmatpush.bf16.xpose.msra.mxu0 %v3322
    %4712 = vmatpush.bf16.xpose.msra.mxu0 %v3258
    %4713 = vmatpush.bf16.xpose.msra.mxu0 %v3194
    %4714 = vmatpush.bf16.xpose.msra.mxu0 %v3130
    %4715 = vmatpush.bf16.xpose.msra.mxu0 %v3066
    %4716 = vmatpush.bf16.xpose.msra.mxu0 %v3002
    %4717 = vmatpush.bf16.xpose.msra.mxu0 %v2938
    %4718 = vmatpush.bf16.xpose.msra.mxu0 %v2874
    %4719 = vmatmul.bf16.gmra.mxu0 %v249
    %v4720 = vpop.f32.mrf.mxu0
    %v4721 = vadd.f32 %v4708, %v4720
    %v4722 = vpop.f32.mrf.mxu0
    %4723 = vdwg.mxu0
    %4724 = vmatpush.bf16.xpose.msra.mxu0 %v3323
    %4725 = vmatpush.bf16.xpose.msra.mxu0 %v3259
    %4726 = vmatpush.bf16.xpose.msra.mxu0 %v3195
    %4727 = vmatpush.bf16.xpose.msra.mxu0 %v3131
    %4728 = vmatpush.bf16.xpose.msra.mxu0 %v3067
    %4729 = vmatpush.bf16.xpose.msra.mxu0 %v3003
    %4730 = vmatpush.bf16.xpose.msra.mxu0 %v2939
    %4731 = vmatpush.bf16.xpose.msra.mxu0 %v2875
    %4732 = vmatmul.bf16.gmra.mxu0 %v250
    %v4733 = vpop.f32.mrf.mxu0
    %v4734 = vadd.f32 %v4721, %v4733
    %v4735 = vpop.f32.mrf.mxu0
    %4736 = vdwg.mxu0
    %4737 = vmatpush.bf16.xpose.msra.mxu0 %v3324
    %4738 = vmatpush.bf16.xpose.msra.mxu0 %v3260
    %4739 = vmatpush.bf16.xpose.msra.mxu0 %v3196
    %4740 = vmatpush.bf16.xpose.msra.mxu0 %v3132
    %4741 = vmatpush.bf16.xpose.msra.mxu0 %v3068
    %4742 = vmatpush.bf16.xpose.msra.mxu0 %v3004
    %4743 = vmatpush.bf16.xpose.msra.mxu0 %v2940
    %4744 = vmatpush.bf16.xpose.msra.mxu0 %v2876
    %4745 = vmatmul.bf16.gmra.mxu0 %v251
    %v4746 = vpop.f32.mrf.mxu0
    %v4747 = vadd.f32 %v4734, %v4746
    %v4748 = vpop.f32.mrf.mxu0
    %4749 = vdwg.mxu0
    %4750 = vmatpush.bf16.xpose.msra.mxu0 %v3325
    %4751 = vmatpush.bf16.xpose.msra.mxu0 %v3261
    %4752 = vmatpush.bf16.xpose.msra.mxu0 %v3197
    %4753 = vmatpush.bf16.xpose.msra.mxu0 %v3133
    %4754 = vmatpush.bf16.xpose.msra.mxu0 %v3069
    %4755 = vmatpush.bf16.xpose.msra.mxu0 %v3005
    %4756 = vmatpush.bf16.xpose.msra.mxu0 %v2941
    %4757 = vmatpush.bf16.xpose.msra.mxu0 %v2877
    %4758 = vmatmul.bf16.gmra.mxu0 %v252
    %v4759 = vpop.f32.mrf.mxu0
    %v4760 = vadd.f32 %v4747, %v4759
    %v4761 = vpop.f32.mrf.mxu0
    %4762 = vdwg.mxu0
    %4763 = vmatpush.bf16.xpose.msra.mxu0 %v3326
    %4764 = vmatpush.bf16.xpose.msra.mxu0 %v3262
    %4765 = vmatpush.bf16.xpose.msra.mxu0 %v3198
    %4766 = vmatpush.bf16.xpose.msra.mxu0 %v3134
    %4767 = vmatpush.bf16.xpose.msra.mxu0 %v3070
    %4768 = vmatpush.bf16.xpose.msra.mxu0 %v3006
    %4769 = vmatpush.bf16.xpose.msra.mxu0 %v2942
    %4770 = vmatpush.bf16.xpose.msra.mxu0 %v2878
    %4771 = vmatmul.bf16.gmra.mxu0 %v253
    %v4772 = vpop.f32.mrf.mxu0
    %v4773 = vadd.f32 %v4760, %v4772
    %v4774 = vpop.f32.mrf.mxu0
    %4775 = vdwg.mxu0
    %4776 = vmatpush.bf16.xpose.msra.mxu0 %v3327
    %4777 = vmatpush.bf16.xpose.msra.mxu0 %v3263
    %4778 = vmatpush.bf16.xpose.msra.mxu0 %v3199
    %4779 = vmatpush.bf16.xpose.msra.mxu0 %v3135
    %4780 = vmatpush.bf16.xpose.msra.mxu0 %v3071
    %4781 = vmatpush.bf16.xpose.msra.mxu0 %v3007
    %4782 = vmatpush.bf16.xpose.msra.mxu0 %v2943
    %4783 = vmatpush.bf16.xpose.msra.mxu0 %v2879
    %4784 = vmatmul.bf16.gmra.mxu0 %v254
    %v4785 = vpop.f32.mrf.mxu0
    %v4786 = vadd.f32 %v4773, %v4785
    %v4787 = vpop.f32.mrf.mxu0
    %4788 = vdwg.mxu0
    %4789 = vmatpush.bf16.xpose.msra.mxu0 %v3328
    %4790 = vmatpush.bf16.xpose.msra.mxu0 %v3264
    %4791 = vmatpush.bf16.xpose.msra.mxu0 %v3200
    %4792 = vmatpush.bf16.xpose.msra.mxu0 %v3136
    %4793 = vmatpush.bf16.xpose.msra.mxu0 %v3072
    %4794 = vmatpush.bf16.xpose.msra.mxu0 %v3008
    %4795 = vmatpush.bf16.xpose.msra.mxu0 %v2944
    %4796 = vmatpush.bf16.xpose.msra.mxu0 %v2880
    %4797 = vmatmul.bf16.gmra.mxu0 %v255
    %v4798 = vpop.f32.mrf.mxu0
    %v4799 = vadd.f32 %v4786, %v4798
    %v4800 = vpop.f32.mrf.mxu0
    %4801 = vdwg.mxu0
    %4802 = vmatpush.bf16.xpose.msra.mxu0 %v3329
    %4803 = vmatpush.bf16.xpose.msra.mxu0 %v3265
    %4804 = vmatpush.bf16.xpose.msra.mxu0 %v3201
    %4805 = vmatpush.bf16.xpose.msra.mxu0 %v3137
    %4806 = vmatpush.bf16.xpose.msra.mxu0 %v3073
    %4807 = vmatpush.bf16.xpose.msra.mxu0 %v3009
    %4808 = vmatpush.bf16.xpose.msra.mxu0 %v2945
    %4809 = vmatpush.bf16.xpose.msra.mxu0 %v2881
    %4810 = vmatmul.bf16.gmra.mxu0 %v256
    %v4811 = vpop.f32.mrf.mxu0
    %v4812 = vadd.f32 %v4799, %v4811
    %v4813 = vpop.f32.mrf.mxu0
    %4814 = vdwg.mxu0
    %4815 = vmatpush.bf16.xpose.msra.mxu0 %v3330
    %4816 = vmatpush.bf16.xpose.msra.mxu0 %v3266
    %4817 = vmatpush.bf16.xpose.msra.mxu0 %v3202
    %4818 = vmatpush.bf16.xpose.msra.mxu0 %v3138
    %4819 = vmatpush.bf16.xpose.msra.mxu0 %v3074
    %4820 = vmatpush.bf16.xpose.msra.mxu0 %v3010
    %4821 = vmatpush.bf16.xpose.msra.mxu0 %v2946
    %4822 = vmatpush.bf16.xpose.msra.mxu0 %v2882
    %4823 = vmatmul.bf16.gmra.mxu0 %v257
    %v4824 = vpop.f32.mrf.mxu0
    %v4825 = vadd.f32 %v4812, %v4824
    %v4826 = vpop.f32.mrf.mxu0
    %4827 = vdwg.mxu0
    %4828 = vmatpush.bf16.xpose.msra.mxu0 %v3331
    %4829 = vmatpush.bf16.xpose.msra.mxu0 %v3267
    %4830 = vmatpush.bf16.xpose.msra.mxu0 %v3203
    %4831 = vmatpush.bf16.xpose.msra.mxu0 %v3139
    %4832 = vmatpush.bf16.xpose.msra.mxu0 %v3075
    %4833 = vmatpush.bf16.xpose.msra.mxu0 %v3011
    %4834 = vmatpush.bf16.xpose.msra.mxu0 %v2947
    %4835 = vmatpush.bf16.xpose.msra.mxu0 %v2883
    %4836 = vmatmul.bf16.gmra.mxu0 %v258
    %v4837 = vpop.f32.mrf.mxu0
    %v4838 = vadd.f32 %v4825, %v4837
    %v4839 = vpop.f32.mrf.mxu0
    %4840 = vdwg.mxu0
    %4841 = vmatpush.bf16.xpose.msra.mxu0 %v3332
    %4842 = vmatpush.bf16.xpose.msra.mxu0 %v3268
    %4843 = vmatpush.bf16.xpose.msra.mxu0 %v3204
    %4844 = vmatpush.bf16.xpose.msra.mxu0 %v3140
    %4845 = vmatpush.bf16.xpose.msra.mxu0 %v3076
    %4846 = vmatpush.bf16.xpose.msra.mxu0 %v3012
    %4847 = vmatpush.bf16.xpose.msra.mxu0 %v2948
    %4848 = vmatpush.bf16.xpose.msra.mxu0 %v2884
    %4849 = vmatmul.bf16.gmra.mxu0 %v259
    %v4850 = vpop.f32.mrf.mxu0
    %v4851 = vadd.f32 %v4838, %v4850
    %v4852 = vpop.f32.mrf.mxu0
    %4853 = vdwg.mxu0
    %4854 = vmatpush.bf16.xpose.msra.mxu0 %v3333
    %4855 = vmatpush.bf16.xpose.msra.mxu0 %v3269
    %4856 = vmatpush.bf16.xpose.msra.mxu0 %v3205
    %4857 = vmatpush.bf16.xpose.msra.mxu0 %v3141
    %4858 = vmatpush.bf16.xpose.msra.mxu0 %v3077
    %4859 = vmatpush.bf16.xpose.msra.mxu0 %v3013
    %4860 = vmatpush.bf16.xpose.msra.mxu0 %v2949
    %4861 = vmatpush.bf16.xpose.msra.mxu0 %v2885
    %4862 = vmatmul.bf16.gmra.mxu0 %v260
    %v4863 = vpop.f32.mrf.mxu0
    %v4864 = vadd.f32 %v4851, %v4863
    %v4865 = vpop.f32.mrf.mxu0
    %4866 = vdwg.mxu0
    %4867 = vmatpush.bf16.xpose.msra.mxu0 %v3334
    %4868 = vmatpush.bf16.xpose.msra.mxu0 %v3270
    %4869 = vmatpush.bf16.xpose.msra.mxu0 %v3206
    %4870 = vmatpush.bf16.xpose.msra.mxu0 %v3142
    %4871 = vmatpush.bf16.xpose.msra.mxu0 %v3078
    %4872 = vmatpush.bf16.xpose.msra.mxu0 %v3014
    %4873 = vmatpush.bf16.xpose.msra.mxu0 %v2950
    %4874 = vmatpush.bf16.xpose.msra.mxu0 %v2886
    %4875 = vmatmul.bf16.gmra.mxu0 %v261
    %v4876 = vpop.f32.mrf.mxu0
    %v4877 = vadd.f32 %v4864, %v4876
    %v4878 = vpop.f32.mrf.mxu0
    %4879 = vdwg.mxu0
    %4880 = vmatpush.bf16.xpose.msra.mxu0 %v3335
    %4881 = vmatpush.bf16.xpose.msra.mxu0 %v3271
    %4882 = vmatpush.bf16.xpose.msra.mxu0 %v3207
    %4883 = vmatpush.bf16.xpose.msra.mxu0 %v3143
    %4884 = vmatpush.bf16.xpose.msra.mxu0 %v3079
    %4885 = vmatpush.bf16.xpose.msra.mxu0 %v3015
    %4886 = vmatpush.bf16.xpose.msra.mxu0 %v2951
    %4887 = vmatpush.bf16.xpose.msra.mxu0 %v2887
    %4888 = vmatmul.bf16.gmra.mxu0 %v262
    %v4889 = vpop.f32.mrf.mxu0
    %v4890 = vadd.f32 %v4877, %v4889
    %v4891 = vpop.f32.mrf.mxu0
    %4892 = vdwg.mxu0
    %4893 = vmatpush.bf16.xpose.msra.mxu0 %v3336
    %4894 = vmatpush.bf16.xpose.msra.mxu0 %v3272
    %4895 = vmatpush.bf16.xpose.msra.mxu0 %v3208
    %4896 = vmatpush.bf16.xpose.msra.mxu0 %v3144
    %4897 = vmatpush.bf16.xpose.msra.mxu0 %v3080
    %4898 = vmatpush.bf16.xpose.msra.mxu0 %v3016
    %4899 = vmatpush.bf16.xpose.msra.mxu0 %v2952
    %4900 = vmatpush.bf16.xpose.msra.mxu0 %v2888
    %4901 = vmatmul.bf16.gmra.mxu0 %v263
    %v4902 = vpop.f32.mrf.mxu0
    %v4903 = vadd.f32 %v4890, %v4902
    %v4904 = vpop.f32.mrf.mxu0
    %4905 = vdwg.mxu0
    %4906 = vmatpush.bf16.xpose.msra.mxu0 %v3337
    %4907 = vmatpush.bf16.xpose.msra.mxu0 %v3273
    %4908 = vmatpush.bf16.xpose.msra.mxu0 %v3209
    %4909 = vmatpush.bf16.xpose.msra.mxu0 %v3145
    %4910 = vmatpush.bf16.xpose.msra.mxu0 %v3081
    %4911 = vmatpush.bf16.xpose.msra.mxu0 %v3017
    %4912 = vmatpush.bf16.xpose.msra.mxu0 %v2953
    %4913 = vmatpush.bf16.xpose.msra.mxu0 %v2889
    %4914 = vmatmul.bf16.gmra.mxu0 %v264
    %v4915 = vpop.f32.mrf.mxu0
    %v4916 = vadd.f32 %v4903, %v4915
    %v4917 = vpop.f32.mrf.mxu0
    %4918 = vdwg.mxu0
    %4919 = vmatpush.bf16.xpose.msra.mxu0 %v3338
    %4920 = vmatpush.bf16.xpose.msra.mxu0 %v3274
    %4921 = vmatpush.bf16.xpose.msra.mxu0 %v3210
    %4922 = vmatpush.bf16.xpose.msra.mxu0 %v3146
    %4923 = vmatpush.bf16.xpose.msra.mxu0 %v3082
    %4924 = vmatpush.bf16.xpose.msra.mxu0 %v3018
    %4925 = vmatpush.bf16.xpose.msra.mxu0 %v2954
    %4926 = vmatpush.bf16.xpose.msra.mxu0 %v2890
    %4927 = vmatmul.bf16.gmra.mxu0 %v265
    %v4928 = vpop.f32.mrf.mxu0
    %v4929 = vadd.f32 %v4916, %v4928
    %v4930 = vpop.f32.mrf.mxu0
    %4931 = vdwg.mxu0
    %4932 = vmatpush.bf16.xpose.msra.mxu0 %v3339
    %4933 = vmatpush.bf16.xpose.msra.mxu0 %v3275
    %4934 = vmatpush.bf16.xpose.msra.mxu0 %v3211
    %4935 = vmatpush.bf16.xpose.msra.mxu0 %v3147
    %4936 = vmatpush.bf16.xpose.msra.mxu0 %v3083
    %4937 = vmatpush.bf16.xpose.msra.mxu0 %v3019
    %4938 = vmatpush.bf16.xpose.msra.mxu0 %v2955
    %4939 = vmatpush.bf16.xpose.msra.mxu0 %v2891
    %4940 = vmatmul.bf16.gmra.mxu0 %v266
    %v4941 = vpop.f32.mrf.mxu0
    %v4942 = vadd.f32 %v4929, %v4941
    %v4943 = vpop.f32.mrf.mxu0
    %4944 = vdwg.mxu0
    %4945 = vmatpush.bf16.xpose.msra.mxu0 0
    %4946 = vmatpush.bf16.xpose.msra.mxu0 0
    %4947 = vmatpush.bf16.xpose.msra.mxu0 0
    %4948 = vmatpush.bf16.xpose.msra.mxu0 0
    %4949 = vmatpush.bf16.xpose.msra.mxu0 0
    %4950 = vmatpush.bf16.xpose.msra.mxu0 0
    %4951 = vmatpush.bf16.xpose.msra.mxu0 %v3404
    %4952 = vmatpush.bf16.xpose.msra.mxu0 %v3340
    %4953 = vmatmul.bf16.gmra.mxu0 %v203
    %v4954 = vpop.f32.mrf.mxu0
    %v4955 = vadd.f32 %v4110, %v4954
    %v4956 = vpop.f32.mrf.mxu0
    %4957 = vdwg.mxu0
    %4958 = vmatpush.bf16.xpose.msra.mxu0 0
    %4959 = vmatpush.bf16.xpose.msra.mxu0 0
    %4960 = vmatpush.bf16.xpose.msra.mxu0 0
    %4961 = vmatpush.bf16.xpose.msra.mxu0 0
    %4962 = vmatpush.bf16.xpose.msra.mxu0 0
    %4963 = vmatpush.bf16.xpose.msra.mxu0 0
    %4964 = vmatpush.bf16.xpose.msra.mxu0 %v3405
    %4965 = vmatpush.bf16.xpose.msra.mxu0 %v3341
    %4966 = vmatmul.bf16.gmra.mxu0 %v204
    %v4967 = vpop.f32.mrf.mxu0
    %v4968 = vadd.f32 %v4955, %v4967
    %v4969 = vpop.f32.mrf.mxu0
    %4970 = vdwg.mxu0
    %4971 = vmatpush.bf16.xpose.msra.mxu0 0
    %4972 = vmatpush.bf16.xpose.msra.mxu0 0
    %4973 = vmatpush.bf16.xpose.msra.mxu0 0
    %4974 = vmatpush.bf16.xpose.msra.mxu0 0
    %4975 = vmatpush.bf16.xpose.msra.mxu0 0
    %4976 = vmatpush.bf16.xpose.msra.mxu0 0
    %4977 = vmatpush.bf16.xpose.msra.mxu0 %v3406
    %4978 = vmatpush.bf16.xpose.msra.mxu0 %v3342
    %4979 = vmatmul.bf16.gmra.mxu0 %v205
    %v4980 = vpop.f32.mrf.mxu0
    %v4981 = vadd.f32 %v4968, %v4980
    %v4982 = vpop.f32.mrf.mxu0
    %4983 = vdwg.mxu0
    %4984 = vmatpush.bf16.xpose.msra.mxu0 0
    %4985 = vmatpush.bf16.xpose.msra.mxu0 0
    %4986 = vmatpush.bf16.xpose.msra.mxu0 0
    %4987 = vmatpush.bf16.xpose.msra.mxu0 0
    %4988 = vmatpush.bf16.xpose.msra.mxu0 0
    %4989 = vmatpush.bf16.xpose.msra.mxu0 0
    %4990 = vmatpush.bf16.xpose.msra.mxu0 %v3407
    %4991 = vmatpush.bf16.xpose.msra.mxu0 %v3343
    %4992 = vmatmul.bf16.gmra.mxu0 %v206
    %v4993 = vpop.f32.mrf.mxu0
    %v4994 = vadd.f32 %v4981, %v4993
    %v4995 = vpop.f32.mrf.mxu0
    %4996 = vdwg.mxu0
    %4997 = vmatpush.bf16.xpose.msra.mxu0 0
    %4998 = vmatpush.bf16.xpose.msra.mxu0 0
    %4999 = vmatpush.bf16.xpose.msra.mxu0 0
    %5000 = vmatpush.bf16.xpose.msra.mxu0 0
    %5001 = vmatpush.bf16.xpose.msra.mxu0 0
    %5002 = vmatpush.bf16.xpose.msra.mxu0 0
    %5003 = vmatpush.bf16.xpose.msra.mxu0 %v3408
    %5004 = vmatpush.bf16.xpose.msra.mxu0 %v3344
    %5005 = vmatmul.bf16.gmra.mxu0 %v207
    %v5006 = vpop.f32.mrf.mxu0
    %v5007 = vadd.f32 %v4994, %v5006
    %v5008 = vpop.f32.mrf.mxu0
    %5009 = vdwg.mxu0
    %5010 = vmatpush.bf16.xpose.msra.mxu0 0
    %5011 = vmatpush.bf16.xpose.msra.mxu0 0
    %5012 = vmatpush.bf16.xpose.msra.mxu0 0
    %5013 = vmatpush.bf16.xpose.msra.mxu0 0
    %5014 = vmatpush.bf16.xpose.msra.mxu0 0
    %5015 = vmatpush.bf16.xpose.msra.mxu0 0
    %5016 = vmatpush.bf16.xpose.msra.mxu0 %v3409
    %5017 = vmatpush.bf16.xpose.msra.mxu0 %v3345
    %5018 = vmatmul.bf16.gmra.mxu0 %v208
    %v5019 = vpop.f32.mrf.mxu0
    %v5020 = vadd.f32 %v5007, %v5019
    %v5021 = vpop.f32.mrf.mxu0
    %5022 = vdwg.mxu0
    %5023 = vmatpush.bf16.xpose.msra.mxu0 0
    %5024 = vmatpush.bf16.xpose.msra.mxu0 0
    %5025 = vmatpush.bf16.xpose.msra.mxu0 0
    %5026 = vmatpush.bf16.xpose.msra.mxu0 0
    %5027 = vmatpush.bf16.xpose.msra.mxu0 0
    %5028 = vmatpush.bf16.xpose.msra.mxu0 0
    %5029 = vmatpush.bf16.xpose.msra.mxu0 %v3410
    %5030 = vmatpush.bf16.xpose.msra.mxu0 %v3346
    %5031 = vmatmul.bf16.gmra.mxu0 %v209
    %v5032 = vpop.f32.mrf.mxu0
    %v5033 = vadd.f32 %v5020, %v5032
    %v5034 = vpop.f32.mrf.mxu0
    %5035 = vdwg.mxu0
    %5036 = vmatpush.bf16.xpose.msra.mxu0 0
    %5037 = vmatpush.bf16.xpose.msra.mxu0 0
    %5038 = vmatpush.bf16.xpose.msra.mxu0 0
    %5039 = vmatpush.bf16.xpose.msra.mxu0 0
    %5040 = vmatpush.bf16.xpose.msra.mxu0 0
    %5041 = vmatpush.bf16.xpose.msra.mxu0 0
    %5042 = vmatpush.bf16.xpose.msra.mxu0 %v3411
    %5043 = vmatpush.bf16.xpose.msra.mxu0 %v3347
    %5044 = vmatmul.bf16.gmra.mxu0 %v210
    %v5045 = vpop.f32.mrf.mxu0
    %v5046 = vadd.f32 %v5033, %v5045
    %v5047 = vpop.f32.mrf.mxu0
    %5048 = vdwg.mxu0
    %5049 = vmatpush.bf16.xpose.msra.mxu0 0
    %5050 = vmatpush.bf16.xpose.msra.mxu0 0
    %5051 = vmatpush.bf16.xpose.msra.mxu0 0
    %5052 = vmatpush.bf16.xpose.msra.mxu0 0
    %5053 = vmatpush.bf16.xpose.msra.mxu0 0
    %5054 = vmatpush.bf16.xpose.msra.mxu0 0
    %5055 = vmatpush.bf16.xpose.msra.mxu0 %v3412
    %5056 = vmatpush.bf16.xpose.msra.mxu0 %v3348
    %5057 = vmatmul.bf16.gmra.mxu0 %v211
    %v5058 = vpop.f32.mrf.mxu0
    %v5059 = vadd.f32 %v5046, %v5058
    %v5060 = vpop.f32.mrf.mxu0
    %5061 = vdwg.mxu0
    %5062 = vmatpush.bf16.xpose.msra.mxu0 0
    %5063 = vmatpush.bf16.xpose.msra.mxu0 0
    %5064 = vmatpush.bf16.xpose.msra.mxu0 0
    %5065 = vmatpush.bf16.xpose.msra.mxu0 0
    %5066 = vmatpush.bf16.xpose.msra.mxu0 0
    %5067 = vmatpush.bf16.xpose.msra.mxu0 0
    %5068 = vmatpush.bf16.xpose.msra.mxu0 %v3413
    %5069 = vmatpush.bf16.xpose.msra.mxu0 %v3349
    %5070 = vmatmul.bf16.gmra.mxu0 %v212
    %v5071 = vpop.f32.mrf.mxu0
    %v5072 = vadd.f32 %v5059, %v5071
    %v5073 = vpop.f32.mrf.mxu0
    %5074 = vdwg.mxu0
    %5075 = vmatpush.bf16.xpose.msra.mxu0 0
    %5076 = vmatpush.bf16.xpose.msra.mxu0 0
    %5077 = vmatpush.bf16.xpose.msra.mxu0 0
    %5078 = vmatpush.bf16.xpose.msra.mxu0 0
    %5079 = vmatpush.bf16.xpose.msra.mxu0 0
    %5080 = vmatpush.bf16.xpose.msra.mxu0 0
    %5081 = vmatpush.bf16.xpose.msra.mxu0 %v3414
    %5082 = vmatpush.bf16.xpose.msra.mxu0 %v3350
    %5083 = vmatmul.bf16.gmra.mxu0 %v213
    %v5084 = vpop.f32.mrf.mxu0
    %v5085 = vadd.f32 %v5072, %v5084
    %v5086 = vpop.f32.mrf.mxu0
    %5087 = vdwg.mxu0
    %5088 = vmatpush.bf16.xpose.msra.mxu0 0
    %5089 = vmatpush.bf16.xpose.msra.mxu0 0
    %5090 = vmatpush.bf16.xpose.msra.mxu0 0
    %5091 = vmatpush.bf16.xpose.msra.mxu0 0
    %5092 = vmatpush.bf16.xpose.msra.mxu0 0
    %5093 = vmatpush.bf16.xpose.msra.mxu0 0
    %5094 = vmatpush.bf16.xpose.msra.mxu0 %v3415
    %5095 = vmatpush.bf16.xpose.msra.mxu0 %v3351
    %5096 = vmatmul.bf16.gmra.mxu0 %v214
    %v5097 = vpop.f32.mrf.mxu0
    %v5098 = vadd.f32 %v5085, %v5097
    %v5099 = vpop.f32.mrf.mxu0
    %5100 = vdwg.mxu0
    %5101 = vmatpush.bf16.xpose.msra.mxu0 0
    %5102 = vmatpush.bf16.xpose.msra.mxu0 0
    %5103 = vmatpush.bf16.xpose.msra.mxu0 0
    %5104 = vmatpush.bf16.xpose.msra.mxu0 0
    %5105 = vmatpush.bf16.xpose.msra.mxu0 0
    %5106 = vmatpush.bf16.xpose.msra.mxu0 0
    %5107 = vmatpush.bf16.xpose.msra.mxu0 %v3416
    %5108 = vmatpush.bf16.xpose.msra.mxu0 %v3352
    %5109 = vmatmul.bf16.gmra.mxu0 %v215
    %v5110 = vpop.f32.mrf.mxu0
    %v5111 = vadd.f32 %v5098, %v5110
    %v5112 = vpop.f32.mrf.mxu0
    %5113 = vdwg.mxu0
    %5114 = vmatpush.bf16.xpose.msra.mxu0 0
    %5115 = vmatpush.bf16.xpose.msra.mxu0 0
    %5116 = vmatpush.bf16.xpose.msra.mxu0 0
    %5117 = vmatpush.bf16.xpose.msra.mxu0 0
    %5118 = vmatpush.bf16.xpose.msra.mxu0 0
    %5119 = vmatpush.bf16.xpose.msra.mxu0 0
    %5120 = vmatpush.bf16.xpose.msra.mxu0 %v3417
    %5121 = vmatpush.bf16.xpose.msra.mxu0 %v3353
    %5122 = vmatmul.bf16.gmra.mxu0 %v216
    %v5123 = vpop.f32.mrf.mxu0
    %v5124 = vadd.f32 %v5111, %v5123
    %v5125 = vpop.f32.mrf.mxu0
    %5126 = vdwg.mxu0
    %5127 = vmatpush.bf16.xpose.msra.mxu0 0
    %5128 = vmatpush.bf16.xpose.msra.mxu0 0
    %5129 = vmatpush.bf16.xpose.msra.mxu0 0
    %5130 = vmatpush.bf16.xpose.msra.mxu0 0
    %5131 = vmatpush.bf16.xpose.msra.mxu0 0
    %5132 = vmatpush.bf16.xpose.msra.mxu0 0
    %5133 = vmatpush.bf16.xpose.msra.mxu0 %v3418
    %5134 = vmatpush.bf16.xpose.msra.mxu0 %v3354
    %5135 = vmatmul.bf16.gmra.mxu0 %v217
    %v5136 = vpop.f32.mrf.mxu0
    %v5137 = vadd.f32 %v5124, %v5136
    %v5138 = vpop.f32.mrf.mxu0
    %5139 = vdwg.mxu0
    %5140 = vmatpush.bf16.xpose.msra.mxu0 0
    %5141 = vmatpush.bf16.xpose.msra.mxu0 0
    %5142 = vmatpush.bf16.xpose.msra.mxu0 0
    %5143 = vmatpush.bf16.xpose.msra.mxu0 0
    %5144 = vmatpush.bf16.xpose.msra.mxu0 0
    %5145 = vmatpush.bf16.xpose.msra.mxu0 0
    %5146 = vmatpush.bf16.xpose.msra.mxu0 %v3419
    %5147 = vmatpush.bf16.xpose.msra.mxu0 %v3355
    %5148 = vmatmul.bf16.gmra.mxu0 %v218
    %v5149 = vpop.f32.mrf.mxu0
    %v5150 = vadd.f32 %v5137, %v5149
    %v5151 = vpop.f32.mrf.mxu0
    %5152 = vdwg.mxu0
    %5153 = vmatpush.bf16.xpose.msra.mxu0 0
    %5154 = vmatpush.bf16.xpose.msra.mxu0 0
    %5155 = vmatpush.bf16.xpose.msra.mxu0 0
    %5156 = vmatpush.bf16.xpose.msra.mxu0 0
    %5157 = vmatpush.bf16.xpose.msra.mxu0 0
    %5158 = vmatpush.bf16.xpose.msra.mxu0 0
    %5159 = vmatpush.bf16.xpose.msra.mxu0 %v3420
    %5160 = vmatpush.bf16.xpose.msra.mxu0 %v3356
    %5161 = vmatmul.bf16.gmra.mxu0 %v219
    %v5162 = vpop.f32.mrf.mxu0
    %v5163 = vadd.f32 %v5150, %v5162
    %v5164 = vpop.f32.mrf.mxu0
    %5165 = vdwg.mxu0
    %5166 = vmatpush.bf16.xpose.msra.mxu0 0
    %5167 = vmatpush.bf16.xpose.msra.mxu0 0
    %5168 = vmatpush.bf16.xpose.msra.mxu0 0
    %5169 = vmatpush.bf16.xpose.msra.mxu0 0
    %5170 = vmatpush.bf16.xpose.msra.mxu0 0
    %5171 = vmatpush.bf16.xpose.msra.mxu0 0
    %5172 = vmatpush.bf16.xpose.msra.mxu0 %v3421
    %5173 = vmatpush.bf16.xpose.msra.mxu0 %v3357
    %5174 = vmatmul.bf16.gmra.mxu0 %v220
    %v5175 = vpop.f32.mrf.mxu0
    %v5176 = vadd.f32 %v5163, %v5175
    %v5177 = vpop.f32.mrf.mxu0
    %5178 = vdwg.mxu0
    %5179 = vmatpush.bf16.xpose.msra.mxu0 0
    %5180 = vmatpush.bf16.xpose.msra.mxu0 0
    %5181 = vmatpush.bf16.xpose.msra.mxu0 0
    %5182 = vmatpush.bf16.xpose.msra.mxu0 0
    %5183 = vmatpush.bf16.xpose.msra.mxu0 0
    %5184 = vmatpush.bf16.xpose.msra.mxu0 0
    %5185 = vmatpush.bf16.xpose.msra.mxu0 %v3422
    %5186 = vmatpush.bf16.xpose.msra.mxu0 %v3358
    %5187 = vmatmul.bf16.gmra.mxu0 %v221
    %v5188 = vpop.f32.mrf.mxu0
    %v5189 = vadd.f32 %v5176, %v5188
    %v5190 = vpop.f32.mrf.mxu0
    %5191 = vdwg.mxu0
    %5192 = vmatpush.bf16.xpose.msra.mxu0 0
    %5193 = vmatpush.bf16.xpose.msra.mxu0 0
    %5194 = vmatpush.bf16.xpose.msra.mxu0 0
    %5195 = vmatpush.bf16.xpose.msra.mxu0 0
    %5196 = vmatpush.bf16.xpose.msra.mxu0 0
    %5197 = vmatpush.bf16.xpose.msra.mxu0 0
    %5198 = vmatpush.bf16.xpose.msra.mxu0 %v3423
    %5199 = vmatpush.bf16.xpose.msra.mxu0 %v3359
    %5200 = vmatmul.bf16.gmra.mxu0 %v222
    %v5201 = vpop.f32.mrf.mxu0
    %v5202 = vadd.f32 %v5189, %v5201
    %v5203 = vpop.f32.mrf.mxu0
    %5204 = vdwg.mxu0
    %5205 = vmatpush.bf16.xpose.msra.mxu0 0
    %5206 = vmatpush.bf16.xpose.msra.mxu0 0
    %5207 = vmatpush.bf16.xpose.msra.mxu0 0
    %5208 = vmatpush.bf16.xpose.msra.mxu0 0
    %5209 = vmatpush.bf16.xpose.msra.mxu0 0
    %5210 = vmatpush.bf16.xpose.msra.mxu0 0
    %5211 = vmatpush.bf16.xpose.msra.mxu0 %v3424
    %5212 = vmatpush.bf16.xpose.msra.mxu0 %v3360
    %5213 = vmatmul.bf16.gmra.mxu0 %v223
    %v5214 = vpop.f32.mrf.mxu0
    %v5215 = vadd.f32 %v5202, %v5214
    %v5216 = vpop.f32.mrf.mxu0
    %5217 = vdwg.mxu0
    %5218 = vmatpush.bf16.xpose.msra.mxu0 0
    %5219 = vmatpush.bf16.xpose.msra.mxu0 0
    %5220 = vmatpush.bf16.xpose.msra.mxu0 0
    %5221 = vmatpush.bf16.xpose.msra.mxu0 0
    %5222 = vmatpush.bf16.xpose.msra.mxu0 0
    %5223 = vmatpush.bf16.xpose.msra.mxu0 0
    %5224 = vmatpush.bf16.xpose.msra.mxu0 %v3425
    %5225 = vmatpush.bf16.xpose.msra.mxu0 %v3361
    %5226 = vmatmul.bf16.gmra.mxu0 %v224
    %v5227 = vpop.f32.mrf.mxu0
    %v5228 = vadd.f32 %v5215, %v5227
    %v5229 = vpop.f32.mrf.mxu0
    %5230 = vdwg.mxu0
    %5231 = vmatpush.bf16.xpose.msra.mxu0 0
    %5232 = vmatpush.bf16.xpose.msra.mxu0 0
    %5233 = vmatpush.bf16.xpose.msra.mxu0 0
    %5234 = vmatpush.bf16.xpose.msra.mxu0 0
    %5235 = vmatpush.bf16.xpose.msra.mxu0 0
    %5236 = vmatpush.bf16.xpose.msra.mxu0 0
    %5237 = vmatpush.bf16.xpose.msra.mxu0 %v3426
    %5238 = vmatpush.bf16.xpose.msra.mxu0 %v3362
    %5239 = vmatmul.bf16.gmra.mxu0 %v225
    %v5240 = vpop.f32.mrf.mxu0
    %v5241 = vadd.f32 %v5228, %v5240
    %v5242 = vpop.f32.mrf.mxu0
    %5243 = vdwg.mxu0
    %5244 = vmatpush.bf16.xpose.msra.mxu0 0
    %5245 = vmatpush.bf16.xpose.msra.mxu0 0
    %5246 = vmatpush.bf16.xpose.msra.mxu0 0
    %5247 = vmatpush.bf16.xpose.msra.mxu0 0
    %5248 = vmatpush.bf16.xpose.msra.mxu0 0
    %5249 = vmatpush.bf16.xpose.msra.mxu0 0
    %5250 = vmatpush.bf16.xpose.msra.mxu0 %v3427
    %5251 = vmatpush.bf16.xpose.msra.mxu0 %v3363
    %5252 = vmatmul.bf16.gmra.mxu0 %v226
    %v5253 = vpop.f32.mrf.mxu0
    %v5254 = vadd.f32 %v5241, %v5253
    %v5255 = vpop.f32.mrf.mxu0
    %5256 = vdwg.mxu0
    %5257 = vmatpush.bf16.xpose.msra.mxu0 0
    %5258 = vmatpush.bf16.xpose.msra.mxu0 0
    %5259 = vmatpush.bf16.xpose.msra.mxu0 0
    %5260 = vmatpush.bf16.xpose.msra.mxu0 0
    %5261 = vmatpush.bf16.xpose.msra.mxu0 0
    %5262 = vmatpush.bf16.xpose.msra.mxu0 0
    %5263 = vmatpush.bf16.xpose.msra.mxu0 %v3428
    %5264 = vmatpush.bf16.xpose.msra.mxu0 %v3364
    %5265 = vmatmul.bf16.gmra.mxu0 %v227
    %v5266 = vpop.f32.mrf.mxu0
    %v5267 = vadd.f32 %v5254, %v5266
    %v5268 = vpop.f32.mrf.mxu0
    %5269 = vdwg.mxu0
    %5270 = vmatpush.bf16.xpose.msra.mxu0 0
    %5271 = vmatpush.bf16.xpose.msra.mxu0 0
    %5272 = vmatpush.bf16.xpose.msra.mxu0 0
    %5273 = vmatpush.bf16.xpose.msra.mxu0 0
    %5274 = vmatpush.bf16.xpose.msra.mxu0 0
    %5275 = vmatpush.bf16.xpose.msra.mxu0 0
    %5276 = vmatpush.bf16.xpose.msra.mxu0 %v3429
    %5277 = vmatpush.bf16.xpose.msra.mxu0 %v3365
    %5278 = vmatmul.bf16.gmra.mxu0 %v228
    %v5279 = vpop.f32.mrf.mxu0
    %v5280 = vadd.f32 %v5267, %v5279
    %v5281 = vpop.f32.mrf.mxu0
    %5282 = vdwg.mxu0
    %5283 = vmatpush.bf16.xpose.msra.mxu0 0
    %5284 = vmatpush.bf16.xpose.msra.mxu0 0
    %5285 = vmatpush.bf16.xpose.msra.mxu0 0
    %5286 = vmatpush.bf16.xpose.msra.mxu0 0
    %5287 = vmatpush.bf16.xpose.msra.mxu0 0
    %5288 = vmatpush.bf16.xpose.msra.mxu0 0
    %5289 = vmatpush.bf16.xpose.msra.mxu0 %v3430
    %5290 = vmatpush.bf16.xpose.msra.mxu0 %v3366
    %5291 = vmatmul.bf16.gmra.mxu0 %v229
    %v5292 = vpop.f32.mrf.mxu0
    %v5293 = vadd.f32 %v5280, %v5292
    %v5294 = vpop.f32.mrf.mxu0
    %5295 = vdwg.mxu0
    %5296 = vmatpush.bf16.xpose.msra.mxu0 0
    %5297 = vmatpush.bf16.xpose.msra.mxu0 0
    %5298 = vmatpush.bf16.xpose.msra.mxu0 0
    %5299 = vmatpush.bf16.xpose.msra.mxu0 0
    %5300 = vmatpush.bf16.xpose.msra.mxu0 0
    %5301 = vmatpush.bf16.xpose.msra.mxu0 0
    %5302 = vmatpush.bf16.xpose.msra.mxu0 %v3431
    %5303 = vmatpush.bf16.xpose.msra.mxu0 %v3367
    %5304 = vmatmul.bf16.gmra.mxu0 %v230
    %v5305 = vpop.f32.mrf.mxu0
    %v5306 = vadd.f32 %v5293, %v5305
    %v5307 = vpop.f32.mrf.mxu0
    %5308 = vdwg.mxu0
    %5309 = vmatpush.bf16.xpose.msra.mxu0 0
    %5310 = vmatpush.bf16.xpose.msra.mxu0 0
    %5311 = vmatpush.bf16.xpose.msra.mxu0 0
    %5312 = vmatpush.bf16.xpose.msra.mxu0 0
    %5313 = vmatpush.bf16.xpose.msra.mxu0 0
    %5314 = vmatpush.bf16.xpose.msra.mxu0 0
    %5315 = vmatpush.bf16.xpose.msra.mxu0 %v3432
    %5316 = vmatpush.bf16.xpose.msra.mxu0 %v3368
    %5317 = vmatmul.bf16.gmra.mxu0 %v231
    %v5318 = vpop.f32.mrf.mxu0
    %v5319 = vadd.f32 %v5306, %v5318
    %v5320 = vpop.f32.mrf.mxu0
    %5321 = vdwg.mxu0
    %5322 = vmatpush.bf16.xpose.msra.mxu0 0
    %5323 = vmatpush.bf16.xpose.msra.mxu0 0
    %5324 = vmatpush.bf16.xpose.msra.mxu0 0
    %5325 = vmatpush.bf16.xpose.msra.mxu0 0
    %5326 = vmatpush.bf16.xpose.msra.mxu0 0
    %5327 = vmatpush.bf16.xpose.msra.mxu0 0
    %5328 = vmatpush.bf16.xpose.msra.mxu0 %v3433
    %5329 = vmatpush.bf16.xpose.msra.mxu0 %v3369
    %5330 = vmatmul.bf16.gmra.mxu0 %v232
    %v5331 = vpop.f32.mrf.mxu0
    %v5332 = vadd.f32 %v5319, %v5331
    %v5333 = vpop.f32.mrf.mxu0
    %5334 = vdwg.mxu0
    %5335 = vmatpush.bf16.xpose.msra.mxu0 0
    %5336 = vmatpush.bf16.xpose.msra.mxu0 0
    %5337 = vmatpush.bf16.xpose.msra.mxu0 0
    %5338 = vmatpush.bf16.xpose.msra.mxu0 0
    %5339 = vmatpush.bf16.xpose.msra.mxu0 0
    %5340 = vmatpush.bf16.xpose.msra.mxu0 0
    %5341 = vmatpush.bf16.xpose.msra.mxu0 %v3434
    %5342 = vmatpush.bf16.xpose.msra.mxu0 %v3370
    %5343 = vmatmul.bf16.gmra.mxu0 %v233
    %v5344 = vpop.f32.mrf.mxu0
    %v5345 = vadd.f32 %v5332, %v5344
    %v5346 = vpop.f32.mrf.mxu0
    %5347 = vdwg.mxu0
    %5348 = vmatpush.bf16.xpose.msra.mxu0 0
    %5349 = vmatpush.bf16.xpose.msra.mxu0 0
    %5350 = vmatpush.bf16.xpose.msra.mxu0 0
    %5351 = vmatpush.bf16.xpose.msra.mxu0 0
    %5352 = vmatpush.bf16.xpose.msra.mxu0 0
    %5353 = vmatpush.bf16.xpose.msra.mxu0 0
    %5354 = vmatpush.bf16.xpose.msra.mxu0 %v3435
    %5355 = vmatpush.bf16.xpose.msra.mxu0 %v3371
    %5356 = vmatmul.bf16.gmra.mxu0 %v234
    %v5357 = vpop.f32.mrf.mxu0
    %v5358 = vadd.f32 %v5345, %v5357
    %v5359 = vpop.f32.mrf.mxu0
    %5360 = vdwg.mxu0
    %5361 = vmatpush.bf16.xpose.msra.mxu0 0
    %5362 = vmatpush.bf16.xpose.msra.mxu0 0
    %5363 = vmatpush.bf16.xpose.msra.mxu0 0
    %5364 = vmatpush.bf16.xpose.msra.mxu0 0
    %5365 = vmatpush.bf16.xpose.msra.mxu0 0
    %5366 = vmatpush.bf16.xpose.msra.mxu0 0
    %5367 = vmatpush.bf16.xpose.msra.mxu0 %v3436
    %5368 = vmatpush.bf16.xpose.msra.mxu0 %v3372
    %5369 = vmatmul.bf16.gmra.mxu0 %v235
    %v5370 = vpop.f32.mrf.mxu0
    %v5371 = vadd.f32 %v5358, %v5370
    %v5372 = vpop.f32.mrf.mxu0
    %5373 = vdwg.mxu0
    %5374 = vmatpush.bf16.xpose.msra.mxu0 0
    %5375 = vmatpush.bf16.xpose.msra.mxu0 0
    %5376 = vmatpush.bf16.xpose.msra.mxu0 0
    %5377 = vmatpush.bf16.xpose.msra.mxu0 0
    %5378 = vmatpush.bf16.xpose.msra.mxu0 0
    %5379 = vmatpush.bf16.xpose.msra.mxu0 0
    %5380 = vmatpush.bf16.xpose.msra.mxu0 %v3437
    %5381 = vmatpush.bf16.xpose.msra.mxu0 %v3373
    %5382 = vmatmul.bf16.gmra.mxu0 %v236
    %v5383 = vpop.f32.mrf.mxu0
    %v5384 = vadd.f32 %v5371, %v5383
    %v5385 = vpop.f32.mrf.mxu0
    %5386 = vdwg.mxu0
    %5387 = vmatpush.bf16.xpose.msra.mxu0 0
    %5388 = vmatpush.bf16.xpose.msra.mxu0 0
    %5389 = vmatpush.bf16.xpose.msra.mxu0 0
    %5390 = vmatpush.bf16.xpose.msra.mxu0 0
    %5391 = vmatpush.bf16.xpose.msra.mxu0 0
    %5392 = vmatpush.bf16.xpose.msra.mxu0 0
    %5393 = vmatpush.bf16.xpose.msra.mxu0 %v3438
    %5394 = vmatpush.bf16.xpose.msra.mxu0 %v3374
    %5395 = vmatmul.bf16.gmra.mxu0 %v237
    %v5396 = vpop.f32.mrf.mxu0
    %v5397 = vadd.f32 %v5384, %v5396
    %v5398 = vpop.f32.mrf.mxu0
    %5399 = vdwg.mxu0
    %5400 = vmatpush.bf16.xpose.msra.mxu0 0
    %5401 = vmatpush.bf16.xpose.msra.mxu0 0
    %5402 = vmatpush.bf16.xpose.msra.mxu0 0
    %5403 = vmatpush.bf16.xpose.msra.mxu0 0
    %5404 = vmatpush.bf16.xpose.msra.mxu0 0
    %5405 = vmatpush.bf16.xpose.msra.mxu0 0
    %5406 = vmatpush.bf16.xpose.msra.mxu0 %v3439
    %5407 = vmatpush.bf16.xpose.msra.mxu0 %v3375
    %5408 = vmatmul.bf16.gmra.mxu0 %v238
    %v5409 = vpop.f32.mrf.mxu0
    %v5410 = vadd.f32 %v5397, %v5409
    %v5411 = vpop.f32.mrf.mxu0
    %5412 = vdwg.mxu0
    %5413 = vmatpush.bf16.xpose.msra.mxu0 0
    %5414 = vmatpush.bf16.xpose.msra.mxu0 0
    %5415 = vmatpush.bf16.xpose.msra.mxu0 0
    %5416 = vmatpush.bf16.xpose.msra.mxu0 0
    %5417 = vmatpush.bf16.xpose.msra.mxu0 0
    %5418 = vmatpush.bf16.xpose.msra.mxu0 0
    %5419 = vmatpush.bf16.xpose.msra.mxu0 %v3440
    %5420 = vmatpush.bf16.xpose.msra.mxu0 %v3376
    %5421 = vmatmul.bf16.gmra.mxu0 %v239
    %v5422 = vpop.f32.mrf.mxu0
    %v5423 = vadd.f32 %v5410, %v5422
    %v5424 = vpop.f32.mrf.mxu0
    %5425 = vdwg.mxu0
    %5426 = vmatpush.bf16.xpose.msra.mxu0 0
    %5427 = vmatpush.bf16.xpose.msra.mxu0 0
    %5428 = vmatpush.bf16.xpose.msra.mxu0 0
    %5429 = vmatpush.bf16.xpose.msra.mxu0 0
    %5430 = vmatpush.bf16.xpose.msra.mxu0 0
    %5431 = vmatpush.bf16.xpose.msra.mxu0 0
    %5432 = vmatpush.bf16.xpose.msra.mxu0 %v3441
    %5433 = vmatpush.bf16.xpose.msra.mxu0 %v3377
    %5434 = vmatmul.bf16.gmra.mxu0 %v240
    %v5435 = vpop.f32.mrf.mxu0
    %v5436 = vadd.f32 %v5423, %v5435
    %v5437 = vpop.f32.mrf.mxu0
    %5438 = vdwg.mxu0
    %5439 = vmatpush.bf16.xpose.msra.mxu0 0
    %5440 = vmatpush.bf16.xpose.msra.mxu0 0
    %5441 = vmatpush.bf16.xpose.msra.mxu0 0
    %5442 = vmatpush.bf16.xpose.msra.mxu0 0
    %5443 = vmatpush.bf16.xpose.msra.mxu0 0
    %5444 = vmatpush.bf16.xpose.msra.mxu0 0
    %5445 = vmatpush.bf16.xpose.msra.mxu0 %v3442
    %5446 = vmatpush.bf16.xpose.msra.mxu0 %v3378
    %5447 = vmatmul.bf16.gmra.mxu0 %v241
    %v5448 = vpop.f32.mrf.mxu0
    %v5449 = vadd.f32 %v5436, %v5448
    %v5450 = vpop.f32.mrf.mxu0
    %5451 = vdwg.mxu0
    %5452 = vmatpush.bf16.xpose.msra.mxu0 0
    %5453 = vmatpush.bf16.xpose.msra.mxu0 0
    %5454 = vmatpush.bf16.xpose.msra.mxu0 0
    %5455 = vmatpush.bf16.xpose.msra.mxu0 0
    %5456 = vmatpush.bf16.xpose.msra.mxu0 0
    %5457 = vmatpush.bf16.xpose.msra.mxu0 0
    %5458 = vmatpush.bf16.xpose.msra.mxu0 %v3443
    %5459 = vmatpush.bf16.xpose.msra.mxu0 %v3379
    %5460 = vmatmul.bf16.gmra.mxu0 %v242
    %v5461 = vpop.f32.mrf.mxu0
    %v5462 = vadd.f32 %v5449, %v5461
    %v5463 = vpop.f32.mrf.mxu0
    %5464 = vdwg.mxu0
    %5465 = vmatpush.bf16.xpose.msra.mxu0 0
    %5466 = vmatpush.bf16.xpose.msra.mxu0 0
    %5467 = vmatpush.bf16.xpose.msra.mxu0 0
    %5468 = vmatpush.bf16.xpose.msra.mxu0 0
    %5469 = vmatpush.bf16.xpose.msra.mxu0 0
    %5470 = vmatpush.bf16.xpose.msra.mxu0 0
    %5471 = vmatpush.bf16.xpose.msra.mxu0 %v3444
    %5472 = vmatpush.bf16.xpose.msra.mxu0 %v3380
    %5473 = vmatmul.bf16.gmra.mxu0 %v243
    %v5474 = vpop.f32.mrf.mxu0
    %v5475 = vadd.f32 %v5462, %v5474
    %v5476 = vpop.f32.mrf.mxu0
    %5477 = vdwg.mxu0
    %5478 = vmatpush.bf16.xpose.msra.mxu0 0
    %5479 = vmatpush.bf16.xpose.msra.mxu0 0
    %5480 = vmatpush.bf16.xpose.msra.mxu0 0
    %5481 = vmatpush.bf16.xpose.msra.mxu0 0
    %5482 = vmatpush.bf16.xpose.msra.mxu0 0
    %5483 = vmatpush.bf16.xpose.msra.mxu0 0
    %5484 = vmatpush.bf16.xpose.msra.mxu0 %v3445
    %5485 = vmatpush.bf16.xpose.msra.mxu0 %v3381
    %5486 = vmatmul.bf16.gmra.mxu0 %v244
    %v5487 = vpop.f32.mrf.mxu0
    %v5488 = vadd.f32 %v5475, %v5487
    %v5489 = vpop.f32.mrf.mxu0
    %5490 = vdwg.mxu0
    %5491 = vmatpush.bf16.xpose.msra.mxu0 0
    %5492 = vmatpush.bf16.xpose.msra.mxu0 0
    %5493 = vmatpush.bf16.xpose.msra.mxu0 0
    %5494 = vmatpush.bf16.xpose.msra.mxu0 0
    %5495 = vmatpush.bf16.xpose.msra.mxu0 0
    %5496 = vmatpush.bf16.xpose.msra.mxu0 0
    %5497 = vmatpush.bf16.xpose.msra.mxu0 %v3446
    %5498 = vmatpush.bf16.xpose.msra.mxu0 %v3382
    %5499 = vmatmul.bf16.gmra.mxu0 %v245
    %v5500 = vpop.f32.mrf.mxu0
    %v5501 = vadd.f32 %v5488, %v5500
    %v5502 = vpop.f32.mrf.mxu0
    %5503 = vdwg.mxu0
    %5504 = vmatpush.bf16.xpose.msra.mxu0 0
    %5505 = vmatpush.bf16.xpose.msra.mxu0 0
    %5506 = vmatpush.bf16.xpose.msra.mxu0 0
    %5507 = vmatpush.bf16.xpose.msra.mxu0 0
    %5508 = vmatpush.bf16.xpose.msra.mxu0 0
    %5509 = vmatpush.bf16.xpose.msra.mxu0 0
    %5510 = vmatpush.bf16.xpose.msra.mxu0 %v3447
    %5511 = vmatpush.bf16.xpose.msra.mxu0 %v3383
    %5512 = vmatmul.bf16.gmra.mxu0 %v246
    %v5513 = vpop.f32.mrf.mxu0
    %v5514 = vadd.f32 %v5501, %v5513
    %v5515 = vpop.f32.mrf.mxu0
    %5516 = vdwg.mxu0
    %5517 = vmatpush.bf16.xpose.msra.mxu0 0
    %5518 = vmatpush.bf16.xpose.msra.mxu0 0
    %5519 = vmatpush.bf16.xpose.msra.mxu0 0
    %5520 = vmatpush.bf16.xpose.msra.mxu0 0
    %5521 = vmatpush.bf16.xpose.msra.mxu0 0
    %5522 = vmatpush.bf16.xpose.msra.mxu0 0
    %5523 = vmatpush.bf16.xpose.msra.mxu0 %v3448
    %5524 = vmatpush.bf16.xpose.msra.mxu0 %v3384
    %5525 = vmatmul.bf16.gmra.mxu0 %v247
    %v5526 = vpop.f32.mrf.mxu0
    %v5527 = vadd.f32 %v5514, %v5526
    %v5528 = vpop.f32.mrf.mxu0
    %5529 = vdwg.mxu0
    %5530 = vmatpush.bf16.xpose.msra.mxu0 0
    %5531 = vmatpush.bf16.xpose.msra.mxu0 0
    %5532 = vmatpush.bf16.xpose.msra.mxu0 0
    %5533 = vmatpush.bf16.xpose.msra.mxu0 0
    %5534 = vmatpush.bf16.xpose.msra.mxu0 0
    %5535 = vmatpush.bf16.xpose.msra.mxu0 0
    %5536 = vmatpush.bf16.xpose.msra.mxu0 %v3449
    %5537 = vmatpush.bf16.xpose.msra.mxu0 %v3385
    %5538 = vmatmul.bf16.gmra.mxu0 %v248
    %v5539 = vpop.f32.mrf.mxu0
    %v5540 = vadd.f32 %v5527, %v5539
    %v5541 = vpop.f32.mrf.mxu0
    %5542 = vdwg.mxu0
    %5543 = vmatpush.bf16.xpose.msra.mxu0 0
    %5544 = vmatpush.bf16.xpose.msra.mxu0 0
    %5545 = vmatpush.bf16.xpose.msra.mxu0 0
    %5546 = vmatpush.bf16.xpose.msra.mxu0 0
    %5547 = vmatpush.bf16.xpose.msra.mxu0 0
    %5548 = vmatpush.bf16.xpose.msra.mxu0 0
    %5549 = vmatpush.bf16.xpose.msra.mxu0 %v3450
    %5550 = vmatpush.bf16.xpose.msra.mxu0 %v3386
    %5551 = vmatmul.bf16.gmra.mxu0 %v249
    %v5552 = vpop.f32.mrf.mxu0
    %v5553 = vadd.f32 %v5540, %v5552
    %v5554 = vpop.f32.mrf.mxu0
    %5555 = vdwg.mxu0
    %5556 = vmatpush.bf16.xpose.msra.mxu0 0
    %5557 = vmatpush.bf16.xpose.msra.mxu0 0
    %5558 = vmatpush.bf16.xpose.msra.mxu0 0
    %5559 = vmatpush.bf16.xpose.msra.mxu0 0
    %5560 = vmatpush.bf16.xpose.msra.mxu0 0
    %5561 = vmatpush.bf16.xpose.msra.mxu0 0
    %5562 = vmatpush.bf16.xpose.msra.mxu0 %v3451
    %5563 = vmatpush.bf16.xpose.msra.mxu0 %v3387
    %5564 = vmatmul.bf16.gmra.mxu0 %v250
    %v5565 = vpop.f32.mrf.mxu0
    %v5566 = vadd.f32 %v5553, %v5565
    %v5567 = vpop.f32.mrf.mxu0
    %5568 = vdwg.mxu0
    %5569 = vmatpush.bf16.xpose.msra.mxu0 0
    %5570 = vmatpush.bf16.xpose.msra.mxu0 0
    %5571 = vmatpush.bf16.xpose.msra.mxu0 0
    %5572 = vmatpush.bf16.xpose.msra.mxu0 0
    %5573 = vmatpush.bf16.xpose.msra.mxu0 0
    %5574 = vmatpush.bf16.xpose.msra.mxu0 0
    %5575 = vmatpush.bf16.xpose.msra.mxu0 %v3452
    %5576 = vmatpush.bf16.xpose.msra.mxu0 %v3388
    %5577 = vmatmul.bf16.gmra.mxu0 %v251
    %v5578 = vpop.f32.mrf.mxu0
    %v5579 = vadd.f32 %v5566, %v5578
    %v5580 = vpop.f32.mrf.mxu0
    %5581 = vdwg.mxu0
    %5582 = vmatpush.bf16.xpose.msra.mxu0 0
    %5583 = vmatpush.bf16.xpose.msra.mxu0 0
    %5584 = vmatpush.bf16.xpose.msra.mxu0 0
    %5585 = vmatpush.bf16.xpose.msra.mxu0 0
    %5586 = vmatpush.bf16.xpose.msra.mxu0 0
    %5587 = vmatpush.bf16.xpose.msra.mxu0 0
    %5588 = vmatpush.bf16.xpose.msra.mxu0 %v3453
    %5589 = vmatpush.bf16.xpose.msra.mxu0 %v3389
    %5590 = vmatmul.bf16.gmra.mxu0 %v252
    %v5591 = vpop.f32.mrf.mxu0
    %v5592 = vadd.f32 %v5579, %v5591
    %v5593 = vpop.f32.mrf.mxu0
    %5594 = vdwg.mxu0
    %5595 = vmatpush.bf16.xpose.msra.mxu0 0
    %5596 = vmatpush.bf16.xpose.msra.mxu0 0
    %5597 = vmatpush.bf16.xpose.msra.mxu0 0
    %5598 = vmatpush.bf16.xpose.msra.mxu0 0
    %5599 = vmatpush.bf16.xpose.msra.mxu0 0
    %5600 = vmatpush.bf16.xpose.msra.mxu0 0
    %5601 = vmatpush.bf16.xpose.msra.mxu0 %v3454
    %5602 = vmatpush.bf16.xpose.msra.mxu0 %v3390
    %5603 = vmatmul.bf16.gmra.mxu0 %v253
    %v5604 = vpop.f32.mrf.mxu0
    %v5605 = vadd.f32 %v5592, %v5604
    %v5606 = vpop.f32.mrf.mxu0
    %5607 = vdwg.mxu0
    %5608 = vmatpush.bf16.xpose.msra.mxu0 0
    %5609 = vmatpush.bf16.xpose.msra.mxu0 0
    %5610 = vmatpush.bf16.xpose.msra.mxu0 0
    %5611 = vmatpush.bf16.xpose.msra.mxu0 0
    %5612 = vmatpush.bf16.xpose.msra.mxu0 0
    %5613 = vmatpush.bf16.xpose.msra.mxu0 0
    %5614 = vmatpush.bf16.xpose.msra.mxu0 %v3455
    %5615 = vmatpush.bf16.xpose.msra.mxu0 %v3391
    %5616 = vmatmul.bf16.gmra.mxu0 %v254
    %v5617 = vpop.f32.mrf.mxu0
    %v5618 = vadd.f32 %v5605, %v5617
    %v5619 = vpop.f32.mrf.mxu0
    %5620 = vdwg.mxu0
    %5621 = vmatpush.bf16.xpose.msra.mxu0 0
    %5622 = vmatpush.bf16.xpose.msra.mxu0 0
    %5623 = vmatpush.bf16.xpose.msra.mxu0 0
    %5624 = vmatpush.bf16.xpose.msra.mxu0 0
    %5625 = vmatpush.bf16.xpose.msra.mxu0 0
    %5626 = vmatpush.bf16.xpose.msra.mxu0 0
    %5627 = vmatpush.bf16.xpose.msra.mxu0 %v3456
    %5628 = vmatpush.bf16.xpose.msra.mxu0 %v3392
    %5629 = vmatmul.bf16.gmra.mxu0 %v255
    %v5630 = vpop.f32.mrf.mxu0
    %v5631 = vadd.f32 %v5618, %v5630
    %v5632 = vpop.f32.mrf.mxu0
    %5633 = vdwg.mxu0
    %5634 = vmatpush.bf16.xpose.msra.mxu0 0
    %5635 = vmatpush.bf16.xpose.msra.mxu0 0
    %5636 = vmatpush.bf16.xpose.msra.mxu0 0
    %5637 = vmatpush.bf16.xpose.msra.mxu0 0
    %5638 = vmatpush.bf16.xpose.msra.mxu0 0
    %5639 = vmatpush.bf16.xpose.msra.mxu0 0
    %5640 = vmatpush.bf16.xpose.msra.mxu0 %v3457
    %5641 = vmatpush.bf16.xpose.msra.mxu0 %v3393
    %5642 = vmatmul.bf16.gmra.mxu0 %v256
    %v5643 = vpop.f32.mrf.mxu0
    %v5644 = vadd.f32 %v5631, %v5643
    %v5645 = vpop.f32.mrf.mxu0
    %5646 = vdwg.mxu0
    %5647 = vmatpush.bf16.xpose.msra.mxu0 0
    %5648 = vmatpush.bf16.xpose.msra.mxu0 0
    %5649 = vmatpush.bf16.xpose.msra.mxu0 0
    %5650 = vmatpush.bf16.xpose.msra.mxu0 0
    %5651 = vmatpush.bf16.xpose.msra.mxu0 0
    %5652 = vmatpush.bf16.xpose.msra.mxu0 0
    %5653 = vmatpush.bf16.xpose.msra.mxu0 %v3458
    %5654 = vmatpush.bf16.xpose.msra.mxu0 %v3394
    %5655 = vmatmul.bf16.gmra.mxu0 %v257
    %v5656 = vpop.f32.mrf.mxu0
    %v5657 = vadd.f32 %v5644, %v5656
    %v5658 = vpop.f32.mrf.mxu0
    %5659 = vdwg.mxu0
    %5660 = vmatpush.bf16.xpose.msra.mxu0 0
    %5661 = vmatpush.bf16.xpose.msra.mxu0 0
    %5662 = vmatpush.bf16.xpose.msra.mxu0 0
    %5663 = vmatpush.bf16.xpose.msra.mxu0 0
    %5664 = vmatpush.bf16.xpose.msra.mxu0 0
    %5665 = vmatpush.bf16.xpose.msra.mxu0 0
    %5666 = vmatpush.bf16.xpose.msra.mxu0 %v3459
    %5667 = vmatpush.bf16.xpose.msra.mxu0 %v3395
    %5668 = vmatmul.bf16.gmra.mxu0 %v258
    %v5669 = vpop.f32.mrf.mxu0
    %v5670 = vadd.f32 %v5657, %v5669
    %v5671 = vpop.f32.mrf.mxu0
    %5672 = vdwg.mxu0
    %5673 = vmatpush.bf16.xpose.msra.mxu0 0
    %5674 = vmatpush.bf16.xpose.msra.mxu0 0
    %5675 = vmatpush.bf16.xpose.msra.mxu0 0
    %5676 = vmatpush.bf16.xpose.msra.mxu0 0
    %5677 = vmatpush.bf16.xpose.msra.mxu0 0
    %5678 = vmatpush.bf16.xpose.msra.mxu0 0
    %5679 = vmatpush.bf16.xpose.msra.mxu0 %v3460
    %5680 = vmatpush.bf16.xpose.msra.mxu0 %v3396
    %5681 = vmatmul.bf16.gmra.mxu0 %v259
    %v5682 = vpop.f32.mrf.mxu0
    %v5683 = vadd.f32 %v5670, %v5682
    %v5684 = vpop.f32.mrf.mxu0
    %5685 = vdwg.mxu0
    %5686 = vmatpush.bf16.xpose.msra.mxu0 0
    %5687 = vmatpush.bf16.xpose.msra.mxu0 0
    %5688 = vmatpush.bf16.xpose.msra.mxu0 0
    %5689 = vmatpush.bf16.xpose.msra.mxu0 0
    %5690 = vmatpush.bf16.xpose.msra.mxu0 0
    %5691 = vmatpush.bf16.xpose.msra.mxu0 0
    %5692 = vmatpush.bf16.xpose.msra.mxu0 %v3461
    %5693 = vmatpush.bf16.xpose.msra.mxu0 %v3397
    %5694 = vmatmul.bf16.gmra.mxu0 %v260
    %v5695 = vpop.f32.mrf.mxu0
    %v5696 = vadd.f32 %v5683, %v5695
    %v5697 = vpop.f32.mrf.mxu0
    %5698 = vdwg.mxu0
    %5699 = vmatpush.bf16.xpose.msra.mxu0 0
    %5700 = vmatpush.bf16.xpose.msra.mxu0 0
    %5701 = vmatpush.bf16.xpose.msra.mxu0 0
    %5702 = vmatpush.bf16.xpose.msra.mxu0 0
    %5703 = vmatpush.bf16.xpose.msra.mxu0 0
    %5704 = vmatpush.bf16.xpose.msra.mxu0 0
    %5705 = vmatpush.bf16.xpose.msra.mxu0 %v3462
    %5706 = vmatpush.bf16.xpose.msra.mxu0 %v3398
    %5707 = vmatmul.bf16.gmra.mxu0 %v261
    %v5708 = vpop.f32.mrf.mxu0
    %v5709 = vadd.f32 %v5696, %v5708
    %v5710 = vpop.f32.mrf.mxu0
    %5711 = vdwg.mxu0
    %5712 = vmatpush.bf16.xpose.msra.mxu0 0
    %5713 = vmatpush.bf16.xpose.msra.mxu0 0
    %5714 = vmatpush.bf16.xpose.msra.mxu0 0
    %5715 = vmatpush.bf16.xpose.msra.mxu0 0
    %5716 = vmatpush.bf16.xpose.msra.mxu0 0
    %5717 = vmatpush.bf16.xpose.msra.mxu0 0
    %5718 = vmatpush.bf16.xpose.msra.mxu0 %v3463
    %5719 = vmatpush.bf16.xpose.msra.mxu0 %v3399
    %5720 = vmatmul.bf16.gmra.mxu0 %v262
    %v5721 = vpop.f32.mrf.mxu0
    %v5722 = vadd.f32 %v5709, %v5721
    %v5723 = vpop.f32.mrf.mxu0
    %5724 = vdwg.mxu0
    %5725 = vmatpush.bf16.xpose.msra.mxu0 0
    %5726 = vmatpush.bf16.xpose.msra.mxu0 0
    %5727 = vmatpush.bf16.xpose.msra.mxu0 0
    %5728 = vmatpush.bf16.xpose.msra.mxu0 0
    %5729 = vmatpush.bf16.xpose.msra.mxu0 0
    %5730 = vmatpush.bf16.xpose.msra.mxu0 0
    %5731 = vmatpush.bf16.xpose.msra.mxu0 %v3464
    %5732 = vmatpush.bf16.xpose.msra.mxu0 %v3400
    %5733 = vmatmul.bf16.gmra.mxu0 %v263
    %v5734 = vpop.f32.mrf.mxu0
    %v5735 = vadd.f32 %v5722, %v5734
    %v5736 = vpop.f32.mrf.mxu0
    %5737 = vdwg.mxu0
    %5738 = vmatpush.bf16.xpose.msra.mxu0 0
    %5739 = vmatpush.bf16.xpose.msra.mxu0 0
    %5740 = vmatpush.bf16.xpose.msra.mxu0 0
    %5741 = vmatpush.bf16.xpose.msra.mxu0 0
    %5742 = vmatpush.bf16.xpose.msra.mxu0 0
    %5743 = vmatpush.bf16.xpose.msra.mxu0 0
    %5744 = vmatpush.bf16.xpose.msra.mxu0 %v3465
    %5745 = vmatpush.bf16.xpose.msra.mxu0 %v3401
    %5746 = vmatmul.bf16.gmra.mxu0 %v264
    %v5747 = vpop.f32.mrf.mxu0
    %v5748 = vadd.f32 %v5735, %v5747
    %v5749 = vpop.f32.mrf.mxu0
    %5750 = vdwg.mxu0
    %5751 = vmatpush.bf16.xpose.msra.mxu0 0
    %5752 = vmatpush.bf16.xpose.msra.mxu0 0
    %5753 = vmatpush.bf16.xpose.msra.mxu0 0
    %5754 = vmatpush.bf16.xpose.msra.mxu0 0
    %5755 = vmatpush.bf16.xpose.msra.mxu0 0
    %5756 = vmatpush.bf16.xpose.msra.mxu0 0
    %5757 = vmatpush.bf16.xpose.msra.mxu0 %v3466
    %5758 = vmatpush.bf16.xpose.msra.mxu0 %v3402
    %5759 = vmatmul.bf16.gmra.mxu0 %v265
    %v5760 = vpop.f32.mrf.mxu0
    %v5761 = vadd.f32 %v5748, %v5760
    %v5762 = vpop.f32.mrf.mxu0
    %5763 = vdwg.mxu0
    %5764 = vmatpush.bf16.xpose.msra.mxu0 0
    %5765 = vmatpush.bf16.xpose.msra.mxu0 0
    %5766 = vmatpush.bf16.xpose.msra.mxu0 0
    %5767 = vmatpush.bf16.xpose.msra.mxu0 0
    %5768 = vmatpush.bf16.xpose.msra.mxu0 0
    %5769 = vmatpush.bf16.xpose.msra.mxu0 0
    %5770 = vmatpush.bf16.xpose.msra.mxu0 %v3467
    %5771 = vmatpush.bf16.xpose.msra.mxu0 %v3403
    %5772 = vmatmul.bf16.gmra.mxu0 %v266
    %v5773 = vpop.f32.mrf.mxu0
    %v5774 = vadd.f32 %v5761, %v5773
    %v5775 = vpop.f32.mrf.mxu0
    %5776 = vdwg.mxu0
    %v5777 = vmax.f32 %v4942, 0.151
    %v5778 = vmax.f32 %v5774, 0.151
    %v5779 = vmin.f32 %v5777, 0.248
    %v5780 = vmin.f32 %v5778, 0.248
    %v5783 = vrot.slane %v5780, 7
    %vm5784 = vcmask 1040384
    %v5785 = vsel %vm5784, %v5779, %v5783
    %v5787 = vlaneseq
    %vm5788 = vcmp.ge.s32.totalorder %v5787, 0
    %vm5789 = vcmp.lt.s32.totalorder %v5787, 147
    %vm5790 = vmand %vm5788, %vm5789
    %5791 = vst.msk [vmem:[#allocation8] sm:$0x3] %vm5790, %v5785
    // Predicated region
    $region26: #{linear_clamp.1} parent=1 // pred_check
      _
    $region27: #{linear_clamp.1} parent=1 // pred_check_branch
      %5793 = sbr.rel (0) target = $region29
    $region28: #{linear_clamp.1} parent=1 // pred_region
      %5795 = vsyncadd [#allocation4], 0
      %s5797 = sshll.u32 [#allocation8], 4
      %s5798 = int_to_ptr.vmem [resolvable:$true] %s5797
      %s5799 = sshll.u32 %s3, 4
      %s5800 = int_to_ptr.hbm [resolvable:$true] %s5799
      %5802 = dma.vmem_to_hbm [thread:$0]  %s5798, 32, %s5800, [#allocation4]
    $region29: #{linear_clamp.1} parent=1 // pred_fallthru
      _
    // Predicated region
    $region30: #{linear_clamp.1} parent=1 // pred_check
      _
    $region31: #{linear_clamp.1} parent=1 // pred_check_branch
      %5804 = sbr.rel (0) target = $region33
    $region32: #{linear_clamp.1} parent=1 // pred_region
      %5806 = dma.done [#allocation4], 32
    $region33: #{linear_clamp.1} parent=1 // pred_fallthru
      _
    %5807 = vsyncpa [#allocation3], 1
    %5808 = vsyncpa [#allocation6], 1
    %5809 = vsyncpa [#allocation4], 1

</llo_original>
